<compile_context>
chip_gen: v5e
topology: v5e:2x2
jax: 0.10.0
libtpu: 0.0.40
codegen_flags: <defaults>
</compile_context>

<pallas_src>
import functools

import jax
import jax.numpy as jnp
from jax.experimental import pallas as pl
from jax.experimental.pallas import tpu as pltpu


def _axial_kernel(x_ref, w_ref, b_ref, ls_ref, qenc_ref, kencT_ref, venc_ref,
                  o_ref, *, nh, dh, seq, tb, c_in):
    """One batch-tile of axial attention.

    x_ref    : (C, seq, TB)        input, batch on lanes
    w_ref    : (2C*C,)  SMEM       conv weight, kqv-BN scale folded in
    b_ref    : (2C,)    SMEM       folded kqv-BN bias
    ls_ref   : (3*nh,)  SMEM       logits-BN scales [qk | qr | kr]
    qenc_ref : (dh/2, seq, seq, TB) q_enc[d,x,y] pre-broadcast over lanes
    kencT_ref: (dh/2, seq, seq, TB) k_enc[d,y,x] pre-broadcast over lanes
    venc_ref : (dh,   seq, seq, TB) v_enc[d,x,y] pre-broadcast over lanes
    o_ref    : (C, seq, TB)        output, batch on lanes
    """
    dh2 = dh // 2

    # Input channels, each a lane-dense (seq, TB) slab.
    xs = [x_ref[c] for c in range(c_in)]

    def conv_channel(o):
        # 1x1 Conv1d (no bias) + folded eval-mode BatchNorm1d for out-chan o,
        # evaluated on the VPU directly in the (position, batch) layout.
        acc = xs[0] * w_ref[o * c_in]
        for c in range(1, c_in):
            acc = acc + xs[c] * w_ref[o * c_in + c]
        return acc + b_ref[o]

    for h in range(nh):
        base = h * 2 * dh
        k_ch = [conv_channel(base + d) for d in range(dh2)]           # (y, TB)
        q_ch = [conv_channel(base + dh2 + d) for d in range(dh2)]     # (x, TB)
        v_ch = [conv_channel(base + dh + d) for d in range(dh)]       # (y, TB)

        # Per-head logits-BN scales (eval mode), read as SMEM scalars.
        s_qk = ls_ref[h]
        s_qr = ls_ref[nh + h]
        s_kr = ls_ref[2 * nh + h]

        # logits[x, y, b] = s_qk * sum_d q[d,x,b] k[d,y,b]
        #                 + s_qr * sum_d q[d,x,b] q_enc[d,x,y]
        #                 + s_kr * sum_d k[d,y,b] k_enc[d,y,x]
        # (the BN bias is constant along y and cancels in the softmax)
        logits = None
        for d in range(dh2):
            qd = q_ch[d]                                      # (x, TB)
            kd = k_ch[d]                                      # (y, TB)
            inner_q = (kd * s_qk)[None, :, :] + qenc_ref[d] * s_qr
            term = qd[:, None, :] * inner_q \
                + (kd * s_kr)[None, :, :] * kencT_ref[d]      # (x, y, TB)
            logits = term if logits is None else logits + term

        # Softmax over the key axis y (sublane reduction, batch stays on lanes).
        m = jnp.max(logits, axis=1, keepdims=True)            # (x, 1, TB)
        e = jnp.exp(logits - m)
        den = jnp.sum(e, axis=1, keepdims=True)
        wts = e * pl.reciprocal(den, approx=True)             # (x, y, TB)

        # attn + attn_enc fused:
        #   out[d, x, b] = sum_y wts[x,y,b] * (v[d,y,b] + v_enc[d,x,y])
        # Stored directly into the output block -- no stack/concat repack.
        for d in range(dh):
            vd = v_ch[d][None, :, :] + venc_ref[d]            # (x, y, TB)
            o_ref[h * dh + d] = jnp.sum(wts * vd, axis=1).astype(o_ref.dtype)


def _pick_tile(bw):
    """Batch tile TB for the fused batch axis.

    Prefer a lane-dense multiple of 128 that divides bw (cap 512 so the
    pre-broadcast encodings and (seq,seq,TB) temps stay small in VMEM), with
    >=2 grid steps when possible (v7x megacore); otherwise fall back to the
    full extent (always a legal block shape)."""
    for tb in (512, 384, 256, 128):
        if bw % tb == 0 and bw // tb >= 2:
            return tb
    for tb in (512, 384, 256, 128):
        if bw % tb == 0:
            return tb
    # TODO(synk): very large, non-128-divisible fused batches would need
    # padding here; fine for SRCNN-scale shapes.
    return bw


def axial_layer_forward(x, params, *, num_heads, kernel_size,
                        height_dim=True, eps=1e-5):
    """x: NCHW float32. Returns NCHW float32 (same shape as input)."""
    B, C, H, W = x.shape
    nh = num_heads
    assert C % nh == 0
    dh = C // nh
    assert dh % 2 == 0
    dh2 = dh // 2
    K = kernel_size

    if height_dim:
        assert H == K, "kernel_size must equal the attended (height) axis"
        xr = jnp.transpose(x, (1, 2, 0, 3))          # (C, H, B, W)
        fold, seq = W, H
    else:
        assert W == K, "kernel_size must equal the attended (width) axis"
        xr = jnp.transpose(x, (1, 3, 0, 2))          # (C, W, B, H)
        fold, seq = H, W
    bw = B * fold
    xf = xr.reshape(C, seq, bw).astype(jnp.float32)  # batch on the last axis

    TB = _pick_tile(bw)
    grid = (bw // TB,)

    # --- fold kqv BN (eval) into the conv weight / one bias vector (SMEM) ---
    ks = params["kqv_gamma"] / jnp.sqrt(params["kqv_var"] + eps)
    w_flat = (params["w_kqv"] * ks[:, None]).reshape(-1).astype(jnp.float32)
    kqv_bias = (params["kqv_beta"] - params["kqv_mean"] * ks).astype(jnp.float32)

    # --- logits BN (eval): only the scales matter (bias cancels in softmax) ---
    ls = (params["logits_gamma"] / jnp.sqrt(params["logits_var"] + eps)
          ).astype(jnp.float32)                                     # (3*nh,)

    # --- relative-position encodings: index_select + lane pre-broadcast ---
    rel = params["rel_encoding"]                                    # (2dh, 2K-1)
    idx = (jnp.arange(K)[None, :] - jnp.arange(K)[:, None] + K - 1).reshape(-1)
    rel_enc = jnp.take(rel, idx, axis=1).reshape(2 * dh, K, K).astype(jnp.float32)
    q_enc = rel_enc[:dh2]                                           # [d, x, y]
    k_encT = jnp.swapaxes(rel_enc[dh2:dh], 1, 2)                    # [d, x, y] = k_enc[d,y,x]
    v_enc = rel_enc[dh:]                                            # [d, x, y]
    qenc_b = jnp.broadcast_to(q_enc[..., None], (dh2, K, K, TB))
    kencT_b = jnp.broadcast_to(k_encT[..., None], (dh2, K, K, TB))
    venc_b = jnp.broadcast_to(v_enc[..., None], (dh, K, K, TB))

    kernel = functools.partial(_axial_kernel, nh=nh, dh=dh, seq=seq, tb=TB,
                               c_in=C)

    out = pl.pallas_call(
        kernel,
        out_shape=jax.ShapeDtypeStruct((C, seq, bw), jnp.float32),
        grid_spec=pltpu.PrefetchScalarGridSpec(
            num_scalar_prefetch=0,
            grid=grid,
            in_specs=[
                pl.BlockSpec((C, seq, TB), lambda i: (0, 0, i)),        # x slab
                pl.BlockSpec(memory_space=pltpu.MemorySpace.SMEM),      # conv w
                pl.BlockSpec(memory_space=pltpu.MemorySpace.SMEM),      # conv/BN bias
                pl.BlockSpec(memory_space=pltpu.MemorySpace.SMEM),      # logits scales
                pl.BlockSpec((dh2, K, K, TB), lambda i: (0, 0, 0, 0)),  # q_enc
                pl.BlockSpec((dh2, K, K, TB), lambda i: (0, 0, 0, 0)),  # k_enc^T
                pl.BlockSpec((dh, K, K, TB), lambda i: (0, 0, 0, 0)),   # v_enc
            ],
            out_specs=pl.BlockSpec((C, seq, TB), lambda i: (0, 0, i)),
        ),
        compiler_params=pltpu.CompilerParams(
            dimension_semantics=("parallel",),
            vmem_limit_bytes=40 * 1024 * 1024),
    )(xf, w_flat, kqv_bias, ls, qenc_b, kencT_b, venc_b)

    out = out.reshape(C, seq, B, fold)
    if height_dim:
        out = jnp.transpose(out, (2, 0, 1, 3))       # (B, C, H, W)
    else:
        out = jnp.transpose(out, (2, 0, 3, 1))       # (B, C, H, W)
    return out


def reference_forward(x, params, *, num_heads, kernel_size,
                      height_dim=True, eps=1e-5):
    """Pure-JAX mirror of the PyTorch forward (eval-mode BN), for checking."""
    B, C, H, W = x.shape
    nh, dh = num_heads, C // num_heads
    dh2, K = dh // 2, kernel_size
    xp = jnp.transpose(x, (0, 3, 1, 2)) if height_dim else jnp.transpose(x, (0, 2, 1, 3))
    fold, seq = xp.shape[1], xp.shape[3]
    xf = xp.reshape(B * fold, C, seq)

    kqv = jnp.einsum("oc,bcl->bol", params["w_kqv"], xf)
    ks = params["kqv_gamma"] / jnp.sqrt(params["kqv_var"] + eps)
    kqv = kqv * ks[None, :, None] + (params["kqv_beta"] - params["kqv_mean"] * ks)[None, :, None]
    kqv = kqv.reshape(B * fold, nh, 2 * dh, seq)
    k, q, v = kqv[:, :, :dh2], kqv[:, :, dh2:dh], kqv[:, :, dh:]

    rel = params["rel_encoding"]
    idx = (jnp.arange(K)[None, :] - jnp.arange(K)[:, None] + K - 1).reshape(-1)
    rel_enc = jnp.take(rel, idx, axis=1).reshape(2 * dh, K, K)
    q_enc, k_enc, v_enc = rel_enc[:dh2], rel_enc[dh2:dh], rel_enc[dh:]

    qk = jnp.einsum("bhdx,bhdy->bhxy", q, k)
    qr = jnp.einsum("bhdx,dxy->bhxy", q, q_enc)
    kr = jnp.swapaxes(jnp.einsum("bhdx,dxy->bhxy", k, k_enc), 2, 3)
    logits = jnp.concatenate([qk, qr, kr], axis=1)
    ls = params["logits_gamma"] / jnp.sqrt(params["logits_var"] + eps)
    logits = logits * ls[None, :, None, None] + \
        (params["logits_beta"] - params["logits_mean"] * ls)[None, :, None, None]
    logits = logits.reshape(B * fold, 3, nh, seq, seq).sum(axis=1)
    weights = jax.nn.softmax(logits, axis=3)

    attn = jnp.swapaxes(jnp.matmul(weights, jnp.swapaxes(v, 2, 3)), 2, 3)
    attn_enc = jnp.einsum("bhxy,dxy->bhdx", weights, v_enc)
    out = (attn + attn_enc).reshape(B, fold, C, seq)      # = cat(...,-1)+sum(dim=-2)
    if height_dim:
        out = jnp.transpose(out, (0, 2, 3, 1))
    else:
        out = jnp.transpose(out, (0, 2, 1, 3))
    return out


def make_params(key, in_channels, num_heads, kernel_size):
    C = in_channels
    dh = C // num_heads
    k = jax.random.split(key, 12)
    return {
        "w_kqv": jax.random.normal(k[0], (2 * C, C), jnp.float32) * 0.1,
        "kqv_gamma": 1.0 + 0.1 * jax.random.normal(k[1], (2 * C,), jnp.float32),
        "kqv_beta": 0.1 * jax.random.normal(k[2], (2 * C,), jnp.float32),
        "kqv_mean": 0.1 * jax.random.normal(k[3], (2 * C,), jnp.float32),
        "kqv_var": 0.5 + jax.random.uniform(k[4], (2 * C,), jnp.float32),
        "logits_gamma": 1.0 + 0.1 * jax.random.normal(k[5], (3 * num_heads,), jnp.float32),
        "logits_beta": 0.1 * jax.random.normal(k[6], (3 * num_heads,), jnp.float32),
        "logits_mean": 0.1 * jax.random.normal(k[7], (3 * num_heads,), jnp.float32),
        "logits_var": 0.5 + jax.random.uniform(k[8], (3 * num_heads,), jnp.float32),
        "rel_encoding": jax.random.normal(k[9], (2 * dh, 2 * kernel_size - 1), jnp.float32),
    }


if __name__ == "__main__":
    B, C, H, W = 2, 8, 16, 16
    NUM_HEADS = 2
    KERNEL_SIZE = 16          # attention span == height (height_dim=True)

    key = jax.random.PRNGKey(0)
    kx, kp = jax.random.split(key)
    x = jax.random.normal(kx, (B, C, H, W), jnp.float32)
    params = make_params(kp, C, NUM_HEADS, KERNEL_SIZE)

    out = axial_layer_forward(x, params, num_heads=NUM_HEADS,
                              kernel_size=KERNEL_SIZE, height_dim=True)
    out = jax.block_until_ready(out)

    ref = reference_forward(x, params, num_heads=NUM_HEADS,
                            kernel_size=KERNEL_SIZE, height_dim=True)
    ref = jax.block_until_ready(ref)

    assert out.shape == (B, C, H, W), out.shape
    assert jnp.allclose(out, ref, atol=2e-3, rtol=2e-3), \
        float(jnp.max(jnp.abs(out - ref)))
    print("KERNEL_OK")
</pallas_src>

<mosaic_0001>
module attributes {stable_mosaic.version = 11 : i64} {
  func.func @_axial_kernel(%arg0: i32, %arg1: memref<8x16x32xf32, #tpu.memory_space<vmem>>, %arg2: memref<128xf32, #tpu.memory_space<smem>>, %arg3: memref<16xf32, #tpu.memory_space<smem>>, %arg4: memref<6xf32, #tpu.memory_space<smem>>, %arg5: memref<2x16x16x32xf32, #tpu.memory_space<vmem>>, %arg6: memref<2x16x16x32xf32, #tpu.memory_space<vmem>>, %arg7: memref<4x16x16x32xf32, #tpu.memory_space<vmem>>, %arg8: memref<8x16x32xf32, #tpu.memory_space<vmem>>) attributes {dimension_semantics = [#tpu.dimension_semantics<parallel>], iteration_bounds = array<i64: 1>, scalar_prefetch = 0 : i64, scratch_operands = 0 : i64, tpu.core_type = #tpu.core_type<tc>, window_params = [{transform_indices = @transform_0, window_bounds = array<i64: 8, 16, 32>}, {transform_indices = @transform_1, window_bounds = array<i64: 128>}, {transform_indices = @transform_2, window_bounds = array<i64: 16>}, {transform_indices = @transform_3, window_bounds = array<i64: 6>}, {pipeline_mode = #tpu.pipeline_mode<synchronous>, transform_indices = @transform_4, window_bounds = array<i64: 2, 16, 16, 32>}, {pipeline_mode = #tpu.pipeline_mode<synchronous>, transform_indices = @transform_5, window_bounds = array<i64: 2, 16, 16, 32>}, {pipeline_mode = #tpu.pipeline_mode<synchronous>, transform_indices = @transform_6, window_bounds = array<i64: 4, 16, 16, 32>}, {transform_indices = @transform_7, window_bounds = array<i64: 8, 16, 32>}]} {
    %c0 = arith.constant 0 : index
    %c0_0 = arith.constant 0 : index
    %c0_1 = arith.constant 0 : index
    %0 = vector.load %arg1[%c0, %c0_0, %c0_1] : memref<8x16x32xf32, #tpu.memory_space<vmem>>, vector<1x16x32xf32>
    %1 = vector.shape_cast %0 : vector<1x16x32xf32> to vector<16x32xf32>
    %c1 = arith.constant 1 : index
    %c0_2 = arith.constant 0 : index
    %c0_3 = arith.constant 0 : index
    %2 = vector.load %arg1[%c1, %c0_2, %c0_3] : memref<8x16x32xf32, #tpu.memory_space<vmem>>, vector<1x16x32xf32>
    %3 = vector.shape_cast %2 : vector<1x16x32xf32> to vector<16x32xf32>
    %c2 = arith.constant 2 : index
    %c0_4 = arith.constant 0 : index
    %c0_5 = arith.constant 0 : index
    %4 = vector.load %arg1[%c2, %c0_4, %c0_5] : memref<8x16x32xf32, #tpu.memory_space<vmem>>, vector<1x16x32xf32>
    %5 = vector.shape_cast %4 : vector<1x16x32xf32> to vector<16x32xf32>
    %c3 = arith.constant 3 : index
    %c0_6 = arith.constant 0 : index
    %c0_7 = arith.constant 0 : index
    %6 = vector.load %arg1[%c3, %c0_6, %c0_7] : memref<8x16x32xf32, #tpu.memory_space<vmem>>, vector<1x16x32xf32>
    %7 = vector.shape_cast %6 : vector<1x16x32xf32> to vector<16x32xf32>
    %c4 = arith.constant 4 : index
    %c0_8 = arith.constant 0 : index
    %c0_9 = arith.constant 0 : index
    %8 = vector.load %arg1[%c4, %c0_8, %c0_9] : memref<8x16x32xf32, #tpu.memory_space<vmem>>, vector<1x16x32xf32>
    %9 = vector.shape_cast %8 : vector<1x16x32xf32> to vector<16x32xf32>
    %c5 = arith.constant 5 : index
    %c0_10 = arith.constant 0 : index
    %c0_11 = arith.constant 0 : index
    %10 = vector.load %arg1[%c5, %c0_10, %c0_11] : memref<8x16x32xf32, #tpu.memory_space<vmem>>, vector<1x16x32xf32>
    %11 = vector.shape_cast %10 : vector<1x16x32xf32> to vector<16x32xf32>
    %c6 = arith.constant 6 : index
    %c0_12 = arith.constant 0 : index
    %c0_13 = arith.constant 0 : index
    %12 = vector.load %arg1[%c6, %c0_12, %c0_13] : memref<8x16x32xf32, #tpu.memory_space<vmem>>, vector<1x16x32xf32>
    %13 = vector.shape_cast %12 : vector<1x16x32xf32> to vector<16x32xf32>
    %c7 = arith.constant 7 : index
    %c0_14 = arith.constant 0 : index
    %c0_15 = arith.constant 0 : index
    %14 = vector.load %arg1[%c7, %c0_14, %c0_15] : memref<8x16x32xf32, #tpu.memory_space<vmem>>, vector<1x16x32xf32>
    %15 = vector.shape_cast %14 : vector<1x16x32xf32> to vector<16x32xf32>
    %c0_16 = arith.constant 0 : index
    %16 = memref.load %arg2[%c0_16] : memref<128xf32, #tpu.memory_space<smem>>
    %17 = vector.broadcast %16 : f32 to vector<16x32xf32>
    %18 = arith.mulf %1, %17 : vector<16x32xf32>
    %c1_17 = arith.constant 1 : index
    %19 = memref.load %arg2[%c1_17] : memref<128xf32, #tpu.memory_space<smem>>
    %20 = vector.broadcast %19 : f32 to vector<16x32xf32>
    %21 = arith.mulf %3, %20 : vector<16x32xf32>
    %22 = arith.addf %18, %21 : vector<16x32xf32>
    %c2_18 = arith.constant 2 : index
    %23 = memref.load %arg2[%c2_18] : memref<128xf32, #tpu.memory_space<smem>>
    %24 = vector.broadcast %23 : f32 to vector<16x32xf32>
    %25 = arith.mulf %5, %24 : vector<16x32xf32>
    %26 = arith.addf %22, %25 : vector<16x32xf32>
    %c3_19 = arith.constant 3 : index
    %27 = memref.load %arg2[%c3_19] : memref<128xf32, #tpu.memory_space<smem>>
    %28 = vector.broadcast %27 : f32 to vector<16x32xf32>
    %29 = arith.mulf %7, %28 : vector<16x32xf32>
    %30 = arith.addf %26, %29 : vector<16x32xf32>
    %c4_20 = arith.constant 4 : index
    %31 = memref.load %arg2[%c4_20] : memref<128xf32, #tpu.memory_space<smem>>
    %32 = vector.broadcast %31 : f32 to vector<16x32xf32>
    %33 = arith.mulf %9, %32 : vector<16x32xf32>
    %34 = arith.addf %30, %33 : vector<16x32xf32>
    %c5_21 = arith.constant 5 : index
    %35 = memref.load %arg2[%c5_21] : memref<128xf32, #tpu.memory_space<smem>>
    %36 = vector.broadcast %35 : f32 to vector<16x32xf32>
    %37 = arith.mulf %11, %36 : vector<16x32xf32>
    %38 = arith.addf %34, %37 : vector<16x32xf32>
    %c6_22 = arith.constant 6 : index
    %39 = memref.load %arg2[%c6_22] : memref<128xf32, #tpu.memory_space<smem>>
    %40 = vector.broadcast %39 : f32 to vector<16x32xf32>
    %41 = arith.mulf %13, %40 : vector<16x32xf32>
    %42 = arith.addf %38, %41 : vector<16x32xf32>
    %c7_23 = arith.constant 7 : index
    %43 = memref.load %arg2[%c7_23] : memref<128xf32, #tpu.memory_space<smem>>
    %44 = vector.broadcast %43 : f32 to vector<16x32xf32>
    %45 = arith.mulf %15, %44 : vector<16x32xf32>
    %46 = arith.addf %42, %45 : vector<16x32xf32>
    %c0_24 = arith.constant 0 : index
    %47 = memref.load %arg3[%c0_24] : memref<16xf32, #tpu.memory_space<smem>>
    %48 = vector.broadcast %47 : f32 to vector<16x32xf32>
    %49 = arith.addf %46, %48 : vector<16x32xf32>
    %c8 = arith.constant 8 : index
    %50 = memref.load %arg2[%c8] : memref<128xf32, #tpu.memory_space<smem>>
    %51 = vector.broadcast %50 : f32 to vector<16x32xf32>
    %52 = arith.mulf %1, %51 : vector<16x32xf32>
    %c9 = arith.constant 9 : index
    %53 = memref.load %arg2[%c9] : memref<128xf32, #tpu.memory_space<smem>>
    %54 = vector.broadcast %53 : f32 to vector<16x32xf32>
    %55 = arith.mulf %3, %54 : vector<16x32xf32>
    %56 = arith.addf %52, %55 : vector<16x32xf32>
    %c10 = arith.constant 10 : index
    %57 = memref.load %arg2[%c10] : memref<128xf32, #tpu.memory_space<smem>>
    %58 = vector.broadcast %57 : f32 to vector<16x32xf32>
    %59 = arith.mulf %5, %58 : vector<16x32xf32>
    %60 = arith.addf %56, %59 : vector<16x32xf32>
    %c11 = arith.constant 11 : index
    %61 = memref.load %arg2[%c11] : memref<128xf32, #tpu.memory_space<smem>>
    %62 = vector.broadcast %61 : f32 to vector<16x32xf32>
    %63 = arith.mulf %7, %62 : vector<16x32xf32>
    %64 = arith.addf %60, %63 : vector<16x32xf32>
    %c12 = arith.constant 12 : index
    %65 = memref.load %arg2[%c12] : memref<128xf32, #tpu.memory_space<smem>>
    %66 = vector.broadcast %65 : f32 to vector<16x32xf32>
    %67 = arith.mulf %9, %66 : vector<16x32xf32>
    %68 = arith.addf %64, %67 : vector<16x32xf32>
    %c13 = arith.constant 13 : index
    %69 = memref.load %arg2[%c13] : memref<128xf32, #tpu.memory_space<smem>>
    %70 = vector.broadcast %69 : f32 to vector<16x32xf32>
    %71 = arith.mulf %11, %70 : vector<16x32xf32>
    %72 = arith.addf %68, %71 : vector<16x32xf32>
    %c14 = arith.constant 14 : index
    %73 = memref.load %arg2[%c14] : memref<128xf32, #tpu.memory_space<smem>>
    %74 = vector.broadcast %73 : f32 to vector<16x32xf32>
    %75 = arith.mulf %13, %74 : vector<16x32xf32>
    %76 = arith.addf %72, %75 : vector<16x32xf32>
    %c15 = arith.constant 15 : index
    %77 = memref.load %arg2[%c15] : memref<128xf32, #tpu.memory_space<smem>>
    %78 = vector.broadcast %77 : f32 to vector<16x32xf32>
    %79 = arith.mulf %15, %78 : vector<16x32xf32>
    %80 = arith.addf %76, %79 : vector<16x32xf32>
    %c1_25 = arith.constant 1 : index
    %81 = memref.load %arg3[%c1_25] : memref<16xf32, #tpu.memory_space<smem>>
    %82 = vector.broadcast %81 : f32 to vector<16x32xf32>
    %83 = arith.addf %80, %82 : vector<16x32xf32>
    %c16 = arith.constant 16 : index
    %84 = memref.load %arg2[%c16] : memref<128xf32, #tpu.memory_space<smem>>
    %85 = vector.broadcast %84 : f32 to vector<16x32xf32>
    %86 = arith.mulf %1, %85 : vector<16x32xf32>
    %c17 = arith.constant 17 : index
    %87 = memref.load %arg2[%c17] : memref<128xf32, #tpu.memory_space<smem>>
    %88 = vector.broadcast %87 : f32 to vector<16x32xf32>
    %89 = arith.mulf %3, %88 : vector<16x32xf32>
    %90 = arith.addf %86, %89 : vector<16x32xf32>
    %c18 = arith.constant 18 : index
    %91 = memref.load %arg2[%c18] : memref<128xf32, #tpu.memory_space<smem>>
    %92 = vector.broadcast %91 : f32 to vector<16x32xf32>
    %93 = arith.mulf %5, %92 : vector<16x32xf32>
    %94 = arith.addf %90, %93 : vector<16x32xf32>
    %c19 = arith.constant 19 : index
    %95 = memref.load %arg2[%c19] : memref<128xf32, #tpu.memory_space<smem>>
    %96 = vector.broadcast %95 : f32 to vector<16x32xf32>
    %97 = arith.mulf %7, %96 : vector<16x32xf32>
    %98 = arith.addf %94, %97 : vector<16x32xf32>
    %c20 = arith.constant 20 : index
    %99 = memref.load %arg2[%c20] : memref<128xf32, #tpu.memory_space<smem>>
    %100 = vector.broadcast %99 : f32 to vector<16x32xf32>
    %101 = arith.mulf %9, %100 : vector<16x32xf32>
    %102 = arith.addf %98, %101 : vector<16x32xf32>
    %c21 = arith.constant 21 : index
    %103 = memref.load %arg2[%c21] : memref<128xf32, #tpu.memory_space<smem>>
    %104 = vector.broadcast %103 : f32 to vector<16x32xf32>
    %105 = arith.mulf %11, %104 : vector<16x32xf32>
    %106 = arith.addf %102, %105 : vector<16x32xf32>
    %c22 = arith.constant 22 : index
    %107 = memref.load %arg2[%c22] : memref<128xf32, #tpu.memory_space<smem>>
    %108 = vector.broadcast %107 : f32 to vector<16x32xf32>
    %109 = arith.mulf %13, %108 : vector<16x32xf32>
    %110 = arith.addf %106, %109 : vector<16x32xf32>
    %c23 = arith.constant 23 : index
    %111 = memref.load %arg2[%c23] : memref<128xf32, #tpu.memory_space<smem>>
    %112 = vector.broadcast %111 : f32 to vector<16x32xf32>
    %113 = arith.mulf %15, %112 : vector<16x32xf32>
    %114 = arith.addf %110, %113 : vector<16x32xf32>
    %c2_26 = arith.constant 2 : index
    %115 = memref.load %arg3[%c2_26] : memref<16xf32, #tpu.memory_space<smem>>
    %116 = vector.broadcast %115 : f32 to vector<16x32xf32>
    %117 = arith.addf %114, %116 : vector<16x32xf32>
    %c24 = arith.constant 24 : index
    %118 = memref.load %arg2[%c24] : memref<128xf32, #tpu.memory_space<smem>>
    %119 = vector.broadcast %118 : f32 to vector<16x32xf32>
    %120 = arith.mulf %1, %119 : vector<16x32xf32>
    %c25 = arith.constant 25 : index
    %121 = memref.load %arg2[%c25] : memref<128xf32, #tpu.memory_space<smem>>
    %122 = vector.broadcast %121 : f32 to vector<16x32xf32>
    %123 = arith.mulf %3, %122 : vector<16x32xf32>
    %124 = arith.addf %120, %123 : vector<16x32xf32>
    %c26 = arith.constant 26 : index
    %125 = memref.load %arg2[%c26] : memref<128xf32, #tpu.memory_space<smem>>
    %126 = vector.broadcast %125 : f32 to vector<16x32xf32>
    %127 = arith.mulf %5, %126 : vector<16x32xf32>
    %128 = arith.addf %124, %127 : vector<16x32xf32>
    %c27 = arith.constant 27 : index
    %129 = memref.load %arg2[%c27] : memref<128xf32, #tpu.memory_space<smem>>
    %130 = vector.broadcast %129 : f32 to vector<16x32xf32>
    %131 = arith.mulf %7, %130 : vector<16x32xf32>
    %132 = arith.addf %128, %131 : vector<16x32xf32>
    %c28 = arith.constant 28 : index
    %133 = memref.load %arg2[%c28] : memref<128xf32, #tpu.memory_space<smem>>
    %134 = vector.broadcast %133 : f32 to vector<16x32xf32>
    %135 = arith.mulf %9, %134 : vector<16x32xf32>
    %136 = arith.addf %132, %135 : vector<16x32xf32>
    %c29 = arith.constant 29 : index
    %137 = memref.load %arg2[%c29] : memref<128xf32, #tpu.memory_space<smem>>
    %138 = vector.broadcast %137 : f32 to vector<16x32xf32>
    %139 = arith.mulf %11, %138 : vector<16x32xf32>
    %140 = arith.addf %136, %139 : vector<16x32xf32>
    %c30 = arith.constant 30 : index
    %141 = memref.load %arg2[%c30] : memref<128xf32, #tpu.memory_space<smem>>
    %142 = vector.broadcast %141 : f32 to vector<16x32xf32>
    %143 = arith.mulf %13, %142 : vector<16x32xf32>
    %144 = arith.addf %140, %143 : vector<16x32xf32>
    %c31 = arith.constant 31 : index
    %145 = memref.load %arg2[%c31] : memref<128xf32, #tpu.memory_space<smem>>
    %146 = vector.broadcast %145 : f32 to vector<16x32xf32>
    %147 = arith.mulf %15, %146 : vector<16x32xf32>
    %148 = arith.addf %144, %147 : vector<16x32xf32>
    %c3_27 = arith.constant 3 : index
    %149 = memref.load %arg3[%c3_27] : memref<16xf32, #tpu.memory_space<smem>>
    %150 = vector.broadcast %149 : f32 to vector<16x32xf32>
    %151 = arith.addf %148, %150 : vector<16x32xf32>
    %c32 = arith.constant 32 : index
    %152 = memref.load %arg2[%c32] : memref<128xf32, #tpu.memory_space<smem>>
    %153 = vector.broadcast %152 : f32 to vector<16x32xf32>
    %154 = arith.mulf %1, %153 : vector<16x32xf32>
    %c33 = arith.constant 33 : index
    %155 = memref.load %arg2[%c33] : memref<128xf32, #tpu.memory_space<smem>>
    %156 = vector.broadcast %155 : f32 to vector<16x32xf32>
    %157 = arith.mulf %3, %156 : vector<16x32xf32>
    %158 = arith.addf %154, %157 : vector<16x32xf32>
    %c34 = arith.constant 34 : index
    %159 = memref.load %arg2[%c34] : memref<128xf32, #tpu.memory_space<smem>>
    %160 = vector.broadcast %159 : f32 to vector<16x32xf32>
    %161 = arith.mulf %5, %160 : vector<16x32xf32>
    %162 = arith.addf %158, %161 : vector<16x32xf32>
    %c35 = arith.constant 35 : index
    %163 = memref.load %arg2[%c35] : memref<128xf32, #tpu.memory_space<smem>>
    %164 = vector.broadcast %163 : f32 to vector<16x32xf32>
    %165 = arith.mulf %7, %164 : vector<16x32xf32>
    %166 = arith.addf %162, %165 : vector<16x32xf32>
    %c36 = arith.constant 36 : index
    %167 = memref.load %arg2[%c36] : memref<128xf32, #tpu.memory_space<smem>>
    %168 = vector.broadcast %167 : f32 to vector<16x32xf32>
    %169 = arith.mulf %9, %168 : vector<16x32xf32>
    %170 = arith.addf %166, %169 : vector<16x32xf32>
    %c37 = arith.constant 37 : index
    %171 = memref.load %arg2[%c37] : memref<128xf32, #tpu.memory_space<smem>>
    %172 = vector.broadcast %171 : f32 to vector<16x32xf32>
    %173 = arith.mulf %11, %172 : vector<16x32xf32>
    %174 = arith.addf %170, %173 : vector<16x32xf32>
    %c38 = arith.constant 38 : index
    %175 = memref.load %arg2[%c38] : memref<128xf32, #tpu.memory_space<smem>>
    %176 = vector.broadcast %175 : f32 to vector<16x32xf32>
    %177 = arith.mulf %13, %176 : vector<16x32xf32>
    %178 = arith.addf %174, %177 : vector<16x32xf32>
    %c39 = arith.constant 39 : index
    %179 = memref.load %arg2[%c39] : memref<128xf32, #tpu.memory_space<smem>>
    %180 = vector.broadcast %179 : f32 to vector<16x32xf32>
    %181 = arith.mulf %15, %180 : vector<16x32xf32>
    %182 = arith.addf %178, %181 : vector<16x32xf32>
    %c4_28 = arith.constant 4 : index
    %183 = memref.load %arg3[%c4_28] : memref<16xf32, #tpu.memory_space<smem>>
    %184 = vector.broadcast %183 : f32 to vector<16x32xf32>
    %185 = arith.addf %182, %184 : vector<16x32xf32>
    %c40 = arith.constant 40 : index
    %186 = memref.load %arg2[%c40] : memref<128xf32, #tpu.memory_space<smem>>
    %187 = vector.broadcast %186 : f32 to vector<16x32xf32>
    %188 = arith.mulf %1, %187 : vector<16x32xf32>
    %c41 = arith.constant 41 : index
    %189 = memref.load %arg2[%c41] : memref<128xf32, #tpu.memory_space<smem>>
    %190 = vector.broadcast %189 : f32 to vector<16x32xf32>
    %191 = arith.mulf %3, %190 : vector<16x32xf32>
    %192 = arith.addf %188, %191 : vector<16x32xf32>
    %c42 = arith.constant 42 : index
    %193 = memref.load %arg2[%c42] : memref<128xf32, #tpu.memory_space<smem>>
    %194 = vector.broadcast %193 : f32 to vector<16x32xf32>
    %195 = arith.mulf %5, %194 : vector<16x32xf32>
    %196 = arith.addf %192, %195 : vector<16x32xf32>
    %c43 = arith.constant 43 : index
    %197 = memref.load %arg2[%c43] : memref<128xf32, #tpu.memory_space<smem>>
    %198 = vector.broadcast %197 : f32 to vector<16x32xf32>
    %199 = arith.mulf %7, %198 : vector<16x32xf32>
    %200 = arith.addf %196, %199 : vector<16x32xf32>
    %c44 = arith.constant 44 : index
    %201 = memref.load %arg2[%c44] : memref<128xf32, #tpu.memory_space<smem>>
    %202 = vector.broadcast %201 : f32 to vector<16x32xf32>
    %203 = arith.mulf %9, %202 : vector<16x32xf32>
    %204 = arith.addf %200, %203 : vector<16x32xf32>
    %c45 = arith.constant 45 : index
    %205 = memref.load %arg2[%c45] : memref<128xf32, #tpu.memory_space<smem>>
    %206 = vector.broadcast %205 : f32 to vector<16x32xf32>
    %207 = arith.mulf %11, %206 : vector<16x32xf32>
    %208 = arith.addf %204, %207 : vector<16x32xf32>
    %c46 = arith.constant 46 : index
    %209 = memref.load %arg2[%c46] : memref<128xf32, #tpu.memory_space<smem>>
    %210 = vector.broadcast %209 : f32 to vector<16x32xf32>
    %211 = arith.mulf %13, %210 : vector<16x32xf32>
    %212 = arith.addf %208, %211 : vector<16x32xf32>
    %c47 = arith.constant 47 : index
    %213 = memref.load %arg2[%c47] : memref<128xf32, #tpu.memory_space<smem>>
    %214 = vector.broadcast %213 : f32 to vector<16x32xf32>
    %215 = arith.mulf %15, %214 : vector<16x32xf32>
    %216 = arith.addf %212, %215 : vector<16x32xf32>
    %c5_29 = arith.constant 5 : index
    %217 = memref.load %arg3[%c5_29] : memref<16xf32, #tpu.memory_space<smem>>
    %218 = vector.broadcast %217 : f32 to vector<16x32xf32>
    %219 = arith.addf %216, %218 : vector<16x32xf32>
    %c48 = arith.constant 48 : index
    %220 = memref.load %arg2[%c48] : memref<128xf32, #tpu.memory_space<smem>>
    %221 = vector.broadcast %220 : f32 to vector<16x32xf32>
    %222 = arith.mulf %1, %221 : vector<16x32xf32>
    %c49 = arith.constant 49 : index
    %223 = memref.load %arg2[%c49] : memref<128xf32, #tpu.memory_space<smem>>
    %224 = vector.broadcast %223 : f32 to vector<16x32xf32>
    %225 = arith.mulf %3, %224 : vector<16x32xf32>
    %226 = arith.addf %222, %225 : vector<16x32xf32>
    %c50 = arith.constant 50 : index
    %227 = memref.load %arg2[%c50] : memref<128xf32, #tpu.memory_space<smem>>
    %228 = vector.broadcast %227 : f32 to vector<16x32xf32>
    %229 = arith.mulf %5, %228 : vector<16x32xf32>
    %230 = arith.addf %226, %229 : vector<16x32xf32>
    %c51 = arith.constant 51 : index
    %231 = memref.load %arg2[%c51] : memref<128xf32, #tpu.memory_space<smem>>
    %232 = vector.broadcast %231 : f32 to vector<16x32xf32>
    %233 = arith.mulf %7, %232 : vector<16x32xf32>
    %234 = arith.addf %230, %233 : vector<16x32xf32>
    %c52 = arith.constant 52 : index
    %235 = memref.load %arg2[%c52] : memref<128xf32, #tpu.memory_space<smem>>
    %236 = vector.broadcast %235 : f32 to vector<16x32xf32>
    %237 = arith.mulf %9, %236 : vector<16x32xf32>
    %238 = arith.addf %234, %237 : vector<16x32xf32>
    %c53 = arith.constant 53 : index
    %239 = memref.load %arg2[%c53] : memref<128xf32, #tpu.memory_space<smem>>
    %240 = vector.broadcast %239 : f32 to vector<16x32xf32>
    %241 = arith.mulf %11, %240 : vector<16x32xf32>
    %242 = arith.addf %238, %241 : vector<16x32xf32>
    %c54 = arith.constant 54 : index
    %243 = memref.load %arg2[%c54] : memref<128xf32, #tpu.memory_space<smem>>
    %244 = vector.broadcast %243 : f32 to vector<16x32xf32>
    %245 = arith.mulf %13, %244 : vector<16x32xf32>
    %246 = arith.addf %242, %245 : vector<16x32xf32>
    %c55 = arith.constant 55 : index
    %247 = memref.load %arg2[%c55] : memref<128xf32, #tpu.memory_space<smem>>
    %248 = vector.broadcast %247 : f32 to vector<16x32xf32>
    %249 = arith.mulf %15, %248 : vector<16x32xf32>
    %250 = arith.addf %246, %249 : vector<16x32xf32>
    %c6_30 = arith.constant 6 : index
    %251 = memref.load %arg3[%c6_30] : memref<16xf32, #tpu.memory_space<smem>>
    %252 = vector.broadcast %251 : f32 to vector<16x32xf32>
    %253 = arith.addf %250, %252 : vector<16x32xf32>
    %c56 = arith.constant 56 : index
    %254 = memref.load %arg2[%c56] : memref<128xf32, #tpu.memory_space<smem>>
    %255 = vector.broadcast %254 : f32 to vector<16x32xf32>
    %256 = arith.mulf %1, %255 : vector<16x32xf32>
    %c57 = arith.constant 57 : index
    %257 = memref.load %arg2[%c57] : memref<128xf32, #tpu.memory_space<smem>>
    %258 = vector.broadcast %257 : f32 to vector<16x32xf32>
    %259 = arith.mulf %3, %258 : vector<16x32xf32>
    %260 = arith.addf %256, %259 : vector<16x32xf32>
    %c58 = arith.constant 58 : index
    %261 = memref.load %arg2[%c58] : memref<128xf32, #tpu.memory_space<smem>>
    %262 = vector.broadcast %261 : f32 to vector<16x32xf32>
    %263 = arith.mulf %5, %262 : vector<16x32xf32>
    %264 = arith.addf %260, %263 : vector<16x32xf32>
    %c59 = arith.constant 59 : index
    %265 = memref.load %arg2[%c59] : memref<128xf32, #tpu.memory_space<smem>>
    %266 = vector.broadcast %265 : f32 to vector<16x32xf32>
    %267 = arith.mulf %7, %266 : vector<16x32xf32>
    %268 = arith.addf %264, %267 : vector<16x32xf32>
    %c60 = arith.constant 60 : index
    %269 = memref.load %arg2[%c60] : memref<128xf32, #tpu.memory_space<smem>>
    %270 = vector.broadcast %269 : f32 to vector<16x32xf32>
    %271 = arith.mulf %9, %270 : vector<16x32xf32>
    %272 = arith.addf %268, %271 : vector<16x32xf32>
    %c61 = arith.constant 61 : index
    %273 = memref.load %arg2[%c61] : memref<128xf32, #tpu.memory_space<smem>>
    %274 = vector.broadcast %273 : f32 to vector<16x32xf32>
    %275 = arith.mulf %11, %274 : vector<16x32xf32>
    %276 = arith.addf %272, %275 : vector<16x32xf32>
    %c62 = arith.constant 62 : index
    %277 = memref.load %arg2[%c62] : memref<128xf32, #tpu.memory_space<smem>>
    %278 = vector.broadcast %277 : f32 to vector<16x32xf32>
    %279 = arith.mulf %13, %278 : vector<16x32xf32>
    %280 = arith.addf %276, %279 : vector<16x32xf32>
    %c63 = arith.constant 63 : index
    %281 = memref.load %arg2[%c63] : memref<128xf32, #tpu.memory_space<smem>>
    %282 = vector.broadcast %281 : f32 to vector<16x32xf32>
    %283 = arith.mulf %15, %282 : vector<16x32xf32>
    %284 = arith.addf %280, %283 : vector<16x32xf32>
    %c7_31 = arith.constant 7 : index
    %285 = memref.load %arg3[%c7_31] : memref<16xf32, #tpu.memory_space<smem>>
    %286 = vector.broadcast %285 : f32 to vector<16x32xf32>
    %287 = arith.addf %284, %286 : vector<16x32xf32>
    %c0_32 = arith.constant 0 : index
    %288 = memref.load %arg4[%c0_32] : memref<6xf32, #tpu.memory_space<smem>>
    %c2_33 = arith.constant 2 : index
    %289 = memref.load %arg4[%c2_33] : memref<6xf32, #tpu.memory_space<smem>>
    %c4_34 = arith.constant 4 : index
    %290 = memref.load %arg4[%c4_34] : memref<6xf32, #tpu.memory_space<smem>>
    %291 = vector.broadcast %288 : f32 to vector<16x32xf32>
    %292 = arith.mulf %49, %291 : vector<16x32xf32>
    %293 = vector.shape_cast %292 : vector<16x32xf32> to vector<1x16x32xf32>
    %c0_35 = arith.constant 0 : index
    %c0_36 = arith.constant 0 : index
    %c0_37 = arith.constant 0 : index
    %c0_38 = arith.constant 0 : index
    %294 = vector.load %arg5[%c0_35, %c0_36, %c0_37, %c0_38] : memref<2x16x16x32xf32, #tpu.memory_space<vmem>>, vector<1x16x16x32xf32>
    %295 = vector.shape_cast %294 : vector<1x16x16x32xf32> to vector<16x16x32xf32>
    %296 = vector.broadcast %289 : f32 to vector<16x16x32xf32>
    %297 = arith.mulf %295, %296 : vector<16x16x32xf32>
    %298 = vector.broadcast %293 : vector<1x16x32xf32> to vector<16x16x32xf32>
    %299 = arith.addf %298, %297 : vector<16x16x32xf32>
    %300 = vector.shape_cast %117 : vector<16x32xf32> to vector<16x1x32xf32>
    %301 = vector.broadcast %300 : vector<16x1x32xf32> to vector<16x16x32xf32>
    %302 = arith.mulf %301, %299 : vector<16x16x32xf32>
    %303 = vector.broadcast %290 : f32 to vector<16x32xf32>
    %304 = arith.mulf %49, %303 : vector<16x32xf32>
    %305 = vector.shape_cast %304 : vector<16x32xf32> to vector<1x16x32xf32>
    %c0_39 = arith.constant 0 : index
    %c0_40 = arith.constant 0 : index
    %c0_41 = arith.constant 0 : index
    %c0_42 = arith.constant 0 : index
    %306 = vector.load %arg6[%c0_39, %c0_40, %c0_41, %c0_42] : memref<2x16x16x32xf32, #tpu.memory_space<vmem>>, vector<1x16x16x32xf32>
    %307 = vector.shape_cast %306 : vector<1x16x16x32xf32> to vector<16x16x32xf32>
    %308 = vector.broadcast %305 : vector<1x16x32xf32> to vector<16x16x32xf32>
    %309 = arith.mulf %308, %307 : vector<16x16x32xf32>
    %310 = arith.addf %302, %309 : vector<16x16x32xf32>
    %311 = vector.broadcast %288 : f32 to vector<16x32xf32>
    %312 = arith.mulf %83, %311 : vector<16x32xf32>
    %313 = vector.shape_cast %312 : vector<16x32xf32> to vector<1x16x32xf32>
    %c1_43 = arith.constant 1 : index
    %c0_44 = arith.constant 0 : index
    %c0_45 = arith.constant 0 : index
    %c0_46 = arith.constant 0 : index
    %314 = vector.load %arg5[%c1_43, %c0_44, %c0_45, %c0_46] : memref<2x16x16x32xf32, #tpu.memory_space<vmem>>, vector<1x16x16x32xf32>
    %315 = vector.shape_cast %314 : vector<1x16x16x32xf32> to vector<16x16x32xf32>
    %316 = vector.broadcast %289 : f32 to vector<16x16x32xf32>
    %317 = arith.mulf %315, %316 : vector<16x16x32xf32>
    %318 = vector.broadcast %313 : vector<1x16x32xf32> to vector<16x16x32xf32>
    %319 = arith.addf %318, %317 : vector<16x16x32xf32>
    %320 = vector.shape_cast %151 : vector<16x32xf32> to vector<16x1x32xf32>
    %321 = vector.broadcast %320 : vector<16x1x32xf32> to vector<16x16x32xf32>
    %322 = arith.mulf %321, %319 : vector<16x16x32xf32>
    %323 = vector.broadcast %290 : f32 to vector<16x32xf32>
    %324 = arith.mulf %83, %323 : vector<16x32xf32>
    %325 = vector.shape_cast %324 : vector<16x32xf32> to vector<1x16x32xf32>
    %c1_47 = arith.constant 1 : index
    %c0_48 = arith.constant 0 : index
    %c0_49 = arith.constant 0 : index
    %c0_50 = arith.constant 0 : index
    %326 = vector.load %arg6[%c1_47, %c0_48, %c0_49, %c0_50] : memref<2x16x16x32xf32, #tpu.memory_space<vmem>>, vector<1x16x16x32xf32>
    %327 = vector.shape_cast %326 : vector<1x16x16x32xf32> to vector<16x16x32xf32>
    %328 = vector.broadcast %325 : vector<1x16x32xf32> to vector<16x16x32xf32>
    %329 = arith.mulf %328, %327 : vector<16x16x32xf32>
    %330 = arith.addf %322, %329 : vector<16x16x32xf32>
    %331 = arith.addf %310, %330 : vector<16x16x32xf32>
    %cst = arith.constant dense<0xFF800000> : vector<16x32xf32>
    %332 = vector.multi_reduction <maximumf>, %331, %cst [1] : vector<16x16x32xf32> to vector<16x32xf32>
    %333 = vector.shape_cast %332 : vector<16x32xf32> to vector<16x1x32xf32>
    %334 = vector.broadcast %333 : vector<16x1x32xf32> to vector<16x16x32xf32>
    %335 = arith.subf %331, %334 : vector<16x16x32xf32>
    %336 = math.exp %335 : vector<16x16x32xf32>
    %cst_51 = arith.constant dense<0.000000e+00> : vector<16x32xf32>
    %337 = vector.multi_reduction <add>, %336, %cst_51 [1] : vector<16x16x32xf32> to vector<16x32xf32>
    %338 = vector.shape_cast %337 : vector<16x32xf32> to vector<16x1x32xf32>
    %339 = tpu.reciprocal %338 {approx = true} : vector<16x1x32xf32> -> vector<16x1x32xf32>
    %340 = vector.broadcast %339 : vector<16x1x32xf32> to vector<16x16x32xf32>
    %341 = arith.mulf %336, %340 : vector<16x16x32xf32>
    %342 = vector.shape_cast %185 : vector<16x32xf32> to vector<1x16x32xf32>
    %c0_52 = arith.constant 0 : index
    %c0_53 = arith.constant 0 : index
    %c0_54 = arith.constant 0 : index
    %c0_55 = arith.constant 0 : index
    %343 = vector.load %arg7[%c0_52, %c0_53, %c0_54, %c0_55] : memref<4x16x16x32xf32, #tpu.memory_space<vmem>>, vector<1x16x16x32xf32>
    %344 = vector.shape_cast %343 : vector<1x16x16x32xf32> to vector<16x16x32xf32>
    %345 = vector.broadcast %342 : vector<1x16x32xf32> to vector<16x16x32xf32>
    %346 = arith.addf %345, %344 : vector<16x16x32xf32>
    %347 = arith.mulf %341, %346 : vector<16x16x32xf32>
    %cst_56 = arith.constant dense<0.000000e+00> : vector<16x32xf32>
    %348 = vector.multi_reduction <add>, %347, %cst_56 [1] : vector<16x16x32xf32> to vector<16x32xf32>
    %c0_57 = arith.constant 0 : index
    %c0_58 = arith.constant 0 : index
    %c0_59 = arith.constant 0 : index
    %349 = vector.load %arg8[%c0_57, %c0_58, %c0_59] : memref<8x16x32xf32, #tpu.memory_space<vmem>>, vector<1x16x32xf32>
    %350 = vector.shape_cast %349 : vector<1x16x32xf32> to vector<16x32xf32>
    %351 = vector.shape_cast %348 : vector<16x32xf32> to vector<1x16x32xf32>
    tpu.vector_store %arg8[%c0_57, %c0_58, %c0_59], %351 {strides = array<i32>} : memref<8x16x32xf32, #tpu.memory_space<vmem>>, vector<1x16x32xf32>,
    %352 = vector.shape_cast %219 : vector<16x32xf32> to vector<1x16x32xf32>
    %c1_60 = arith.constant 1 : index
    %c0_61 = arith.constant 0 : index
    %c0_62 = arith.constant 0 : index
    %c0_63 = arith.constant 0 : index
    %353 = vector.load %arg7[%c1_60, %c0_61, %c0_62, %c0_63] : memref<4x16x16x32xf32, #tpu.memory_space<vmem>>, vector<1x16x16x32xf32>
    %354 = vector.shape_cast %353 : vector<1x16x16x32xf32> to vector<16x16x32xf32>
    %355 = vector.broadcast %352 : vector<1x16x32xf32> to vector<16x16x32xf32>
    %356 = arith.addf %355, %354 : vector<16x16x32xf32>
    %357 = arith.mulf %341, %356 : vector<16x16x32xf32>
    %cst_64 = arith.constant dense<0.000000e+00> : vector<16x32xf32>
    %358 = vector.multi_reduction <add>, %357, %cst_64 [1] : vector<16x16x32xf32> to vector<16x32xf32>
    %c1_65 = arith.constant 1 : index
    %c0_66 = arith.constant 0 : index
    %c0_67 = arith.constant 0 : index
    %359 = vector.load %arg8[%c1_65, %c0_66, %c0_67] : memref<8x16x32xf32, #tpu.memory_space<vmem>>, vector<1x16x32xf32>
    %360 = vector.shape_cast %359 : vector<1x16x32xf32> to vector<16x32xf32>
    %361 = vector.shape_cast %358 : vector<16x32xf32> to vector<1x16x32xf32>
    tpu.vector_store %arg8[%c1_65, %c0_66, %c0_67], %361 {strides = array<i32>} : memref<8x16x32xf32, #tpu.memory_space<vmem>>, vector<1x16x32xf32>,
    %362 = vector.shape_cast %253 : vector<16x32xf32> to vector<1x16x32xf32>
    %c2_68 = arith.constant 2 : index
    %c0_69 = arith.constant 0 : index
    %c0_70 = arith.constant 0 : index
    %c0_71 = arith.constant 0 : index
    %363 = vector.load %arg7[%c2_68, %c0_69, %c0_70, %c0_71] : memref<4x16x16x32xf32, #tpu.memory_space<vmem>>, vector<1x16x16x32xf32>
    %364 = vector.shape_cast %363 : vector<1x16x16x32xf32> to vector<16x16x32xf32>
    %365 = vector.broadcast %362 : vector<1x16x32xf32> to vector<16x16x32xf32>
    %366 = arith.addf %365, %364 : vector<16x16x32xf32>
    %367 = arith.mulf %341, %366 : vector<16x16x32xf32>
    %cst_72 = arith.constant dense<0.000000e+00> : vector<16x32xf32>
    %368 = vector.multi_reduction <add>, %367, %cst_72 [1] : vector<16x16x32xf32> to vector<16x32xf32>
    %c2_73 = arith.constant 2 : index
    %c0_74 = arith.constant 0 : index
    %c0_75 = arith.constant 0 : index
    %369 = vector.load %arg8[%c2_73, %c0_74, %c0_75] : memref<8x16x32xf32, #tpu.memory_space<vmem>>, vector<1x16x32xf32>
    %370 = vector.shape_cast %369 : vector<1x16x32xf32> to vector<16x32xf32>
    %371 = vector.shape_cast %368 : vector<16x32xf32> to vector<1x16x32xf32>
    tpu.vector_store %arg8[%c2_73, %c0_74, %c0_75], %371 {strides = array<i32>} : memref<8x16x32xf32, #tpu.memory_space<vmem>>, vector<1x16x32xf32>,
    %372 = vector.shape_cast %287 : vector<16x32xf32> to vector<1x16x32xf32>
    %c3_76 = arith.constant 3 : index
    %c0_77 = arith.constant 0 : index
    %c0_78 = arith.constant 0 : index
    %c0_79 = arith.constant 0 : index
    %373 = vector.load %arg7[%c3_76, %c0_77, %c0_78, %c0_79] : memref<4x16x16x32xf32, #tpu.memory_space<vmem>>, vector<1x16x16x32xf32>
    %374 = vector.shape_cast %373 : vector<1x16x16x32xf32> to vector<16x16x32xf32>
    %375 = vector.broadcast %372 : vector<1x16x32xf32> to vector<16x16x32xf32>
    %376 = arith.addf %375, %374 : vector<16x16x32xf32>
    %377 = arith.mulf %341, %376 : vector<16x16x32xf32>
    %cst_80 = arith.constant dense<0.000000e+00> : vector<16x32xf32>
    %378 = vector.multi_reduction <add>, %377, %cst_80 [1] : vector<16x16x32xf32> to vector<16x32xf32>
    %c3_81 = arith.constant 3 : index
    %c0_82 = arith.constant 0 : index
    %c0_83 = arith.constant 0 : index
    %379 = vector.load %arg8[%c3_81, %c0_82, %c0_83] : memref<8x16x32xf32, #tpu.memory_space<vmem>>, vector<1x16x32xf32>
    %380 = vector.shape_cast %379 : vector<1x16x32xf32> to vector<16x32xf32>
    %381 = vector.shape_cast %378 : vector<16x32xf32> to vector<1x16x32xf32>
    tpu.vector_store %arg8[%c3_81, %c0_82, %c0_83], %381 {strides = array<i32>} : memref<8x16x32xf32, #tpu.memory_space<vmem>>, vector<1x16x32xf32>,
    %c64 = arith.constant 64 : index
    %382 = memref.load %arg2[%c64] : memref<128xf32, #tpu.memory_space<smem>>
    %383 = vector.broadcast %382 : f32 to vector<16x32xf32>
    %384 = arith.mulf %1, %383 : vector<16x32xf32>
    %c65 = arith.constant 65 : index
    %385 = memref.load %arg2[%c65] : memref<128xf32, #tpu.memory_space<smem>>
    %386 = vector.broadcast %385 : f32 to vector<16x32xf32>
    %387 = arith.mulf %3, %386 : vector<16x32xf32>
    %388 = arith.addf %384, %387 : vector<16x32xf32>
    %c66 = arith.constant 66 : index
    %389 = memref.load %arg2[%c66] : memref<128xf32, #tpu.memory_space<smem>>
    %390 = vector.broadcast %389 : f32 to vector<16x32xf32>
    %391 = arith.mulf %5, %390 : vector<16x32xf32>
    %392 = arith.addf %388, %391 : vector<16x32xf32>
    %c67 = arith.constant 67 : index
    %393 = memref.load %arg2[%c67] : memref<128xf32, #tpu.memory_space<smem>>
    %394 = vector.broadcast %393 : f32 to vector<16x32xf32>
    %395 = arith.mulf %7, %394 : vector<16x32xf32>
    %396 = arith.addf %392, %395 : vector<16x32xf32>
    %c68 = arith.constant 68 : index
    %397 = memref.load %arg2[%c68] : memref<128xf32, #tpu.memory_space<smem>>
    %398 = vector.broadcast %397 : f32 to vector<16x32xf32>
    %399 = arith.mulf %9, %398 : vector<16x32xf32>
    %400 = arith.addf %396, %399 : vector<16x32xf32>
    %c69 = arith.constant 69 : index
    %401 = memref.load %arg2[%c69] : memref<128xf32, #tpu.memory_space<smem>>
    %402 = vector.broadcast %401 : f32 to vector<16x32xf32>
    %403 = arith.mulf %11, %402 : vector<16x32xf32>
    %404 = arith.addf %400, %403 : vector<16x32xf32>
    %c70 = arith.constant 70 : index
    %405 = memref.load %arg2[%c70] : memref<128xf32, #tpu.memory_space<smem>>
    %406 = vector.broadcast %405 : f32 to vector<16x32xf32>
    %407 = arith.mulf %13, %406 : vector<16x32xf32>
    %408 = arith.addf %404, %407 : vector<16x32xf32>
    %c71 = arith.constant 71 : index
    %409 = memref.load %arg2[%c71] : memref<128xf32, #tpu.memory_space<smem>>
    %410 = vector.broadcast %409 : f32 to vector<16x32xf32>
    %411 = arith.mulf %15, %410 : vector<16x32xf32>
    %412 = arith.addf %408, %411 : vector<16x32xf32>
    %c8_84 = arith.constant 8 : index
    %413 = memref.load %arg3[%c8_84] : memref<16xf32, #tpu.memory_space<smem>>
    %414 = vector.broadcast %413 : f32 to vector<16x32xf32>
    %415 = arith.addf %412, %414 : vector<16x32xf32>
    %c72 = arith.constant 72 : index
    %416 = memref.load %arg2[%c72] : memref<128xf32, #tpu.memory_space<smem>>
    %417 = vector.broadcast %416 : f32 to vector<16x32xf32>
    %418 = arith.mulf %1, %417 : vector<16x32xf32>
    %c73 = arith.constant 73 : index
    %419 = memref.load %arg2[%c73] : memref<128xf32, #tpu.memory_space<smem>>
    %420 = vector.broadcast %419 : f32 to vector<16x32xf32>
    %421 = arith.mulf %3, %420 : vector<16x32xf32>
    %422 = arith.addf %418, %421 : vector<16x32xf32>
    %c74 = arith.constant 74 : index
    %423 = memref.load %arg2[%c74] : memref<128xf32, #tpu.memory_space<smem>>
    %424 = vector.broadcast %423 : f32 to vector<16x32xf32>
    %425 = arith.mulf %5, %424 : vector<16x32xf32>
    %426 = arith.addf %422, %425 : vector<16x32xf32>
    %c75 = arith.constant 75 : index
    %427 = memref.load %arg2[%c75] : memref<128xf32, #tpu.memory_space<smem>>
    %428 = vector.broadcast %427 : f32 to vector<16x32xf32>
    %429 = arith.mulf %7, %428 : vector<16x32xf32>
    %430 = arith.addf %426, %429 : vector<16x32xf32>
    %c76 = arith.constant 76 : index
    %431 = memref.load %arg2[%c76] : memref<128xf32, #tpu.memory_space<smem>>
    %432 = vector.broadcast %431 : f32 to vector<16x32xf32>
    %433 = arith.mulf %9, %432 : vector<16x32xf32>
    %434 = arith.addf %430, %433 : vector<16x32xf32>
    %c77 = arith.constant 77 : index
    %435 = memref.load %arg2[%c77] : memref<128xf32, #tpu.memory_space<smem>>
    %436 = vector.broadcast %435 : f32 to vector<16x32xf32>
    %437 = arith.mulf %11, %436 : vector<16x32xf32>
    %438 = arith.addf %434, %437 : vector<16x32xf32>
    %c78 = arith.constant 78 : index
    %439 = memref.load %arg2[%c78] : memref<128xf32, #tpu.memory_space<smem>>
    %440 = vector.broadcast %439 : f32 to vector<16x32xf32>
    %441 = arith.mulf %13, %440 : vector<16x32xf32>
    %442 = arith.addf %438, %441 : vector<16x32xf32>
    %c79 = arith.constant 79 : index
    %443 = memref.load %arg2[%c79] : memref<128xf32, #tpu.memory_space<smem>>
    %444 = vector.broadcast %443 : f32 to vector<16x32xf32>
    %445 = arith.mulf %15, %444 : vector<16x32xf32>
    %446 = arith.addf %442, %445 : vector<16x32xf32>
    %c9_85 = arith.constant 9 : index
    %447 = memref.load %arg3[%c9_85] : memref<16xf32, #tpu.memory_space<smem>>
    %448 = vector.broadcast %447 : f32 to vector<16x32xf32>
    %449 = arith.addf %446, %448 : vector<16x32xf32>
    %c80 = arith.constant 80 : index
    %450 = memref.load %arg2[%c80] : memref<128xf32, #tpu.memory_space<smem>>
    %451 = vector.broadcast %450 : f32 to vector<16x32xf32>
    %452 = arith.mulf %1, %451 : vector<16x32xf32>
    %c81 = arith.constant 81 : index
    %453 = memref.load %arg2[%c81] : memref<128xf32, #tpu.memory_space<smem>>
    %454 = vector.broadcast %453 : f32 to vector<16x32xf32>
    %455 = arith.mulf %3, %454 : vector<16x32xf32>
    %456 = arith.addf %452, %455 : vector<16x32xf32>
    %c82 = arith.constant 82 : index
    %457 = memref.load %arg2[%c82] : memref<128xf32, #tpu.memory_space<smem>>
    %458 = vector.broadcast %457 : f32 to vector<16x32xf32>
    %459 = arith.mulf %5, %458 : vector<16x32xf32>
    %460 = arith.addf %456, %459 : vector<16x32xf32>
    %c83 = arith.constant 83 : index
    %461 = memref.load %arg2[%c83] : memref<128xf32, #tpu.memory_space<smem>>
    %462 = vector.broadcast %461 : f32 to vector<16x32xf32>
    %463 = arith.mulf %7, %462 : vector<16x32xf32>
    %464 = arith.addf %460, %463 : vector<16x32xf32>
    %c84 = arith.constant 84 : index
    %465 = memref.load %arg2[%c84] : memref<128xf32, #tpu.memory_space<smem>>
    %466 = vector.broadcast %465 : f32 to vector<16x32xf32>
    %467 = arith.mulf %9, %466 : vector<16x32xf32>
    %468 = arith.addf %464, %467 : vector<16x32xf32>
    %c85 = arith.constant 85 : index
    %469 = memref.load %arg2[%c85] : memref<128xf32, #tpu.memory_space<smem>>
    %470 = vector.broadcast %469 : f32 to vector<16x32xf32>
    %471 = arith.mulf %11, %470 : vector<16x32xf32>
    %472 = arith.addf %468, %471 : vector<16x32xf32>
    %c86 = arith.constant 86 : index
    %473 = memref.load %arg2[%c86] : memref<128xf32, #tpu.memory_space<smem>>
    %474 = vector.broadcast %473 : f32 to vector<16x32xf32>
    %475 = arith.mulf %13, %474 : vector<16x32xf32>
    %476 = arith.addf %472, %475 : vector<16x32xf32>
    %c87 = arith.constant 87 : index
    %477 = memref.load %arg2[%c87] : memref<128xf32, #tpu.memory_space<smem>>
    %478 = vector.broadcast %477 : f32 to vector<16x32xf32>
    %479 = arith.mulf %15, %478 : vector<16x32xf32>
    %480 = arith.addf %476, %479 : vector<16x32xf32>
    %c10_86 = arith.constant 10 : index
    %481 = memref.load %arg3[%c10_86] : memref<16xf32, #tpu.memory_space<smem>>
    %482 = vector.broadcast %481 : f32 to vector<16x32xf32>
    %483 = arith.addf %480, %482 : vector<16x32xf32>
    %c88 = arith.constant 88 : index
    %484 = memref.load %arg2[%c88] : memref<128xf32, #tpu.memory_space<smem>>
    %485 = vector.broadcast %484 : f32 to vector<16x32xf32>
    %486 = arith.mulf %1, %485 : vector<16x32xf32>
    %c89 = arith.constant 89 : index
    %487 = memref.load %arg2[%c89] : memref<128xf32, #tpu.memory_space<smem>>
    %488 = vector.broadcast %487 : f32 to vector<16x32xf32>
    %489 = arith.mulf %3, %488 : vector<16x32xf32>
    %490 = arith.addf %486, %489 : vector<16x32xf32>
    %c90 = arith.constant 90 : index
    %491 = memref.load %arg2[%c90] : memref<128xf32, #tpu.memory_space<smem>>
    %492 = vector.broadcast %491 : f32 to vector<16x32xf32>
    %493 = arith.mulf %5, %492 : vector<16x32xf32>
    %494 = arith.addf %490, %493 : vector<16x32xf32>
    %c91 = arith.constant 91 : index
    %495 = memref.load %arg2[%c91] : memref<128xf32, #tpu.memory_space<smem>>
    %496 = vector.broadcast %495 : f32 to vector<16x32xf32>
    %497 = arith.mulf %7, %496 : vector<16x32xf32>
    %498 = arith.addf %494, %497 : vector<16x32xf32>
    %c92 = arith.constant 92 : index
    %499 = memref.load %arg2[%c92] : memref<128xf32, #tpu.memory_space<smem>>
    %500 = vector.broadcast %499 : f32 to vector<16x32xf32>
    %501 = arith.mulf %9, %500 : vector<16x32xf32>
    %502 = arith.addf %498, %501 : vector<16x32xf32>
    %c93 = arith.constant 93 : index
    %503 = memref.load %arg2[%c93] : memref<128xf32, #tpu.memory_space<smem>>
    %504 = vector.broadcast %503 : f32 to vector<16x32xf32>
    %505 = arith.mulf %11, %504 : vector<16x32xf32>
    %506 = arith.addf %502, %505 : vector<16x32xf32>
    %c94 = arith.constant 94 : index
    %507 = memref.load %arg2[%c94] : memref<128xf32, #tpu.memory_space<smem>>
    %508 = vector.broadcast %507 : f32 to vector<16x32xf32>
    %509 = arith.mulf %13, %508 : vector<16x32xf32>
    %510 = arith.addf %506, %509 : vector<16x32xf32>
    %c95 = arith.constant 95 : index
    %511 = memref.load %arg2[%c95] : memref<128xf32, #tpu.memory_space<smem>>
    %512 = vector.broadcast %511 : f32 to vector<16x32xf32>
    %513 = arith.mulf %15, %512 : vector<16x32xf32>
    %514 = arith.addf %510, %513 : vector<16x32xf32>
    %c11_87 = arith.constant 11 : index
    %515 = memref.load %arg3[%c11_87] : memref<16xf32, #tpu.memory_space<smem>>
    %516 = vector.broadcast %515 : f32 to vector<16x32xf32>
    %517 = arith.addf %514, %516 : vector<16x32xf32>
    %c96 = arith.constant 96 : index
    %518 = memref.load %arg2[%c96] : memref<128xf32, #tpu.memory_space<smem>>
    %519 = vector.broadcast %518 : f32 to vector<16x32xf32>
    %520 = arith.mulf %1, %519 : vector<16x32xf32>
    %c97 = arith.constant 97 : index
    %521 = memref.load %arg2[%c97] : memref<128xf32, #tpu.memory_space<smem>>
    %522 = vector.broadcast %521 : f32 to vector<16x32xf32>
    %523 = arith.mulf %3, %522 : vector<16x32xf32>
    %524 = arith.addf %520, %523 : vector<16x32xf32>
    %c98 = arith.constant 98 : index
    %525 = memref.load %arg2[%c98] : memref<128xf32, #tpu.memory_space<smem>>
    %526 = vector.broadcast %525 : f32 to vector<16x32xf32>
    %527 = arith.mulf %5, %526 : vector<16x32xf32>
    %528 = arith.addf %524, %527 : vector<16x32xf32>
    %c99 = arith.constant 99 : index
    %529 = memref.load %arg2[%c99] : memref<128xf32, #tpu.memory_space<smem>>
    %530 = vector.broadcast %529 : f32 to vector<16x32xf32>
    %531 = arith.mulf %7, %530 : vector<16x32xf32>
    %532 = arith.addf %528, %531 : vector<16x32xf32>
    %c100 = arith.constant 100 : index
    %533 = memref.load %arg2[%c100] : memref<128xf32, #tpu.memory_space<smem>>
    %534 = vector.broadcast %533 : f32 to vector<16x32xf32>
    %535 = arith.mulf %9, %534 : vector<16x32xf32>
    %536 = arith.addf %532, %535 : vector<16x32xf32>
    %c101 = arith.constant 101 : index
    %537 = memref.load %arg2[%c101] : memref<128xf32, #tpu.memory_space<smem>>
    %538 = vector.broadcast %537 : f32 to vector<16x32xf32>
    %539 = arith.mulf %11, %538 : vector<16x32xf32>
    %540 = arith.addf %536, %539 : vector<16x32xf32>
    %c102 = arith.constant 102 : index
    %541 = memref.load %arg2[%c102] : memref<128xf32, #tpu.memory_space<smem>>
    %542 = vector.broadcast %541 : f32 to vector<16x32xf32>
    %543 = arith.mulf %13, %542 : vector<16x32xf32>
    %544 = arith.addf %540, %543 : vector<16x32xf32>
    %c103 = arith.constant 103 : index
    %545 = memref.load %arg2[%c103] : memref<128xf32, #tpu.memory_space<smem>>
    %546 = vector.broadcast %545 : f32 to vector<16x32xf32>
    %547 = arith.mulf %15, %546 : vector<16x32xf32>
    %548 = arith.addf %544, %547 : vector<16x32xf32>
    %c12_88 = arith.constant 12 : index
    %549 = memref.load %arg3[%c12_88] : memref<16xf32, #tpu.memory_space<smem>>
    %550 = vector.broadcast %549 : f32 to vector<16x32xf32>
    %551 = arith.addf %548, %550 : vector<16x32xf32>
    %c104 = arith.constant 104 : index
    %552 = memref.load %arg2[%c104] : memref<128xf32, #tpu.memory_space<smem>>
    %553 = vector.broadcast %552 : f32 to vector<16x32xf32>
    %554 = arith.mulf %1, %553 : vector<16x32xf32>
    %c105 = arith.constant 105 : index
    %555 = memref.load %arg2[%c105] : memref<128xf32, #tpu.memory_space<smem>>
    %556 = vector.broadcast %555 : f32 to vector<16x32xf32>
    %557 = arith.mulf %3, %556 : vector<16x32xf32>
    %558 = arith.addf %554, %557 : vector<16x32xf32>
    %c106 = arith.constant 106 : index
    %559 = memref.load %arg2[%c106] : memref<128xf32, #tpu.memory_space<smem>>
    %560 = vector.broadcast %559 : f32 to vector<16x32xf32>
    %561 = arith.mulf %5, %560 : vector<16x32xf32>
    %562 = arith.addf %558, %561 : vector<16x32xf32>
    %c107 = arith.constant 107 : index
    %563 = memref.load %arg2[%c107] : memref<128xf32, #tpu.memory_space<smem>>
    %564 = vector.broadcast %563 : f32 to vector<16x32xf32>
    %565 = arith.mulf %7, %564 : vector<16x32xf32>
    %566 = arith.addf %562, %565 : vector<16x32xf32>
    %c108 = arith.constant 108 : index
    %567 = memref.load %arg2[%c108] : memref<128xf32, #tpu.memory_space<smem>>
    %568 = vector.broadcast %567 : f32 to vector<16x32xf32>
    %569 = arith.mulf %9, %568 : vector<16x32xf32>
    %570 = arith.addf %566, %569 : vector<16x32xf32>
    %c109 = arith.constant 109 : index
    %571 = memref.load %arg2[%c109] : memref<128xf32, #tpu.memory_space<smem>>
    %572 = vector.broadcast %571 : f32 to vector<16x32xf32>
    %573 = arith.mulf %11, %572 : vector<16x32xf32>
    %574 = arith.addf %570, %573 : vector<16x32xf32>
    %c110 = arith.constant 110 : index
    %575 = memref.load %arg2[%c110] : memref<128xf32, #tpu.memory_space<smem>>
    %576 = vector.broadcast %575 : f32 to vector<16x32xf32>
    %577 = arith.mulf %13, %576 : vector<16x32xf32>
    %578 = arith.addf %574, %577 : vector<16x32xf32>
    %c111 = arith.constant 111 : index
    %579 = memref.load %arg2[%c111] : memref<128xf32, #tpu.memory_space<smem>>
    %580 = vector.broadcast %579 : f32 to vector<16x32xf32>
    %581 = arith.mulf %15, %580 : vector<16x32xf32>
    %582 = arith.addf %578, %581 : vector<16x32xf32>
    %c13_89 = arith.constant 13 : index
    %583 = memref.load %arg3[%c13_89] : memref<16xf32, #tpu.memory_space<smem>>
    %584 = vector.broadcast %583 : f32 to vector<16x32xf32>
    %585 = arith.addf %582, %584 : vector<16x32xf32>
    %c112 = arith.constant 112 : index
    %586 = memref.load %arg2[%c112] : memref<128xf32, #tpu.memory_space<smem>>
    %587 = vector.broadcast %586 : f32 to vector<16x32xf32>
    %588 = arith.mulf %1, %587 : vector<16x32xf32>
    %c113 = arith.constant 113 : index
    %589 = memref.load %arg2[%c113] : memref<128xf32, #tpu.memory_space<smem>>
    %590 = vector.broadcast %589 : f32 to vector<16x32xf32>
    %591 = arith.mulf %3, %590 : vector<16x32xf32>
    %592 = arith.addf %588, %591 : vector<16x32xf32>
    %c114 = arith.constant 114 : index
    %593 = memref.load %arg2[%c114] : memref<128xf32, #tpu.memory_space<smem>>
    %594 = vector.broadcast %593 : f32 to vector<16x32xf32>
    %595 = arith.mulf %5, %594 : vector<16x32xf32>
    %596 = arith.addf %592, %595 : vector<16x32xf32>
    %c115 = arith.constant 115 : index
    %597 = memref.load %arg2[%c115] : memref<128xf32, #tpu.memory_space<smem>>
    %598 = vector.broadcast %597 : f32 to vector<16x32xf32>
    %599 = arith.mulf %7, %598 : vector<16x32xf32>
    %600 = arith.addf %596, %599 : vector<16x32xf32>
    %c116 = arith.constant 116 : index
    %601 = memref.load %arg2[%c116] : memref<128xf32, #tpu.memory_space<smem>>
    %602 = vector.broadcast %601 : f32 to vector<16x32xf32>
    %603 = arith.mulf %9, %602 : vector<16x32xf32>
    %604 = arith.addf %600, %603 : vector<16x32xf32>
    %c117 = arith.constant 117 : index
    %605 = memref.load %arg2[%c117] : memref<128xf32, #tpu.memory_space<smem>>
    %606 = vector.broadcast %605 : f32 to vector<16x32xf32>
    %607 = arith.mulf %11, %606 : vector<16x32xf32>
    %608 = arith.addf %604, %607 : vector<16x32xf32>
    %c118 = arith.constant 118 : index
    %609 = memref.load %arg2[%c118] : memref<128xf32, #tpu.memory_space<smem>>
    %610 = vector.broadcast %609 : f32 to vector<16x32xf32>
    %611 = arith.mulf %13, %610 : vector<16x32xf32>
    %612 = arith.addf %608, %611 : vector<16x32xf32>
    %c119 = arith.constant 119 : index
    %613 = memref.load %arg2[%c119] : memref<128xf32, #tpu.memory_space<smem>>
    %614 = vector.broadcast %613 : f32 to vector<16x32xf32>
    %615 = arith.mulf %15, %614 : vector<16x32xf32>
    %616 = arith.addf %612, %615 : vector<16x32xf32>
    %c14_90 = arith.constant 14 : index
    %617 = memref.load %arg3[%c14_90] : memref<16xf32, #tpu.memory_space<smem>>
    %618 = vector.broadcast %617 : f32 to vector<16x32xf32>
    %619 = arith.addf %616, %618 : vector<16x32xf32>
    %c120 = arith.constant 120 : index
    %620 = memref.load %arg2[%c120] : memref<128xf32, #tpu.memory_space<smem>>
    %621 = vector.broadcast %620 : f32 to vector<16x32xf32>
    %622 = arith.mulf %1, %621 : vector<16x32xf32>
    %c121 = arith.constant 121 : index
    %623 = memref.load %arg2[%c121] : memref<128xf32, #tpu.memory_space<smem>>
    %624 = vector.broadcast %623 : f32 to vector<16x32xf32>
    %625 = arith.mulf %3, %624 : vector<16x32xf32>
    %626 = arith.addf %622, %625 : vector<16x32xf32>
    %c122 = arith.constant 122 : index
    %627 = memref.load %arg2[%c122] : memref<128xf32, #tpu.memory_space<smem>>
    %628 = vector.broadcast %627 : f32 to vector<16x32xf32>
    %629 = arith.mulf %5, %628 : vector<16x32xf32>
    %630 = arith.addf %626, %629 : vector<16x32xf32>
    %c123 = arith.constant 123 : index
    %631 = memref.load %arg2[%c123] : memref<128xf32, #tpu.memory_space<smem>>
    %632 = vector.broadcast %631 : f32 to vector<16x32xf32>
    %633 = arith.mulf %7, %632 : vector<16x32xf32>
    %634 = arith.addf %630, %633 : vector<16x32xf32>
    %c124 = arith.constant 124 : index
    %635 = memref.load %arg2[%c124] : memref<128xf32, #tpu.memory_space<smem>>
    %636 = vector.broadcast %635 : f32 to vector<16x32xf32>
    %637 = arith.mulf %9, %636 : vector<16x32xf32>
    %638 = arith.addf %634, %637 : vector<16x32xf32>
    %c125 = arith.constant 125 : index
    %639 = memref.load %arg2[%c125] : memref<128xf32, #tpu.memory_space<smem>>
    %640 = vector.broadcast %639 : f32 to vector<16x32xf32>
    %641 = arith.mulf %11, %640 : vector<16x32xf32>
    %642 = arith.addf %638, %641 : vector<16x32xf32>
    %c126 = arith.constant 126 : index
    %643 = memref.load %arg2[%c126] : memref<128xf32, #tpu.memory_space<smem>>
    %644 = vector.broadcast %643 : f32 to vector<16x32xf32>
    %645 = arith.mulf %13, %644 : vector<16x32xf32>
    %646 = arith.addf %642, %645 : vector<16x32xf32>
    %c127 = arith.constant 127 : index
    %647 = memref.load %arg2[%c127] : memref<128xf32, #tpu.memory_space<smem>>
    %648 = vector.broadcast %647 : f32 to vector<16x32xf32>
    %649 = arith.mulf %15, %648 : vector<16x32xf32>
    %650 = arith.addf %646, %649 : vector<16x32xf32>
    %c15_91 = arith.constant 15 : index
    %651 = memref.load %arg3[%c15_91] : memref<16xf32, #tpu.memory_space<smem>>
    %652 = vector.broadcast %651 : f32 to vector<16x32xf32>
    %653 = arith.addf %650, %652 : vector<16x32xf32>
    %c1_92 = arith.constant 1 : index
    %654 = memref.load %arg4[%c1_92] : memref<6xf32, #tpu.memory_space<smem>>
    %c3_93 = arith.constant 3 : index
    %655 = memref.load %arg4[%c3_93] : memref<6xf32, #tpu.memory_space<smem>>
    %c5_94 = arith.constant 5 : index
    %656 = memref.load %arg4[%c5_94] : memref<6xf32, #tpu.memory_space<smem>>
    %657 = vector.broadcast %654 : f32 to vector<16x32xf32>
    %658 = arith.mulf %415, %657 : vector<16x32xf32>
    %659 = vector.shape_cast %658 : vector<16x32xf32> to vector<1x16x32xf32>
    %c0_95 = arith.constant 0 : index
    %c0_96 = arith.constant 0 : index
    %c0_97 = arith.constant 0 : index
    %c0_98 = arith.constant 0 : index
    %660 = vector.load %arg5[%c0_95, %c0_96, %c0_97, %c0_98] : memref<2x16x16x32xf32, #tpu.memory_space<vmem>>, vector<1x16x16x32xf32>
    %661 = vector.shape_cast %660 : vector<1x16x16x32xf32> to vector<16x16x32xf32>
    %662 = vector.broadcast %655 : f32 to vector<16x16x32xf32>
    %663 = arith.mulf %661, %662 : vector<16x16x32xf32>
    %664 = vector.broadcast %659 : vector<1x16x32xf32> to vector<16x16x32xf32>
    %665 = arith.addf %664, %663 : vector<16x16x32xf32>
    %666 = vector.shape_cast %483 : vector<16x32xf32> to vector<16x1x32xf32>
    %667 = vector.broadcast %666 : vector<16x1x32xf32> to vector<16x16x32xf32>
    %668 = arith.mulf %667, %665 : vector<16x16x32xf32>
    %669 = vector.broadcast %656 : f32 to vector<16x32xf32>
    %670 = arith.mulf %415, %669 : vector<16x32xf32>
    %671 = vector.shape_cast %670 : vector<16x32xf32> to vector<1x16x32xf32>
    %c0_99 = arith.constant 0 : index
    %c0_100 = arith.constant 0 : index
    %c0_101 = arith.constant 0 : index
    %c0_102 = arith.constant 0 : index
    %672 = vector.load %arg6[%c0_99, %c0_100, %c0_101, %c0_102] : memref<2x16x16x32xf32, #tpu.memory_space<vmem>>, vector<1x16x16x32xf32>
    %673 = vector.shape_cast %672 : vector<1x16x16x32xf32> to vector<16x16x32xf32>
    %674 = vector.broadcast %671 : vector<1x16x32xf32> to vector<16x16x32xf32>
    %675 = arith.mulf %674, %673 : vector<16x16x32xf32>
    %676 = arith.addf %668, %675 : vector<16x16x32xf32>
    %677 = vector.broadcast %654 : f32 to vector<16x32xf32>
    %678 = arith.mulf %449, %677 : vector<16x32xf32>
    %679 = vector.shape_cast %678 : vector<16x32xf32> to vector<1x16x32xf32>
    %c1_103 = arith.constant 1 : index
    %c0_104 = arith.constant 0 : index
    %c0_105 = arith.constant 0 : index
    %c0_106 = arith.constant 0 : index
    %680 = vector.load %arg5[%c1_103, %c0_104, %c0_105, %c0_106] : memref<2x16x16x32xf32, #tpu.memory_space<vmem>>, vector<1x16x16x32xf32>
    %681 = vector.shape_cast %680 : vector<1x16x16x32xf32> to vector<16x16x32xf32>
    %682 = vector.broadcast %655 : f32 to vector<16x16x32xf32>
    %683 = arith.mulf %681, %682 : vector<16x16x32xf32>
    %684 = vector.broadcast %679 : vector<1x16x32xf32> to vector<16x16x32xf32>
    %685 = arith.addf %684, %683 : vector<16x16x32xf32>
    %686 = vector.shape_cast %517 : vector<16x32xf32> to vector<16x1x32xf32>
    %687 = vector.broadcast %686 : vector<16x1x32xf32> to vector<16x16x32xf32>
    %688 = arith.mulf %687, %685 : vector<16x16x32xf32>
    %689 = vector.broadcast %656 : f32 to vector<16x32xf32>
    %690 = arith.mulf %449, %689 : vector<16x32xf32>
    %691 = vector.shape_cast %690 : vector<16x32xf32> to vector<1x16x32xf32>
    %c1_107 = arith.constant 1 : index
    %c0_108 = arith.constant 0 : index
    %c0_109 = arith.constant 0 : index
    %c0_110 = arith.constant 0 : index
    %692 = vector.load %arg6[%c1_107, %c0_108, %c0_109, %c0_110] : memref<2x16x16x32xf32, #tpu.memory_space<vmem>>, vector<1x16x16x32xf32>
    %693 = vector.shape_cast %692 : vector<1x16x16x32xf32> to vector<16x16x32xf32>
    %694 = vector.broadcast %691 : vector<1x16x32xf32> to vector<16x16x32xf32>
    %695 = arith.mulf %694, %693 : vector<16x16x32xf32>
    %696 = arith.addf %688, %695 : vector<16x16x32xf32>
    %697 = arith.addf %676, %696 : vector<16x16x32xf32>
    %cst_111 = arith.constant dense<0xFF800000> : vector<16x32xf32>
    %698 = vector.multi_reduction <maximumf>, %697, %cst_111 [1] : vector<16x16x32xf32> to vector<16x32xf32>
    %699 = vector.shape_cast %698 : vector<16x32xf32> to vector<16x1x32xf32>
    %700 = vector.broadcast %699 : vector<16x1x32xf32> to vector<16x16x32xf32>
    %701 = arith.subf %697, %700 : vector<16x16x32xf32>
    %702 = math.exp %701 : vector<16x16x32xf32>
    %cst_112 = arith.constant dense<0.000000e+00> : vector<16x32xf32>
    %703 = vector.multi_reduction <add>, %702, %cst_112 [1] : vector<16x16x32xf32> to vector<16x32xf32>
    %704 = vector.shape_cast %703 : vector<16x32xf32> to vector<16x1x32xf32>
    %705 = tpu.reciprocal %704 {approx = true} : vector<16x1x32xf32> -> vector<16x1x32xf32>
    %706 = vector.broadcast %705 : vector<16x1x32xf32> to vector<16x16x32xf32>
    %707 = arith.mulf %702, %706 : vector<16x16x32xf32>
    %708 = vector.shape_cast %551 : vector<16x32xf32> to vector<1x16x32xf32>
    %c0_113 = arith.constant 0 : index
    %c0_114 = arith.constant 0 : index
    %c0_115 = arith.constant 0 : index
    %c0_116 = arith.constant 0 : index
    %709 = vector.load %arg7[%c0_113, %c0_114, %c0_115, %c0_116] : memref<4x16x16x32xf32, #tpu.memory_space<vmem>>, vector<1x16x16x32xf32>
    %710 = vector.shape_cast %709 : vector<1x16x16x32xf32> to vector<16x16x32xf32>
    %711 = vector.broadcast %708 : vector<1x16x32xf32> to vector<16x16x32xf32>
    %712 = arith.addf %711, %710 : vector<16x16x32xf32>
    %713 = arith.mulf %707, %712 : vector<16x16x32xf32>
    %cst_117 = arith.constant dense<0.000000e+00> : vector<16x32xf32>
    %714 = vector.multi_reduction <add>, %713, %cst_117 [1] : vector<16x16x32xf32> to vector<16x32xf32>
    %c4_118 = arith.constant 4 : index
    %c0_119 = arith.constant 0 : index
    %c0_120 = arith.constant 0 : index
    %715 = vector.load %arg8[%c4_118, %c0_119, %c0_120] : memref<8x16x32xf32, #tpu.memory_space<vmem>>, vector<1x16x32xf32>
    %716 = vector.shape_cast %715 : vector<1x16x32xf32> to vector<16x32xf32>
    %717 = vector.shape_cast %714 : vector<16x32xf32> to vector<1x16x32xf32>
    tpu.vector_store %arg8[%c4_118, %c0_119, %c0_120], %717 {strides = array<i32>} : memref<8x16x32xf32, #tpu.memory_space<vmem>>, vector<1x16x32xf32>,
    %718 = vector.shape_cast %585 : vector<16x32xf32> to vector<1x16x32xf32>
    %c1_121 = arith.constant 1 : index
    %c0_122 = arith.constant 0 : index
    %c0_123 = arith.constant 0 : index
    %c0_124 = arith.constant 0 : index
    %719 = vector.load %arg7[%c1_121, %c0_122, %c0_123, %c0_124] : memref<4x16x16x32xf32, #tpu.memory_space<vmem>>, vector<1x16x16x32xf32>
    %720 = vector.shape_cast %719 : vector<1x16x16x32xf32> to vector<16x16x32xf32>
    %721 = vector.broadcast %718 : vector<1x16x32xf32> to vector<16x16x32xf32>
    %722 = arith.addf %721, %720 : vector<16x16x32xf32>
    %723 = arith.mulf %707, %722 : vector<16x16x32xf32>
    %cst_125 = arith.constant dense<0.000000e+00> : vector<16x32xf32>
    %724 = vector.multi_reduction <add>, %723, %cst_125 [1] : vector<16x16x32xf32> to vector<16x32xf32>
    %c5_126 = arith.constant 5 : index
    %c0_127 = arith.constant 0 : index
    %c0_128 = arith.constant 0 : index
    %725 = vector.load %arg8[%c5_126, %c0_127, %c0_128] : memref<8x16x32xf32, #tpu.memory_space<vmem>>, vector<1x16x32xf32>
    %726 = vector.shape_cast %725 : vector<1x16x32xf32> to vector<16x32xf32>
    %727 = vector.shape_cast %724 : vector<16x32xf32> to vector<1x16x32xf32>
    tpu.vector_store %arg8[%c5_126, %c0_127, %c0_128], %727 {strides = array<i32>} : memref<8x16x32xf32, #tpu.memory_space<vmem>>, vector<1x16x32xf32>,
    %728 = vector.shape_cast %619 : vector<16x32xf32> to vector<1x16x32xf32>
    %c2_129 = arith.constant 2 : index
    %c0_130 = arith.constant 0 : index
    %c0_131 = arith.constant 0 : index
    %c0_132 = arith.constant 0 : index
    %729 = vector.load %arg7[%c2_129, %c0_130, %c0_131, %c0_132] : memref<4x16x16x32xf32, #tpu.memory_space<vmem>>, vector<1x16x16x32xf32>
    %730 = vector.shape_cast %729 : vector<1x16x16x32xf32> to vector<16x16x32xf32>
    %731 = vector.broadcast %728 : vector<1x16x32xf32> to vector<16x16x32xf32>
    %732 = arith.addf %731, %730 : vector<16x16x32xf32>
    %733 = arith.mulf %707, %732 : vector<16x16x32xf32>
    %cst_133 = arith.constant dense<0.000000e+00> : vector<16x32xf32>
    %734 = vector.multi_reduction <add>, %733, %cst_133 [1] : vector<16x16x32xf32> to vector<16x32xf32>
    %c6_134 = arith.constant 6 : index
    %c0_135 = arith.constant 0 : index
    %c0_136 = arith.constant 0 : index
    %735 = vector.load %arg8[%c6_134, %c0_135, %c0_136] : memref<8x16x32xf32, #tpu.memory_space<vmem>>, vector<1x16x32xf32>
    %736 = vector.shape_cast %735 : vector<1x16x32xf32> to vector<16x32xf32>
    %737 = vector.shape_cast %734 : vector<16x32xf32> to vector<1x16x32xf32>
    tpu.vector_store %arg8[%c6_134, %c0_135, %c0_136], %737 {strides = array<i32>} : memref<8x16x32xf32, #tpu.memory_space<vmem>>, vector<1x16x32xf32>,
    %738 = vector.shape_cast %653 : vector<16x32xf32> to vector<1x16x32xf32>
    %c3_137 = arith.constant 3 : index
    %c0_138 = arith.constant 0 : index
    %c0_139 = arith.constant 0 : index
    %c0_140 = arith.constant 0 : index
    %739 = vector.load %arg7[%c3_137, %c0_138, %c0_139, %c0_140] : memref<4x16x16x32xf32, #tpu.memory_space<vmem>>, vector<1x16x16x32xf32>
    %740 = vector.shape_cast %739 : vector<1x16x16x32xf32> to vector<16x16x32xf32>
    %741 = vector.broadcast %738 : vector<1x16x32xf32> to vector<16x16x32xf32>
    %742 = arith.addf %741, %740 : vector<16x16x32xf32>
    %743 = arith.mulf %707, %742 : vector<16x16x32xf32>
    %cst_141 = arith.constant dense<0.000000e+00> : vector<16x32xf32>
    %744 = vector.multi_reduction <add>, %743, %cst_141 [1] : vector<16x16x32xf32> to vector<16x32xf32>
    %c7_142 = arith.constant 7 : index
    %c0_143 = arith.constant 0 : index
    %c0_144 = arith.constant 0 : index
    %745 = vector.load %arg8[%c7_142, %c0_143, %c0_144] : memref<8x16x32xf32, #tpu.memory_space<vmem>>, vector<1x16x32xf32>
    %746 = vector.shape_cast %745 : vector<1x16x32xf32> to vector<16x32xf32>
    %747 = vector.shape_cast %744 : vector<16x32xf32> to vector<1x16x32xf32>
    tpu.vector_store %arg8[%c7_142, %c0_143, %c0_144], %747 {strides = array<i32>} : memref<8x16x32xf32, #tpu.memory_space<vmem>>, vector<1x16x32xf32>,
    return
  }
  func.func @transform_0(%arg0: i32) -> (i32, i32, i32) {
    %c0_i32 = arith.constant 0 : i32
    %c0_i32_0 = arith.constant 0 : i32
    %c0_i32_1 = arith.constant 0 : i32
    return %c0_i32, %c0_i32_0, %arg0 : i32, i32, i32
  }
  func.func @transform_1(%arg0: i32) -> i32 {
    %c0_i32 = arith.constant 0 : i32
    %c0_i32_0 = arith.constant 0 : i32
    return %c0_i32 : i32
  }
  func.func @transform_2(%arg0: i32) -> i32 {
    %c0_i32 = arith.constant 0 : i32
    %c0_i32_0 = arith.constant 0 : i32
    return %c0_i32 : i32
  }
  func.func @transform_3(%arg0: i32) -> i32 {
    %c0_i32 = arith.constant 0 : i32
    %c0_i32_0 = arith.constant 0 : i32
    return %c0_i32 : i32
  }
  func.func @transform_4(%arg0: i32) -> (i32, i32, i32, i32) {
    %c0_i32 = arith.constant 0 : i32
    %c0_i32_0 = arith.constant 0 : i32
    %c0_i32_1 = arith.constant 0 : i32
    %c0_i32_2 = arith.constant 0 : i32
    %c0_i32_3 = arith.constant 0 : i32
    return %c0_i32, %c0_i32_0, %c0_i32_1, %c0_i32_2 : i32, i32, i32, i32
  }
  func.func @transform_5(%arg0: i32) -> (i32, i32, i32, i32) {
    %c0_i32 = arith.constant 0 : i32
    %c0_i32_0 = arith.constant 0 : i32
    %c0_i32_1 = arith.constant 0 : i32
    %c0_i32_2 = arith.constant 0 : i32
    %c0_i32_3 = arith.constant 0 : i32
    return %c0_i32, %c0_i32_0, %c0_i32_1, %c0_i32_2 : i32, i32, i32, i32
  }
  func.func @transform_6(%arg0: i32) -> (i32, i32, i32, i32) {
    %c0_i32 = arith.constant 0 : i32
    %c0_i32_0 = arith.constant 0 : i32
    %c0_i32_1 = arith.constant 0 : i32
    %c0_i32_2 = arith.constant 0 : i32
    %c0_i32_3 = arith.constant 0 : i32
    return %c0_i32, %c0_i32_0, %c0_i32_1, %c0_i32_2 : i32, i32, i32, i32
  }
  func.func @transform_7(%arg0: i32) -> (i32, i32, i32) {
    %c0_i32 = arith.constant 0 : i32
    %c0_i32_0 = arith.constant 0 : i32
    %c0_i32_1 = arith.constant 0 : i32
    return %c0_i32, %c0_i32_0, %arg0 : i32, i32, i32
  }
}

</mosaic_0001>

<llo_original>
// kernel: tpu_custom_call.1
$region0: #{tpu_custom_call.1}
  #allocation0 [shape = 'u32[]', space=smem, size = 0x4, offset = 0x4, fixed_abs, tag = 'smem constant byte address 0x4 - core index']
  #allocation1 [shape = 'u32[72,128]{1,0:T(1,128)}', space=vmem, size = 0x9000, scoped, tag = 'internal scratch']
  %s0 = inlined_call_operand.hbm [shape: f32[8,16,32], index: 0, kind: input, shape index: {}]
  %s1 = inlined_call_operand.hbm [shape: f32[128], index: 1, kind: input, shape index: {}]
  %s2 = inlined_call_operand.vmem [shape: f32[16], index: 2, kind: input, shape index: {}]
  %s3 = inlined_call_operand.vmem [shape: f32[6], index: 3, kind: input, shape index: {}]
  %s4 = inlined_call_operand.hbm [shape: f32[2,16,16,32], index: 4, kind: input, shape index: {}]
  %s5 = inlined_call_operand.hbm [shape: f32[2,16,16,32], index: 5, kind: input, shape index: {}]
  %s6 = inlined_call_operand.hbm [shape: f32[4,16,16,32], index: 6, kind: input, shape index: {}]
  %s7 = inlined_call_operand.hbm [shape: f32[8,16,32], index: 7, kind: output, shape index: {}]
  %s8 = sld [smem:[#allocation0]]
  $region66: #{tpu_custom_call.1} parent=0
    _
  %s10 = ssub.s32 1, %s8
  %s11 = scalar_select 0, %s10, %s8
  $region1: #{tpu_custom_call.1} parent=0
    #allocation2 [shape = 'u8[65536]{0}', space=vmem, size = 0x10000, scoped, tag = 'input window, operand 0, single buffered']
    #allocation3 [shape = 's32[1]{0}', space=sflag, size = 0x4, scoped, tag = 'scoped memory for tpu_custom_call.1']
    #allocation4 [shape = 's32[1]{0}', space=sflag, size = 0x4, scoped, tag = 'scoped memory for tpu_custom_call.1']
    #allocation5 [shape = 's32[1]{0}', space=sflag, size = 0x4, scoped, tag = 'scoped memory for tpu_custom_call.1']
    #allocation6 [shape = 's32[1]{0}', space=sflag, size = 0x4, scoped, tag = 'scoped memory for tpu_custom_call.1']
    #allocation7 [shape = 'u8[512]{0}', space=smem, size = 0x200, scoped, tag = 'input window, operand 1, single buffered']
    #allocation8 [shape = 'u8[512]{0}', space=smem, size = 0x200, scoped, tag = 'input window, operand 2, single buffered']
    #allocation9 [shape = 'u8[512]{0}', space=smem, size = 0x200, scoped, tag = 'input window, operand 3, single buffered']
    #allocation10 [shape = 's32[1]{0}', space=sflag, size = 0x4, scoped, tag = 'scoped memory for tpu_custom_call.1']
    #allocation11 [shape = 'u8[262144]{0}', space=vmem, size = 0x40000, scoped, tag = 'input window, operand 4, single buffered']
    #allocation12 [shape = 's32[1]{0}', space=sflag, size = 0x4, scoped, tag = 'scoped memory for tpu_custom_call.1']
    #allocation13 [shape = 'u8[262144]{0}', space=vmem, size = 0x40000, scoped, tag = 'input window, operand 5, single buffered']
    #allocation14 [shape = 'u8[524288]{0}', space=vmem, size = 0x80000, scoped, tag = 'input window, operand 6, single buffered']
    #allocation15 [shape = 's32[1]{0}', space=sflag, size = 0x4, scoped, tag = 'scoped memory for tpu_custom_call.1']
    #allocation16 [shape = 'u8[65536]{0}', space=vmem, size = 0x10000, scoped, tag = 'output window, operand 0, single buffered']
    %12 = vsyncpa [#allocation3], 0
    %13 = vsyncpa [#allocation5], 0
    %14 = vsyncpa [#allocation6], 0
    %15 = vsyncpa [#allocation10], 0
    %16 = vsyncpa [#allocation12], 0
    %17 = vsyncpa [#allocation15], 0
    %18 = vsyncpa [#allocation4], 0
    // Predicated region
    $region2: #{tpu_custom_call.1} parent=1 // pred_check
      _
    $region3: #{tpu_custom_call.1} parent=1 // pred_check_branch
      %20 = sbr.rel (0) target = $region5
    $region4: #{tpu_custom_call.1} parent=1 // pred_region
      %22 = vsyncadd [#allocation3], 0
      %s23 = sshll.u32 %s0, 4
      %s24 = int_to_ptr.hbm [resolvable:$true] %s23
      %s25 = sshll.u32 [#allocation2], 4
      %s26 = int_to_ptr.vmem [resolvable:$true] %s25
      %31 = dma.hbm_to_vmem [thread:$0]  %s24, 2048, %s26, [#allocation3], 128, 128, 8
    $region5: #{tpu_custom_call.1} parent=1 // pred_fallthru
      _
    // Predicated region
    $region6: #{tpu_custom_call.1} parent=1 // pred_check
      _
    $region7: #{tpu_custom_call.1} parent=1 // pred_check_branch
      %33 = sbr.rel (0) target = $region9
    $region8: #{tpu_custom_call.1} parent=1 // pred_region
      %35 = vsyncadd [#allocation5], 0
      %s37 = sshll.u32 %s1, 4
      %s38 = int_to_ptr.hbm [resolvable:$true] %s37
      %40 = dma.hbm_to_smem %s38, 16, [#allocation7], [#allocation5]
    $region9: #{tpu_custom_call.1} parent=1 // pred_fallthru
      _
    // Predicated region
    $region10: #{tpu_custom_call.1} parent=1 // pred_check
      _
    $region11: #{tpu_custom_call.1} parent=1 // pred_check_branch
      %42 = sbr.rel (0) target = $region13
    $region12: #{tpu_custom_call.1} parent=1 // pred_region
      %44 = vsyncadd [#allocation6], 0
      %s46 = sshll.u32 %s2, 4
      %s47 = int_to_ptr.vmem [resolvable:$true] %s46
      %49 = dma.vmem_to_smem %s47, 16, [#allocation8], [#allocation6]
    $region13: #{tpu_custom_call.1} parent=1 // pred_fallthru
      _
    // Predicated region
    $region14: #{tpu_custom_call.1} parent=1 // pred_check
      _
    $region15: #{tpu_custom_call.1} parent=1 // pred_check_branch
      %51 = sbr.rel (0) target = $region17
    $region16: #{tpu_custom_call.1} parent=1 // pred_region
      %53 = vsyncadd [#allocation10], 0
      %s55 = sshll.u32 %s3, 4
      %s56 = int_to_ptr.vmem [resolvable:$true] %s55
      %58 = dma.vmem_to_smem %s56, 16, [#allocation9], [#allocation10]
    $region17: #{tpu_custom_call.1} parent=1 // pred_fallthru
      _
    // Predicated region
    $region18: #{tpu_custom_call.1} parent=1 // pred_check
      _
    $region19: #{tpu_custom_call.1} parent=1 // pred_check_branch
      %60 = sbr.rel (0) target = $region21
    $region20: #{tpu_custom_call.1} parent=1 // pred_region
      %62 = vsyncadd [#allocation12], 0
      %s63 = sshll.u32 %s4, 4
      %s64 = int_to_ptr.hbm [resolvable:$true] %s63
      %s65 = sshll.u32 [#allocation11], 4
      %s66 = int_to_ptr.vmem [resolvable:$true] %s65
      %71 = dma.hbm_to_vmem [thread:$0]  %s64, 8192, %s66, [#allocation12], 128, 128, 8
    $region21: #{tpu_custom_call.1} parent=1 // pred_fallthru
      _
    // Predicated region
    $region22: #{tpu_custom_call.1} parent=1 // pred_check
      _
    $region23: #{tpu_custom_call.1} parent=1 // pred_check_branch
      %73 = sbr.rel (0) target = $region25
    $region24: #{tpu_custom_call.1} parent=1 // pred_region
      %75 = vsyncadd [#allocation12], 0
      %s76 = sshll.u32 %s5, 4
      %s77 = int_to_ptr.hbm [resolvable:$true] %s76
      %s78 = sshll.u32 [#allocation13], 4
      %s79 = int_to_ptr.vmem [resolvable:$true] %s78
      %84 = dma.hbm_to_vmem [thread:$0]  %s77, 8192, %s79, [#allocation12], 128, 128, 8
    $region25: #{tpu_custom_call.1} parent=1 // pred_fallthru
      _
    // Predicated region
    $region26: #{tpu_custom_call.1} parent=1 // pred_check
      _
    $region27: #{tpu_custom_call.1} parent=1 // pred_check_branch
      %86 = sbr.rel (0) target = $region29
    $region28: #{tpu_custom_call.1} parent=1 // pred_region
      %88 = vsyncadd [#allocation15], 0
      %s89 = sshll.u32 %s6, 4
      %s90 = int_to_ptr.hbm [resolvable:$true] %s89
      %s91 = sshll.u32 [#allocation14], 4
      %s92 = int_to_ptr.vmem [resolvable:$true] %s91
      %97 = dma.hbm_to_vmem [thread:$0]  %s90, 16384, %s92, [#allocation15], 128, 128, 8
    $region29: #{tpu_custom_call.1} parent=1 // pred_fallthru
      _
    // Predicated region
    $region30: #{tpu_custom_call.1} parent=1 // pred_check
      _
    $region31: #{tpu_custom_call.1} parent=1 // pred_check_branch
      %99 = sbr.rel (0) target = $region33
    $region32: #{tpu_custom_call.1} parent=1 // pred_region
      %101 = dma.done [#allocation3], 2048
    $region33: #{tpu_custom_call.1} parent=1 // pred_fallthru
      _
    // Predicated region
    $region34: #{tpu_custom_call.1} parent=1 // pred_check
      _
    $region35: #{tpu_custom_call.1} parent=1 // pred_check_branch
      %103 = sbr.rel (0) target = $region37
    $region36: #{tpu_custom_call.1} parent=1 // pred_region
      %105 = dma.done [#allocation5], 16
    $region37: #{tpu_custom_call.1} parent=1 // pred_fallthru
      _
    // Predicated region
    $region38: #{tpu_custom_call.1} parent=1 // pred_check
      _
    $region39: #{tpu_custom_call.1} parent=1 // pred_check_branch
      %107 = sbr.rel (0) target = $region41
    $region40: #{tpu_custom_call.1} parent=1 // pred_region
      %109 = dma.done [#allocation6], 16
    $region41: #{tpu_custom_call.1} parent=1 // pred_fallthru
      _
    // Predicated region
    $region42: #{tpu_custom_call.1} parent=1 // pred_check
      _
    $region43: #{tpu_custom_call.1} parent=1 // pred_check_branch
      %111 = sbr.rel (0) target = $region45
    $region44: #{tpu_custom_call.1} parent=1 // pred_region
      %113 = dma.done [#allocation10], 16
    $region45: #{tpu_custom_call.1} parent=1 // pred_fallthru
      _
    // Predicated region
    $region46: #{tpu_custom_call.1} parent=1 // pred_check
      _
    $region47: #{tpu_custom_call.1} parent=1 // pred_check_branch
      %115 = sbr.rel (0) target = $region49
    $region48: #{tpu_custom_call.1} parent=1 // pred_region
      %117 = dma.done [#allocation12], 8192
    $region49: #{tpu_custom_call.1} parent=1 // pred_fallthru
      _
    // Predicated region
    $region50: #{tpu_custom_call.1} parent=1 // pred_check
      _
    $region51: #{tpu_custom_call.1} parent=1 // pred_check_branch
      %119 = sbr.rel (0) target = $region53
    $region52: #{tpu_custom_call.1} parent=1 // pred_region
      %121 = dma.done [#allocation12], 8192
    $region53: #{tpu_custom_call.1} parent=1 // pred_fallthru
      _
    // Predicated region
    $region54: #{tpu_custom_call.1} parent=1 // pred_check
      _
    $region55: #{tpu_custom_call.1} parent=1 // pred_check_branch
      %123 = sbr.rel (0) target = $region57
    $region56: #{tpu_custom_call.1} parent=1 // pred_region
      %125 = dma.done [#allocation15], 16384
    $region57: #{tpu_custom_call.1} parent=1 // pred_fallthru
      _
    %126 = sfence
    %v127 = vld [vmem:[#allocation2] sm:$0xff]
    %v128 = vld [vmem:[#allocation2 + $0x8] sm:$0xff]
    %s129 = scalar_lea.vmem [#allocation2], 16
    %v130 = vld [vmem:[%s129] sm:$0xff]
    %v131 = vld [vmem:[%s129 + $0x8] sm:$0xff]
    %s132 = scalar_lea.vmem [#allocation2], 32
    %v133 = vld [vmem:[%s132] sm:$0xff]
    %v134 = vld [vmem:[%s132 + $0x8] sm:$0xff]
    %s135 = scalar_lea.vmem [#allocation2], 48
    %v136 = vld [vmem:[%s135] sm:$0xff]
    %v137 = vld [vmem:[%s135 + $0x8] sm:$0xff]
    %s138 = scalar_lea.vmem [#allocation2], 64
    %v139 = vld [vmem:[%s138] sm:$0xff]
    %v140 = vld [vmem:[%s138 + $0x8] sm:$0xff]
    %s141 = scalar_lea.vmem [#allocation2], 80
    %v142 = vld [vmem:[%s141] sm:$0xff]
    %v143 = vld [vmem:[%s141 + $0x8] sm:$0xff]
    %s144 = scalar_lea.vmem [#allocation2], 96
    %v145 = vld [vmem:[%s144] sm:$0xff]
    %v146 = vld [vmem:[%s144 + $0x8] sm:$0xff]
    %s147 = scalar_lea.vmem [#allocation2], 112
    %v148 = vld [vmem:[%s147] sm:$0xff]
    %v149 = vld [vmem:[%s147 + $0x8] sm:$0xff]
    %s150 = sld [smem:[#allocation7]]
    %v151 = vstv %s150
    %v152 = vmul.f32 %v127, %v151
    %v153 = vmul.f32 %v128, %v151
    %s154 = sld [smem:[#allocation7 + $0x1]]
    %v155 = vstv %s154
    %v156 = vmul.f32 %v130, %v155
    %v157 = vmul.f32 %v131, %v155
    %v158 = vadd.f32 %v152, %v156
    %v159 = vadd.f32 %v153, %v157
    %s160 = sld [smem:[#allocation7 + $0x2]]
    %v161 = vstv %s160
    %v162 = vmul.f32 %v133, %v161
    %v163 = vmul.f32 %v134, %v161
    %v164 = vadd.f32 %v158, %v162
    %v165 = vadd.f32 %v159, %v163
    %s166 = sld [smem:[#allocation7 + $0x3]]
    %v167 = vstv %s166
    %v168 = vmul.f32 %v136, %v167
    %v169 = vmul.f32 %v137, %v167
    %v170 = vadd.f32 %v164, %v168
    %v171 = vadd.f32 %v165, %v169
    %s172 = sld [smem:[#allocation7 + $0x4]]
    %v173 = vstv %s172
    %v174 = vmul.f32 %v139, %v173
    %v175 = vmul.f32 %v140, %v173
    %v176 = vadd.f32 %v170, %v174
    %v177 = vadd.f32 %v171, %v175
    %s178 = sld [smem:[#allocation7 + $0x5]]
    %v179 = vstv %s178
    %v180 = vmul.f32 %v142, %v179
    %v181 = vmul.f32 %v143, %v179
    %v182 = vadd.f32 %v176, %v180
    %v183 = vadd.f32 %v177, %v181
    %s184 = sld [smem:[#allocation7 + $0x6]]
    %v185 = vstv %s184
    %v186 = vmul.f32 %v145, %v185
    %v187 = vmul.f32 %v146, %v185
    %v188 = vadd.f32 %v182, %v186
    %v189 = vadd.f32 %v183, %v187
    %s190 = sld [smem:[#allocation7 + $0x7]]
    %v191 = vstv %s190
    %v192 = vmul.f32 %v148, %v191
    %v193 = vmul.f32 %v149, %v191
    %v194 = vadd.f32 %v188, %v192
    %v195 = vadd.f32 %v189, %v193
    %s196 = sld [smem:[#allocation8]]
    %v197 = vstv %s196
    %v198 = vadd.f32 %v194, %v197
    %v199 = vadd.f32 %v195, %v197
    %s200 = sld [smem:[#allocation7 + $0x8]]
    %v201 = vstv %s200
    %v202 = vmul.f32 %v127, %v201
    %v203 = vmul.f32 %v128, %v201
    %s204 = sld [smem:[#allocation7 + $0x9]]
    %v205 = vstv %s204
    %v206 = vmul.f32 %v130, %v205
    %v207 = vmul.f32 %v131, %v205
    %v208 = vadd.f32 %v202, %v206
    %v209 = vadd.f32 %v203, %v207
    %s210 = sld [smem:[#allocation7 + $0xa]]
    %v211 = vstv %s210
    %v212 = vmul.f32 %v133, %v211
    %v213 = vmul.f32 %v134, %v211
    %v214 = vadd.f32 %v208, %v212
    %v215 = vadd.f32 %v209, %v213
    %s216 = sld [smem:[#allocation7 + $0xb]]
    %v217 = vstv %s216
    %v218 = vmul.f32 %v136, %v217
    %v219 = vmul.f32 %v137, %v217
    %v220 = vadd.f32 %v214, %v218
    %v221 = vadd.f32 %v215, %v219
    %s222 = sld [smem:[#allocation7 + $0xc]]
    %v223 = vstv %s222
    %v224 = vmul.f32 %v139, %v223
    %v225 = vmul.f32 %v140, %v223
    %v226 = vadd.f32 %v220, %v224
    %v227 = vadd.f32 %v221, %v225
    %s228 = sld [smem:[#allocation7 + $0xd]]
    %v229 = vstv %s228
    %v230 = vmul.f32 %v142, %v229
    %v231 = vmul.f32 %v143, %v229
    %v232 = vadd.f32 %v226, %v230
    %v233 = vadd.f32 %v227, %v231
    %s234 = sld [smem:[#allocation7 + $0xe]]
    %v235 = vstv %s234
    %v236 = vmul.f32 %v145, %v235
    %v237 = vmul.f32 %v146, %v235
    %v238 = vadd.f32 %v232, %v236
    %v239 = vadd.f32 %v233, %v237
    %s240 = sld [smem:[#allocation7 + $0xf]]
    %v241 = vstv %s240
    %v242 = vmul.f32 %v148, %v241
    %v243 = vmul.f32 %v149, %v241
    %v244 = vadd.f32 %v238, %v242
    %v245 = vadd.f32 %v239, %v243
    %s246 = sld [smem:[#allocation8 + $0x1]]
    %v247 = vstv %s246
    %v248 = vadd.f32 %v244, %v247
    %v249 = vadd.f32 %v245, %v247
    %s250 = sld [smem:[#allocation7 + $0x10]]
    %v251 = vstv %s250
    %v252 = vmul.f32 %v127, %v251
    %v253 = vmul.f32 %v128, %v251
    %s254 = sld [smem:[#allocation7 + $0x11]]
    %v255 = vstv %s254
    %v256 = vmul.f32 %v130, %v255
    %v257 = vmul.f32 %v131, %v255
    %v258 = vadd.f32 %v252, %v256
    %v259 = vadd.f32 %v253, %v257
    %s260 = sld [smem:[#allocation7 + $0x12]]
    %v261 = vstv %s260
    %v262 = vmul.f32 %v133, %v261
    %v263 = vmul.f32 %v134, %v261
    %v264 = vadd.f32 %v258, %v262
    %v265 = vadd.f32 %v259, %v263
    %s266 = sld [smem:[#allocation7 + $0x13]]
    %v267 = vstv %s266
    %v268 = vmul.f32 %v136, %v267
    %v269 = vmul.f32 %v137, %v267
    %v270 = vadd.f32 %v264, %v268
    %v271 = vadd.f32 %v265, %v269
    %s272 = sld [smem:[#allocation7 + $0x14]]
    %v273 = vstv %s272
    %v274 = vmul.f32 %v139, %v273
    %v275 = vmul.f32 %v140, %v273
    %v276 = vadd.f32 %v270, %v274
    %v277 = vadd.f32 %v271, %v275
    %s278 = sld [smem:[#allocation7 + $0x15]]
    %v279 = vstv %s278
    %v280 = vmul.f32 %v142, %v279
    %v281 = vmul.f32 %v143, %v279
    %v282 = vadd.f32 %v276, %v280
    %v283 = vadd.f32 %v277, %v281
    %s284 = sld [smem:[#allocation7 + $0x16]]
    %v285 = vstv %s284
    %v286 = vmul.f32 %v145, %v285
    %v287 = vmul.f32 %v146, %v285
    %v288 = vadd.f32 %v282, %v286
    %v289 = vadd.f32 %v283, %v287
    %s290 = sld [smem:[#allocation7 + $0x17]]
    %v291 = vstv %s290
    %v292 = vmul.f32 %v148, %v291
    %v293 = vmul.f32 %v149, %v291
    %v294 = vadd.f32 %v288, %v292
    %v295 = vadd.f32 %v289, %v293
    %s296 = sld [smem:[#allocation8 + $0x2]]
    %v297 = vstv %s296
    %v298 = vadd.f32 %v294, %v297
    %v299 = vadd.f32 %v295, %v297
    %s300 = sld [smem:[#allocation7 + $0x18]]
    %v301 = vstv %s300
    %v302 = vmul.f32 %v127, %v301
    %v303 = vmul.f32 %v128, %v301
    %s304 = sld [smem:[#allocation7 + $0x19]]
    %v305 = vstv %s304
    %v306 = vmul.f32 %v130, %v305
    %v307 = vmul.f32 %v131, %v305
    %v308 = vadd.f32 %v302, %v306
    %v309 = vadd.f32 %v303, %v307
    %s310 = sld [smem:[#allocation7 + $0x1a]]
    %v311 = vstv %s310
    %v312 = vmul.f32 %v133, %v311
    %v313 = vmul.f32 %v134, %v311
    %v314 = vadd.f32 %v308, %v312
    %v315 = vadd.f32 %v309, %v313
    %s316 = sld [smem:[#allocation7 + $0x1b]]
    %v317 = vstv %s316
    %v318 = vmul.f32 %v136, %v317
    %v319 = vmul.f32 %v137, %v317
    %v320 = vadd.f32 %v314, %v318
    %v321 = vadd.f32 %v315, %v319
    %s322 = sld [smem:[#allocation7 + $0x1c]]
    %v323 = vstv %s322
    %v324 = vmul.f32 %v139, %v323
    %v325 = vmul.f32 %v140, %v323
    %v326 = vadd.f32 %v320, %v324
    %v327 = vadd.f32 %v321, %v325
    %s328 = sld [smem:[#allocation7 + $0x1d]]
    %v329 = vstv %s328
    %v330 = vmul.f32 %v142, %v329
    %v331 = vmul.f32 %v143, %v329
    %v332 = vadd.f32 %v326, %v330
    %v333 = vadd.f32 %v327, %v331
    %s334 = sld [smem:[#allocation7 + $0x1e]]
    %v335 = vstv %s334
    %v336 = vmul.f32 %v145, %v335
    %v337 = vmul.f32 %v146, %v335
    %v338 = vadd.f32 %v332, %v336
    %v339 = vadd.f32 %v333, %v337
    %s340 = sld [smem:[#allocation7 + $0x1f]]
    %v341 = vstv %s340
    %v342 = vmul.f32 %v148, %v341
    %v343 = vmul.f32 %v149, %v341
    %v344 = vadd.f32 %v338, %v342
    %v345 = vadd.f32 %v339, %v343
    %s346 = sld [smem:[#allocation8 + $0x3]]
    %v347 = vstv %s346
    %v348 = vadd.f32 %v344, %v347
    %v349 = vadd.f32 %v345, %v347
    %s350 = sld [smem:[#allocation7 + $0x20]]
    %v351 = vstv %s350
    %v352 = vmul.f32 %v127, %v351
    %v353 = vmul.f32 %v128, %v351
    %s354 = sld [smem:[#allocation7 + $0x21]]
    %v355 = vstv %s354
    %v356 = vmul.f32 %v130, %v355
    %v357 = vmul.f32 %v131, %v355
    %v358 = vadd.f32 %v352, %v356
    %v359 = vadd.f32 %v353, %v357
    %s360 = sld [smem:[#allocation7 + $0x22]]
    %v361 = vstv %s360
    %v362 = vmul.f32 %v133, %v361
    %v363 = vmul.f32 %v134, %v361
    %v364 = vadd.f32 %v358, %v362
    %v365 = vadd.f32 %v359, %v363
    %s366 = sld [smem:[#allocation7 + $0x23]]
    %v367 = vstv %s366
    %v368 = vmul.f32 %v136, %v367
    %v369 = vmul.f32 %v137, %v367
    %v370 = vadd.f32 %v364, %v368
    %v371 = vadd.f32 %v365, %v369
    %s372 = sld [smem:[#allocation7 + $0x24]]
    %v373 = vstv %s372
    %v374 = vmul.f32 %v139, %v373
    %v375 = vmul.f32 %v140, %v373
    %v376 = vadd.f32 %v370, %v374
    %v377 = vadd.f32 %v371, %v375
    %s378 = sld [smem:[#allocation7 + $0x25]]
    %v379 = vstv %s378
    %v380 = vmul.f32 %v142, %v379
    %v381 = vmul.f32 %v143, %v379
    %v382 = vadd.f32 %v376, %v380
    %v383 = vadd.f32 %v377, %v381
    %s384 = sld [smem:[#allocation7 + $0x26]]
    %v385 = vstv %s384
    %v386 = vmul.f32 %v145, %v385
    %v387 = vmul.f32 %v146, %v385
    %v388 = vadd.f32 %v382, %v386
    %v389 = vadd.f32 %v383, %v387
    %s390 = sld [smem:[#allocation7 + $0x27]]
    %v391 = vstv %s390
    %v392 = vmul.f32 %v148, %v391
    %v393 = vmul.f32 %v149, %v391
    %v394 = vadd.f32 %v388, %v392
    %v395 = vadd.f32 %v389, %v393
    %s396 = sld [smem:[#allocation8 + $0x4]]
    %v397 = vstv %s396
    %v398 = vadd.f32 %v394, %v397
    %v399 = vadd.f32 %v395, %v397
    %s400 = sld [smem:[#allocation7 + $0x28]]
    %v401 = vstv %s400
    %v402 = vmul.f32 %v127, %v401
    %v403 = vmul.f32 %v128, %v401
    %s404 = sld [smem:[#allocation7 + $0x29]]
    %v405 = vstv %s404
    %v406 = vmul.f32 %v130, %v405
    %v407 = vmul.f32 %v131, %v405
    %v408 = vadd.f32 %v402, %v406
    %v409 = vadd.f32 %v403, %v407
    %s410 = sld [smem:[#allocation7 + $0x2a]]
    %v411 = vstv %s410
    %v412 = vmul.f32 %v133, %v411
    %v413 = vmul.f32 %v134, %v411
    %v414 = vadd.f32 %v408, %v412
    %v415 = vadd.f32 %v409, %v413
    %s416 = sld [smem:[#allocation7 + $0x2b]]
    %v417 = vstv %s416
    %v418 = vmul.f32 %v136, %v417
    %v419 = vmul.f32 %v137, %v417
    %v420 = vadd.f32 %v414, %v418
    %v421 = vadd.f32 %v415, %v419
    %s422 = sld [smem:[#allocation7 + $0x2c]]
    %v423 = vstv %s422
    %v424 = vmul.f32 %v139, %v423
    %v425 = vmul.f32 %v140, %v423
    %v426 = vadd.f32 %v420, %v424
    %v427 = vadd.f32 %v421, %v425
    %s428 = sld [smem:[#allocation7 + $0x2d]]
    %v429 = vstv %s428
    %v430 = vmul.f32 %v142, %v429
    %v431 = vmul.f32 %v143, %v429
    %v432 = vadd.f32 %v426, %v430
    %v433 = vadd.f32 %v427, %v431
    %s434 = sld [smem:[#allocation7 + $0x2e]]
    %v435 = vstv %s434
    %v436 = vmul.f32 %v145, %v435
    %v437 = vmul.f32 %v146, %v435
    %v438 = vadd.f32 %v432, %v436
    %v439 = vadd.f32 %v433, %v437
    %s440 = sld [smem:[#allocation7 + $0x2f]]
    %v441 = vstv %s440
    %v442 = vmul.f32 %v148, %v441
    %v443 = vmul.f32 %v149, %v441
    %v444 = vadd.f32 %v438, %v442
    %v445 = vadd.f32 %v439, %v443
    %s446 = sld [smem:[#allocation8 + $0x5]]
    %v447 = vstv %s446
    %v448 = vadd.f32 %v444, %v447
    %v449 = vadd.f32 %v445, %v447
    %s450 = sld [smem:[#allocation7 + $0x30]]
    %v451 = vstv %s450
    %v452 = vmul.f32 %v127, %v451
    %v453 = vmul.f32 %v128, %v451
    %s454 = sld [smem:[#allocation7 + $0x31]]
    %v455 = vstv %s454
    %v456 = vmul.f32 %v130, %v455
    %v457 = vmul.f32 %v131, %v455
    %v458 = vadd.f32 %v452, %v456
    %v459 = vadd.f32 %v453, %v457
    %s460 = sld [smem:[#allocation7 + $0x32]]
    %v461 = vstv %s460
    %v462 = vmul.f32 %v133, %v461
    %v463 = vmul.f32 %v134, %v461
    %v464 = vadd.f32 %v458, %v462
    %v465 = vadd.f32 %v459, %v463
    %s466 = sld [smem:[#allocation7 + $0x33]]
    %v467 = vstv %s466
    %v468 = vmul.f32 %v136, %v467
    %v469 = vmul.f32 %v137, %v467
    %v470 = vadd.f32 %v464, %v468
    %v471 = vadd.f32 %v465, %v469
    %s472 = sld [smem:[#allocation7 + $0x34]]
    %v473 = vstv %s472
    %v474 = vmul.f32 %v139, %v473
    %v475 = vmul.f32 %v140, %v473
    %v476 = vadd.f32 %v470, %v474
    %v477 = vadd.f32 %v471, %v475
    %s478 = sld [smem:[#allocation7 + $0x35]]
    %v479 = vstv %s478
    %v480 = vmul.f32 %v142, %v479
    %v481 = vmul.f32 %v143, %v479
    %v482 = vadd.f32 %v476, %v480
    %v483 = vadd.f32 %v477, %v481
    %s484 = sld [smem:[#allocation7 + $0x36]]
    %v485 = vstv %s484
    %v486 = vmul.f32 %v145, %v485
    %v487 = vmul.f32 %v146, %v485
    %v488 = vadd.f32 %v482, %v486
    %v489 = vadd.f32 %v483, %v487
    %s490 = sld [smem:[#allocation7 + $0x37]]
    %v491 = vstv %s490
    %v492 = vmul.f32 %v148, %v491
    %v493 = vmul.f32 %v149, %v491
    %v494 = vadd.f32 %v488, %v492
    %v495 = vadd.f32 %v489, %v493
    %s496 = sld [smem:[#allocation8 + $0x6]]
    %v497 = vstv %s496
    %v498 = vadd.f32 %v494, %v497
    %v499 = vadd.f32 %v495, %v497
    %s500 = sld [smem:[#allocation7 + $0x38]]
    %v501 = vstv %s500
    %v502 = vmul.f32 %v127, %v501
    %v503 = vmul.f32 %v128, %v501
    %s504 = sld [smem:[#allocation7 + $0x39]]
    %v505 = vstv %s504
    %v506 = vmul.f32 %v130, %v505
    %v507 = vmul.f32 %v131, %v505
    %v508 = vadd.f32 %v502, %v506
    %v509 = vadd.f32 %v503, %v507
    %s510 = sld [smem:[#allocation7 + $0x3a]]
    %v511 = vstv %s510
    %v512 = vmul.f32 %v133, %v511
    %v513 = vmul.f32 %v134, %v511
    %v514 = vadd.f32 %v508, %v512
    %v515 = vadd.f32 %v509, %v513
    %s516 = sld [smem:[#allocation7 + $0x3b]]
    %v517 = vstv %s516
    %v518 = vmul.f32 %v136, %v517
    %v519 = vmul.f32 %v137, %v517
    %v520 = vadd.f32 %v514, %v518
    %v521 = vadd.f32 %v515, %v519
    %s522 = sld [smem:[#allocation7 + $0x3c]]
    %v523 = vstv %s522
    %v524 = vmul.f32 %v139, %v523
    %v525 = vmul.f32 %v140, %v523
    %v526 = vadd.f32 %v520, %v524
    %v527 = vadd.f32 %v521, %v525
    %s528 = sld [smem:[#allocation7 + $0x3d]]
    %v529 = vstv %s528
    %v530 = vmul.f32 %v142, %v529
    %v531 = vmul.f32 %v143, %v529
    %v532 = vadd.f32 %v526, %v530
    %v533 = vadd.f32 %v527, %v531
    %s534 = sld [smem:[#allocation7 + $0x3e]]
    %v535 = vstv %s534
    %v536 = vmul.f32 %v145, %v535
    %v537 = vmul.f32 %v146, %v535
    %v538 = vadd.f32 %v532, %v536
    %v539 = vadd.f32 %v533, %v537
    %s540 = sld [smem:[#allocation7 + $0x3f]]
    %v541 = vstv %s540
    %v542 = vmul.f32 %v148, %v541
    %v543 = vmul.f32 %v149, %v541
    %v544 = vadd.f32 %v538, %v542
    %v545 = vadd.f32 %v539, %v543
    %s546 = sld [smem:[#allocation8 + $0x7]]
    %v547 = vstv %s546
    %v548 = vadd.f32 %v544, %v547
    %v549 = vadd.f32 %v545, %v547
    %s550 = sld [smem:[#allocation9]]
    %s551 = sld [smem:[#allocation9 + $0x2]]
    %s552 = sld [smem:[#allocation9 + $0x4]]
    %v553 = vstv %s550
    %v554 = vmul.f32 %v198, %v553
    %v555 = vmul.f32 %v199, %v553
    %v556 = vld [vmem:[#allocation11] sm:$0xff]
    %v557 = vld [vmem:[#allocation11 + $0x8] sm:$0xff]
    %v558 = vld [vmem:[#allocation11 + $0x10] sm:$0xff]
    %v559 = vld [vmem:[#allocation11 + $0x18] sm:$0xff]
    %v560 = vld [vmem:[#allocation11 + $0x20] sm:$0xff]
    %v561 = vld [vmem:[#allocation11 + $0x28] sm:$0xff]
    %v562 = vld [vmem:[#allocation11 + $0x30] sm:$0xff]
    %v563 = vld [vmem:[#allocation11 + $0x38] sm:$0xff]
    %v564 = vld [vmem:[#allocation11 + $0x40] sm:$0xff]
    %v565 = vld [vmem:[#allocation11 + $0x48] sm:$0xff]
    %v566 = vld [vmem:[#allocation11 + $0x50] sm:$0xff]
    %v567 = vld [vmem:[#allocation11 + $0x58] sm:$0xff]
    %v568 = vld [vmem:[#allocation11 + $0x60] sm:$0xff]
    %v569 = vld [vmem:[#allocation11 + $0x68] sm:$0xff]
    %v570 = vld [vmem:[#allocation11 + $0x70] sm:$0xff]
    %v571 = vld [vmem:[#allocation11 + $0x78] sm:$0xff]
    %v572 = vld [vmem:[#allocation11 + $0x80] sm:$0xff]
    %v573 = vld [vmem:[#allocation11 + $0x88] sm:$0xff]
    %v574 = vld [vmem:[#allocation11 + $0x90] sm:$0xff]
    %v575 = vld [vmem:[#allocation11 + $0x98] sm:$0xff]
    %v576 = vld [vmem:[#allocation11 + $0xa0] sm:$0xff]
    %v577 = vld [vmem:[#allocation11 + $0xa8] sm:$0xff]
    %v578 = vld [vmem:[#allocation11 + $0xb0] sm:$0xff]
    %v579 = vld [vmem:[#allocation11 + $0xb8] sm:$0xff]
    %v580 = vld [vmem:[#allocation11 + $0xc0] sm:$0xff]
    %v581 = vld [vmem:[#allocation11 + $0xc8] sm:$0xff]
    %v582 = vld [vmem:[#allocation11 + $0xd0] sm:$0xff]
    %v583 = vld [vmem:[#allocation11 + $0xd8] sm:$0xff]
    %v584 = vld [vmem:[#allocation11 + $0xe0] sm:$0xff]
    %v585 = vld [vmem:[#allocation11 + $0xe8] sm:$0xff]
    %v586 = vld [vmem:[#allocation11 + $0xf0] sm:$0xff]
    %v587 = vld [vmem:[#allocation11 + $0xf8] sm:$0xff]
    %v588 = vstv %s551
    %v589 = vmul.f32 %v556, %v588
    %v590 = vmul.f32 %v557, %v588
    %v591 = vmul.f32 %v558, %v588
    %v592 = vmul.f32 %v559, %v588
    %v593 = vmul.f32 %v560, %v588
    %v594 = vmul.f32 %v561, %v588
    %v595 = vmul.f32 %v562, %v588
    %v596 = vmul.f32 %v563, %v588
    %v597 = vmul.f32 %v564, %v588
    %v598 = vmul.f32 %v565, %v588
    %v599 = vmul.f32 %v566, %v588
    %v600 = vmul.f32 %v567, %v588
    %v601 = vmul.f32 %v568, %v588
    %v602 = vmul.f32 %v569, %v588
    %v603 = vmul.f32 %v570, %v588
    %v604 = vmul.f32 %v571, %v588
    %v605 = vmul.f32 %v572, %v588
    %v606 = vmul.f32 %v573, %v588
    %v607 = vmul.f32 %v574, %v588
    %v608 = vmul.f32 %v575, %v588
    %v609 = vmul.f32 %v576, %v588
    %v610 = vmul.f32 %v577, %v588
    %v611 = vmul.f32 %v578, %v588
    %v612 = vmul.f32 %v579, %v588
    %v613 = vmul.f32 %v580, %v588
    %v614 = vmul.f32 %v581, %v588
    %v615 = vmul.f32 %v582, %v588
    %v616 = vmul.f32 %v583, %v588
    %v617 = vmul.f32 %v584, %v588
    %v618 = vmul.f32 %v585, %v588
    %v619 = vmul.f32 %v586, %v588
    %v620 = vmul.f32 %v587, %v588
    %v621 = vadd.f32 %v554, %v589
    %v622 = vadd.f32 %v555, %v590
    %v623 = vadd.f32 %v554, %v591
    %v624 = vadd.f32 %v555, %v592
    %v625 = vadd.f32 %v554, %v593
    %v626 = vadd.f32 %v555, %v594
    %v627 = vadd.f32 %v554, %v595
    %v628 = vadd.f32 %v555, %v596
    %v629 = vadd.f32 %v554, %v597
    %v630 = vadd.f32 %v555, %v598
    %v631 = vadd.f32 %v554, %v599
    %v632 = vadd.f32 %v555, %v600
    %v633 = vadd.f32 %v554, %v601
    %v634 = vadd.f32 %v555, %v602
    %v635 = vadd.f32 %v554, %v603
    %v636 = vadd.f32 %v555, %v604
    %v637 = vadd.f32 %v554, %v605
    %v638 = vadd.f32 %v555, %v606
    %v639 = vadd.f32 %v554, %v607
    %v640 = vadd.f32 %v555, %v608
    %v641 = vadd.f32 %v554, %v609
    %v642 = vadd.f32 %v555, %v610
    %v643 = vadd.f32 %v554, %v611
    %v644 = vadd.f32 %v555, %v612
    %v645 = vadd.f32 %v554, %v613
    %v646 = vadd.f32 %v555, %v614
    %v647 = vadd.f32 %v554, %v615
    %v648 = vadd.f32 %v555, %v616
    %v649 = vadd.f32 %v554, %v617
    %v650 = vadd.f32 %v555, %v618
    %v651 = vadd.f32 %v554, %v619
    %v652 = vadd.f32 %v555, %v620
    %v655 = vrot.slane %v298, 1
    %v656 = vrot.slane %v298, 2
    %v657 = vrot.slane %v298, 3
    %v658 = vrot.slane %v298, 4
    %v659 = vrot.slane %v298, 5
    %v660 = vrot.slane %v298, 6
    %v661 = vrot.slane %v298, 7
    %v662 = vrot.slane %v299, 1
    %v663 = vrot.slane %v299, 2
    %v664 = vrot.slane %v299, 3
    %v665 = vrot.slane %v299, 4
    %v666 = vrot.slane %v299, 5
    %v667 = vrot.slane %v299, 6
    %v668 = vrot.slane %v299, 7
    %v669 = vperm.slane %v298, 0
    %v670 = vperm.slane %v655, 0
    %v671 = vperm.slane %v656, 0
    %v672 = vperm.slane %v657, 0
    %v673 = vperm.slane %v658, 0
    %v674 = vperm.slane %v659, 0
    %v675 = vperm.slane %v660, 0
    %v676 = vperm.slane %v661, 0
    %v677 = vperm.slane %v299, 0
    %v678 = vperm.slane %v662, 0
    %v679 = vperm.slane %v663, 0
    %v680 = vperm.slane %v664, 0
    %v681 = vperm.slane %v665, 0
    %v682 = vperm.slane %v666, 0
    %v683 = vperm.slane %v667, 0
    %v684 = vperm.slane %v668, 0
    %v701 = vmul.f32 %v669, %v621
    %v702 = vmul.f32 %v669, %v622
    %v703 = vmul.f32 %v670, %v623
    %v704 = vmul.f32 %v670, %v624
    %v705 = vmul.f32 %v671, %v625
    %v706 = vmul.f32 %v671, %v626
    %v707 = vmul.f32 %v672, %v627
    %v708 = vmul.f32 %v672, %v628
    %v709 = vmul.f32 %v673, %v629
    %v710 = vmul.f32 %v673, %v630
    %v711 = vmul.f32 %v674, %v631
    %v712 = vmul.f32 %v674, %v632
    %v713 = vmul.f32 %v675, %v633
    %v714 = vmul.f32 %v675, %v634
    %v715 = vmul.f32 %v676, %v635
    %v716 = vmul.f32 %v676, %v636
    %v717 = vmul.f32 %v677, %v637
    %v718 = vmul.f32 %v677, %v638
    %v719 = vmul.f32 %v678, %v639
    %v720 = vmul.f32 %v678, %v640
    %v721 = vmul.f32 %v679, %v641
    %v722 = vmul.f32 %v679, %v642
    %v723 = vmul.f32 %v680, %v643
    %v724 = vmul.f32 %v680, %v644
    %v725 = vmul.f32 %v681, %v645
    %v726 = vmul.f32 %v681, %v646
    %v727 = vmul.f32 %v682, %v647
    %v728 = vmul.f32 %v682, %v648
    %v729 = vmul.f32 %v683, %v649
    %v730 = vmul.f32 %v683, %v650
    %v731 = vmul.f32 %v684, %v651
    %v732 = vmul.f32 %v684, %v652
    %v733 = vstv %s552
    %v734 = vmul.f32 %v198, %v733
    %v735 = vmul.f32 %v199, %v733
    %v736 = vld [vmem:[#allocation13] sm:$0xff]
    %v737 = vld [vmem:[#allocation13 + $0x8] sm:$0xff]
    %v738 = vld [vmem:[#allocation13 + $0x10] sm:$0xff]
    %v739 = vld [vmem:[#allocation13 + $0x18] sm:$0xff]
    %v740 = vld [vmem:[#allocation13 + $0x20] sm:$0xff]
    %v741 = vld [vmem:[#allocation13 + $0x28] sm:$0xff]
    %v742 = vld [vmem:[#allocation13 + $0x30] sm:$0xff]
    %v743 = vld [vmem:[#allocation13 + $0x38] sm:$0xff]
    %v744 = vld [vmem:[#allocation13 + $0x40] sm:$0xff]
    %v745 = vld [vmem:[#allocation13 + $0x48] sm:$0xff]
    %v746 = vld [vmem:[#allocation13 + $0x50] sm:$0xff]
    %v747 = vld [vmem:[#allocation13 + $0x58] sm:$0xff]
    %v748 = vld [vmem:[#allocation13 + $0x60] sm:$0xff]
    %v749 = vld [vmem:[#allocation13 + $0x68] sm:$0xff]
    %v750 = vld [vmem:[#allocation13 + $0x70] sm:$0xff]
    %v751 = vld [vmem:[#allocation13 + $0x78] sm:$0xff]
    %v752 = vld [vmem:[#allocation13 + $0x80] sm:$0xff]
    %v753 = vld [vmem:[#allocation13 + $0x88] sm:$0xff]
    %v754 = vld [vmem:[#allocation13 + $0x90] sm:$0xff]
    %v755 = vld [vmem:[#allocation13 + $0x98] sm:$0xff]
    %v756 = vld [vmem:[#allocation13 + $0xa0] sm:$0xff]
    %v757 = vld [vmem:[#allocation13 + $0xa8] sm:$0xff]
    %v758 = vld [vmem:[#allocation13 + $0xb0] sm:$0xff]
    %v759 = vld [vmem:[#allocation13 + $0xb8] sm:$0xff]
    %v760 = vld [vmem:[#allocation13 + $0xc0] sm:$0xff]
    %v761 = vld [vmem:[#allocation13 + $0xc8] sm:$0xff]
    %v762 = vld [vmem:[#allocation13 + $0xd0] sm:$0xff]
    %v763 = vld [vmem:[#allocation13 + $0xd8] sm:$0xff]
    %v764 = vld [vmem:[#allocation13 + $0xe0] sm:$0xff]
    %v765 = vld [vmem:[#allocation13 + $0xe8] sm:$0xff]
    %v766 = vld [vmem:[#allocation13 + $0xf0] sm:$0xff]
    %v767 = vld [vmem:[#allocation13 + $0xf8] sm:$0xff]
    %v768 = vmul.f32 %v734, %v736
    %v769 = vmul.f32 %v735, %v737
    %v770 = vmul.f32 %v734, %v738
    %v771 = vmul.f32 %v735, %v739
    %v772 = vmul.f32 %v734, %v740
    %v773 = vmul.f32 %v735, %v741
    %v774 = vmul.f32 %v734, %v742
    %v775 = vmul.f32 %v735, %v743
    %v776 = vmul.f32 %v734, %v744
    %v777 = vmul.f32 %v735, %v745
    %v778 = vmul.f32 %v734, %v746
    %v779 = vmul.f32 %v735, %v747
    %v780 = vmul.f32 %v734, %v748
    %v781 = vmul.f32 %v735, %v749
    %v782 = vmul.f32 %v734, %v750
    %v783 = vmul.f32 %v735, %v751
    %v784 = vmul.f32 %v734, %v752
    %v785 = vmul.f32 %v735, %v753
    %v786 = vmul.f32 %v734, %v754
    %v787 = vmul.f32 %v735, %v755
    %v788 = vmul.f32 %v734, %v756
    %v789 = vmul.f32 %v735, %v757
    %v790 = vmul.f32 %v734, %v758
    %v791 = vmul.f32 %v735, %v759
    %v792 = vmul.f32 %v734, %v760
    %v793 = vmul.f32 %v735, %v761
    %v794 = vmul.f32 %v734, %v762
    %v795 = vmul.f32 %v735, %v763
    %v796 = vmul.f32 %v734, %v764
    %v797 = vmul.f32 %v735, %v765
    %v798 = vmul.f32 %v734, %v766
    %v799 = vmul.f32 %v735, %v767
    %v800 = vadd.f32 %v701, %v768
    %v801 = vadd.f32 %v702, %v769
    %v802 = vadd.f32 %v703, %v770
    %v803 = vadd.f32 %v704, %v771
    %v804 = vadd.f32 %v705, %v772
    %v805 = vadd.f32 %v706, %v773
    %v806 = vadd.f32 %v707, %v774
    %v807 = vadd.f32 %v708, %v775
    %v808 = vadd.f32 %v709, %v776
    %v809 = vadd.f32 %v710, %v777
    %v810 = vadd.f32 %v711, %v778
    %v811 = vadd.f32 %v712, %v779
    %v812 = vadd.f32 %v713, %v780
    %v813 = vadd.f32 %v714, %v781
    %v814 = vadd.f32 %v715, %v782
    %v815 = vadd.f32 %v716, %v783
    %v816 = vadd.f32 %v717, %v784
    %v817 = vadd.f32 %v718, %v785
    %v818 = vadd.f32 %v719, %v786
    %v819 = vadd.f32 %v720, %v787
    %v820 = vadd.f32 %v721, %v788
    %v821 = vadd.f32 %v722, %v789
    %v822 = vadd.f32 %v723, %v790
    %v823 = vadd.f32 %v724, %v791
    %v824 = vadd.f32 %v725, %v792
    %v825 = vadd.f32 %v726, %v793
    %v826 = vadd.f32 %v727, %v794
    %v827 = vadd.f32 %v728, %v795
    %v828 = vadd.f32 %v729, %v796
    %v829 = vadd.f32 %v730, %v797
    %v830 = vadd.f32 %v731, %v798
    %v831 = vadd.f32 %v732, %v799
    %v832 = vmul.f32 %v248, %v553
    %v833 = vmul.f32 %v249, %v553
    %s834 = scalar_lea.vmem [#allocation11], 256
    %v835 = vld [vmem:[%s834] sm:$0xff]
    %v836 = vld [vmem:[%s834 + $0x8] sm:$0xff]
    %v837 = vld [vmem:[%s834 + $0x10] sm:$0xff]
    %v838 = vld [vmem:[%s834 + $0x18] sm:$0xff]
    %v839 = vld [vmem:[%s834 + $0x20] sm:$0xff]
    %v840 = vld [vmem:[%s834 + $0x28] sm:$0xff]
    %v841 = vld [vmem:[%s834 + $0x30] sm:$0xff]
    %v842 = vld [vmem:[%s834 + $0x38] sm:$0xff]
    %v843 = vld [vmem:[%s834 + $0x40] sm:$0xff]
    %v844 = vld [vmem:[%s834 + $0x48] sm:$0xff]
    %v845 = vld [vmem:[%s834 + $0x50] sm:$0xff]
    %v846 = vld [vmem:[%s834 + $0x58] sm:$0xff]
    %v847 = vld [vmem:[%s834 + $0x60] sm:$0xff]
    %v848 = vld [vmem:[%s834 + $0x68] sm:$0xff]
    %v849 = vld [vmem:[%s834 + $0x70] sm:$0xff]
    %v850 = vld [vmem:[%s834 + $0x78] sm:$0xff]
    %v851 = vld [vmem:[%s834 + $0x80] sm:$0xff]
    %v852 = vld [vmem:[%s834 + $0x88] sm:$0xff]
    %v853 = vld [vmem:[%s834 + $0x90] sm:$0xff]
    %v854 = vld [vmem:[%s834 + $0x98] sm:$0xff]
    %v855 = vld [vmem:[%s834 + $0xa0] sm:$0xff]
    %v856 = vld [vmem:[%s834 + $0xa8] sm:$0xff]
    %v857 = vld [vmem:[%s834 + $0xb0] sm:$0xff]
    %v858 = vld [vmem:[%s834 + $0xb8] sm:$0xff]
    %v859 = vld [vmem:[%s834 + $0xc0] sm:$0xff]
    %v860 = vld [vmem:[%s834 + $0xc8] sm:$0xff]
    %v861 = vld [vmem:[%s834 + $0xd0] sm:$0xff]
    %v862 = vld [vmem:[%s834 + $0xd8] sm:$0xff]
    %v863 = vld [vmem:[%s834 + $0xe0] sm:$0xff]
    %v864 = vld [vmem:[%s834 + $0xe8] sm:$0xff]
    %v865 = vld [vmem:[%s834 + $0xf0] sm:$0xff]
    %v866 = vld [vmem:[%s834 + $0xf8] sm:$0xff]
    %v867 = vmul.f32 %v835, %v588
    %v868 = vmul.f32 %v836, %v588
    %v869 = vmul.f32 %v837, %v588
    %v870 = vmul.f32 %v838, %v588
    %v871 = vmul.f32 %v839, %v588
    %v872 = vmul.f32 %v840, %v588
    %v873 = vmul.f32 %v841, %v588
    %v874 = vmul.f32 %v842, %v588
    %v875 = vmul.f32 %v843, %v588
    %v876 = vmul.f32 %v844, %v588
    %v877 = vmul.f32 %v845, %v588
    %v878 = vmul.f32 %v846, %v588
    %v879 = vmul.f32 %v847, %v588
    %v880 = vmul.f32 %v848, %v588
    %v881 = vmul.f32 %v849, %v588
    %v882 = vmul.f32 %v850, %v588
    %v883 = vmul.f32 %v851, %v588
    %v884 = vmul.f32 %v852, %v588
    %v885 = vmul.f32 %v853, %v588
    %v886 = vmul.f32 %v854, %v588
    %v887 = vmul.f32 %v855, %v588
    %v888 = vmul.f32 %v856, %v588
    %v889 = vmul.f32 %v857, %v588
    %v890 = vmul.f32 %v858, %v588
    %v891 = vmul.f32 %v859, %v588
    %v892 = vmul.f32 %v860, %v588
    %v893 = vmul.f32 %v861, %v588
    %v894 = vmul.f32 %v862, %v588
    %v895 = vmul.f32 %v863, %v588
    %v896 = vmul.f32 %v864, %v588
    %v897 = vmul.f32 %v865, %v588
    %v898 = vmul.f32 %v866, %v588
    %v899 = vadd.f32 %v832, %v867
    %v900 = vadd.f32 %v833, %v868
    %v901 = vadd.f32 %v832, %v869
    %v902 = vadd.f32 %v833, %v870
    %v903 = vadd.f32 %v832, %v871
    %v904 = vadd.f32 %v833, %v872
    %v905 = vadd.f32 %v832, %v873
    %v906 = vadd.f32 %v833, %v874
    %v907 = vadd.f32 %v832, %v875
    %v908 = vadd.f32 %v833, %v876
    %v909 = vadd.f32 %v832, %v877
    %v910 = vadd.f32 %v833, %v878
    %v911 = vadd.f32 %v832, %v879
    %v912 = vadd.f32 %v833, %v880
    %v913 = vadd.f32 %v832, %v881
    %v914 = vadd.f32 %v833, %v882
    %v915 = vadd.f32 %v832, %v883
    %v916 = vadd.f32 %v833, %v884
    %v917 = vadd.f32 %v832, %v885
    %v918 = vadd.f32 %v833, %v886
    %v919 = vadd.f32 %v832, %v887
    %v920 = vadd.f32 %v833, %v888
    %v921 = vadd.f32 %v832, %v889
    %v922 = vadd.f32 %v833, %v890
    %v923 = vadd.f32 %v832, %v891
    %v924 = vadd.f32 %v833, %v892
    %v925 = vadd.f32 %v832, %v893
    %v926 = vadd.f32 %v833, %v894
    %v927 = vadd.f32 %v832, %v895
    %v928 = vadd.f32 %v833, %v896
    %v929 = vadd.f32 %v832, %v897
    %v930 = vadd.f32 %v833, %v898
    %v933 = vrot.slane %v348, 1
    %v934 = vrot.slane %v348, 2
    %v935 = vrot.slane %v348, 3
    %v936 = vrot.slane %v348, 4
    %v937 = vrot.slane %v348, 5
    %v938 = vrot.slane %v348, 6
    %v939 = vrot.slane %v348, 7
    %v940 = vrot.slane %v349, 1
    %v941 = vrot.slane %v349, 2
    %v942 = vrot.slane %v349, 3
    %v943 = vrot.slane %v349, 4
    %v944 = vrot.slane %v349, 5
    %v945 = vrot.slane %v349, 6
    %v946 = vrot.slane %v349, 7
    %v947 = vperm.slane %v348, 0
    %v948 = vperm.slane %v933, 0
    %v949 = vperm.slane %v934, 0
    %v950 = vperm.slane %v935, 0
    %v951 = vperm.slane %v936, 0
    %v952 = vperm.slane %v937, 0
    %v953 = vperm.slane %v938, 0
    %v954 = vperm.slane %v939, 0
    %v955 = vperm.slane %v349, 0
    %v956 = vperm.slane %v940, 0
    %v957 = vperm.slane %v941, 0
    %v958 = vperm.slane %v942, 0
    %v959 = vperm.slane %v943, 0
    %v960 = vperm.slane %v944, 0
    %v961 = vperm.slane %v945, 0
    %v962 = vperm.slane %v946, 0
    %v979 = vmul.f32 %v947, %v899
    %v980 = vmul.f32 %v947, %v900
    %v981 = vmul.f32 %v948, %v901
    %v982 = vmul.f32 %v948, %v902
    %v983 = vmul.f32 %v949, %v903
    %v984 = vmul.f32 %v949, %v904
    %v985 = vmul.f32 %v950, %v905
    %v986 = vmul.f32 %v950, %v906
    %v987 = vmul.f32 %v951, %v907
    %v988 = vmul.f32 %v951, %v908
    %v989 = vmul.f32 %v952, %v909
    %v990 = vmul.f32 %v952, %v910
    %v991 = vmul.f32 %v953, %v911
    %v992 = vmul.f32 %v953, %v912
    %v993 = vmul.f32 %v954, %v913
    %v994 = vmul.f32 %v954, %v914
    %v995 = vmul.f32 %v955, %v915
    %v996 = vmul.f32 %v955, %v916
    %v997 = vmul.f32 %v956, %v917
    %v998 = vmul.f32 %v956, %v918
    %v999 = vmul.f32 %v957, %v919
    %v1000 = vmul.f32 %v957, %v920
    %v1001 = vmul.f32 %v958, %v921
    %v1002 = vmul.f32 %v958, %v922
    %v1003 = vmul.f32 %v959, %v923
    %v1004 = vmul.f32 %v959, %v924
    %v1005 = vmul.f32 %v960, %v925
    %v1006 = vmul.f32 %v960, %v926
    %v1007 = vmul.f32 %v961, %v927
    %v1008 = vmul.f32 %v961, %v928
    %v1009 = vmul.f32 %v962, %v929
    %v1010 = vmul.f32 %v962, %v930
    %v1011 = vmul.f32 %v248, %v733
    %v1012 = vmul.f32 %v249, %v733
    %s1013 = scalar_lea.vmem [#allocation13], 256
    %v1014 = vld [vmem:[%s1013] sm:$0xff]
    %v1015 = vld [vmem:[%s1013 + $0x8] sm:$0xff]
    %v1016 = vld [vmem:[%s1013 + $0x10] sm:$0xff]
    %v1017 = vld [vmem:[%s1013 + $0x18] sm:$0xff]
    %v1018 = vld [vmem:[%s1013 + $0x20] sm:$0xff]
    %v1019 = vld [vmem:[%s1013 + $0x28] sm:$0xff]
    %v1020 = vld [vmem:[%s1013 + $0x30] sm:$0xff]
    %v1021 = vld [vmem:[%s1013 + $0x38] sm:$0xff]
    %v1022 = vld [vmem:[%s1013 + $0x40] sm:$0xff]
    %v1023 = vld [vmem:[%s1013 + $0x48] sm:$0xff]
    %v1024 = vld [vmem:[%s1013 + $0x50] sm:$0xff]
    %v1025 = vld [vmem:[%s1013 + $0x58] sm:$0xff]
    %v1026 = vld [vmem:[%s1013 + $0x60] sm:$0xff]
    %v1027 = vld [vmem:[%s1013 + $0x68] sm:$0xff]
    %v1028 = vld [vmem:[%s1013 + $0x70] sm:$0xff]
    %v1029 = vld [vmem:[%s1013 + $0x78] sm:$0xff]
    %v1030 = vld [vmem:[%s1013 + $0x80] sm:$0xff]
    %v1031 = vld [vmem:[%s1013 + $0x88] sm:$0xff]
    %v1032 = vld [vmem:[%s1013 + $0x90] sm:$0xff]
    %v1033 = vld [vmem:[%s1013 + $0x98] sm:$0xff]
    %v1034 = vld [vmem:[%s1013 + $0xa0] sm:$0xff]
    %v1035 = vld [vmem:[%s1013 + $0xa8] sm:$0xff]
    %v1036 = vld [vmem:[%s1013 + $0xb0] sm:$0xff]
    %v1037 = vld [vmem:[%s1013 + $0xb8] sm:$0xff]
    %v1038 = vld [vmem:[%s1013 + $0xc0] sm:$0xff]
    %v1039 = vld [vmem:[%s1013 + $0xc8] sm:$0xff]
    %v1040 = vld [vmem:[%s1013 + $0xd0] sm:$0xff]
    %v1041 = vld [vmem:[%s1013 + $0xd8] sm:$0xff]
    %v1042 = vld [vmem:[%s1013 + $0xe0] sm:$0xff]
    %v1043 = vld [vmem:[%s1013 + $0xe8] sm:$0xff]
    %v1044 = vld [vmem:[%s1013 + $0xf0] sm:$0xff]
    %v1045 = vld [vmem:[%s1013 + $0xf8] sm:$0xff]
    %v1046 = vmul.f32 %v1011, %v1014
    %v1047 = vmul.f32 %v1012, %v1015
    %v1048 = vmul.f32 %v1011, %v1016
    %v1049 = vmul.f32 %v1012, %v1017
    %v1050 = vmul.f32 %v1011, %v1018
    %v1051 = vmul.f32 %v1012, %v1019
    %v1052 = vmul.f32 %v1011, %v1020
    %v1053 = vmul.f32 %v1012, %v1021
    %v1054 = vmul.f32 %v1011, %v1022
    %v1055 = vmul.f32 %v1012, %v1023
    %v1056 = vmul.f32 %v1011, %v1024
    %v1057 = vmul.f32 %v1012, %v1025
    %v1058 = vmul.f32 %v1011, %v1026
    %v1059 = vmul.f32 %v1012, %v1027
    %v1060 = vmul.f32 %v1011, %v1028
    %v1061 = vmul.f32 %v1012, %v1029
    %v1062 = vmul.f32 %v1011, %v1030
    %v1063 = vmul.f32 %v1012, %v1031
    %v1064 = vmul.f32 %v1011, %v1032
    %v1065 = vmul.f32 %v1012, %v1033
    %v1066 = vmul.f32 %v1011, %v1034
    %v1067 = vmul.f32 %v1012, %v1035
    %v1068 = vmul.f32 %v1011, %v1036
    %v1069 = vmul.f32 %v1012, %v1037
    %v1070 = vmul.f32 %v1011, %v1038
    %v1071 = vmul.f32 %v1012, %v1039
    %v1072 = vmul.f32 %v1011, %v1040
    %v1073 = vmul.f32 %v1012, %v1041
    %v1074 = vmul.f32 %v1011, %v1042
    %v1075 = vmul.f32 %v1012, %v1043
    %v1076 = vmul.f32 %v1011, %v1044
    %v1077 = vmul.f32 %v1012, %v1045
    %v1078 = vadd.f32 %v979, %v1046
    %v1079 = vadd.f32 %v980, %v1047
    %v1080 = vadd.f32 %v981, %v1048
    %v1081 = vadd.f32 %v982, %v1049
    %v1082 = vadd.f32 %v983, %v1050
    %v1083 = vadd.f32 %v984, %v1051
    %v1084 = vadd.f32 %v985, %v1052
    %v1085 = vadd.f32 %v986, %v1053
    %v1086 = vadd.f32 %v987, %v1054
    %v1087 = vadd.f32 %v988, %v1055
    %v1088 = vadd.f32 %v989, %v1056
    %v1089 = vadd.f32 %v990, %v1057
    %v1090 = vadd.f32 %v991, %v1058
    %v1091 = vadd.f32 %v992, %v1059
    %v1092 = vadd.f32 %v993, %v1060
    %v1093 = vadd.f32 %v994, %v1061
    %v1094 = vadd.f32 %v995, %v1062
    %v1095 = vadd.f32 %v996, %v1063
    %v1096 = vadd.f32 %v997, %v1064
    %v1097 = vadd.f32 %v998, %v1065
    %v1098 = vadd.f32 %v999, %v1066
    %v1099 = vadd.f32 %v1000, %v1067
    %v1100 = vadd.f32 %v1001, %v1068
    %v1101 = vadd.f32 %v1002, %v1069
    %v1102 = vadd.f32 %v1003, %v1070
    %v1103 = vadd.f32 %v1004, %v1071
    %v1104 = vadd.f32 %v1005, %v1072
    %v1105 = vadd.f32 %v1006, %v1073
    %v1106 = vadd.f32 %v1007, %v1074
    %v1107 = vadd.f32 %v1008, %v1075
    %v1108 = vadd.f32 %v1009, %v1076
    %v1109 = vadd.f32 %v1010, %v1077
    %v1110 = vadd.f32 %v800, %v1078
    %v1111 = vadd.f32 %v801, %v1079
    %v1112 = vadd.f32 %v802, %v1080
    %v1113 = vadd.f32 %v803, %v1081
    %v1114 = vadd.f32 %v804, %v1082
    %v1115 = vadd.f32 %v805, %v1083
    %v1116 = vadd.f32 %v806, %v1084
    %v1117 = vadd.f32 %v807, %v1085
    %v1118 = vadd.f32 %v808, %v1086
    %v1119 = vadd.f32 %v809, %v1087
    %v1120 = vadd.f32 %v810, %v1088
    %v1121 = vadd.f32 %v811, %v1089
    %v1122 = vadd.f32 %v812, %v1090
    %v1123 = vadd.f32 %v813, %v1091
    %v1124 = vadd.f32 %v814, %v1092
    %v1125 = vadd.f32 %v815, %v1093
    %v1126 = vadd.f32 %v816, %v1094
    %v1127 = vadd.f32 %v817, %v1095
    %v1128 = vadd.f32 %v818, %v1096
    %v1129 = vadd.f32 %v819, %v1097
    %v1130 = vadd.f32 %v820, %v1098
    %v1131 = vadd.f32 %v821, %v1099
    %v1132 = vadd.f32 %v822, %v1100
    %v1133 = vadd.f32 %v823, %v1101
    %v1134 = vadd.f32 %v824, %v1102
    %v1135 = vadd.f32 %v825, %v1103
    %v1136 = vadd.f32 %v826, %v1104
    %v1137 = vadd.f32 %v827, %v1105
    %v1138 = vadd.f32 %v828, %v1106
    %v1139 = vadd.f32 %v829, %v1107
    %v1140 = vadd.f32 %v830, %v1108
    %v1141 = vadd.f32 %v831, %v1109
    %vm1142 = vcmask 261120
    %v1143 = vsel %vm1142, %v1110, -inf
    %v1144 = vsel %vm1142, %v1111, -inf
    %v1145 = vmax.f32 %v1143, %v1144
    %v1146 = vrot.slane %v1145, 4
    %v1147 = vmax.f32 %v1145, %v1146
    %v1148 = vrot.slane %v1147, 2
    %v1149 = vmax.f32 %v1147, %v1148
    %v1150 = vrot.slane %v1149, 1
    %v1151 = vmax.f32 %v1149, %v1150
    %v1152 = vsel %vm1142, %v1112, -inf
    %v1153 = vsel %vm1142, %v1113, -inf
    %v1154 = vmax.f32 %v1152, %v1153
    %v1155 = vrot.slane %v1154, 4
    %v1156 = vmax.f32 %v1154, %v1155
    %v1157 = vrot.slane %v1156, 2
    %v1158 = vmax.f32 %v1156, %v1157
    %v1159 = vrot.slane %v1158, 1
    %v1160 = vmax.f32 %v1158, %v1159
    %v1161 = vsel %vm1142, %v1114, -inf
    %v1162 = vsel %vm1142, %v1115, -inf
    %v1163 = vmax.f32 %v1161, %v1162
    %v1164 = vrot.slane %v1163, 4
    %v1165 = vmax.f32 %v1163, %v1164
    %v1166 = vrot.slane %v1165, 2
    %v1167 = vmax.f32 %v1165, %v1166
    %v1168 = vrot.slane %v1167, 1
    %v1169 = vmax.f32 %v1167, %v1168
    %v1170 = vsel %vm1142, %v1116, -inf
    %v1171 = vsel %vm1142, %v1117, -inf
    %v1172 = vmax.f32 %v1170, %v1171
    %v1173 = vrot.slane %v1172, 4
    %v1174 = vmax.f32 %v1172, %v1173
    %v1175 = vrot.slane %v1174, 2
    %v1176 = vmax.f32 %v1174, %v1175
    %v1177 = vrot.slane %v1176, 1
    %v1178 = vmax.f32 %v1176, %v1177
    %v1179 = vsel %vm1142, %v1118, -inf
    %v1180 = vsel %vm1142, %v1119, -inf
    %v1181 = vmax.f32 %v1179, %v1180
    %v1182 = vrot.slane %v1181, 4
    %v1183 = vmax.f32 %v1181, %v1182
    %v1184 = vrot.slane %v1183, 2
    %v1185 = vmax.f32 %v1183, %v1184
    %v1186 = vrot.slane %v1185, 1
    %v1187 = vmax.f32 %v1185, %v1186
    %v1188 = vsel %vm1142, %v1120, -inf
    %v1189 = vsel %vm1142, %v1121, -inf
    %v1190 = vmax.f32 %v1188, %v1189
    %v1191 = vrot.slane %v1190, 4
    %v1192 = vmax.f32 %v1190, %v1191
    %v1193 = vrot.slane %v1192, 2
    %v1194 = vmax.f32 %v1192, %v1193
    %v1195 = vrot.slane %v1194, 1
    %v1196 = vmax.f32 %v1194, %v1195
    %v1197 = vsel %vm1142, %v1122, -inf
    %v1198 = vsel %vm1142, %v1123, -inf
    %v1199 = vmax.f32 %v1197, %v1198
    %v1200 = vrot.slane %v1199, 4
    %v1201 = vmax.f32 %v1199, %v1200
    %v1202 = vrot.slane %v1201, 2
    %v1203 = vmax.f32 %v1201, %v1202
    %v1204 = vrot.slane %v1203, 1
    %v1205 = vmax.f32 %v1203, %v1204
    %v1206 = vsel %vm1142, %v1124, -inf
    %v1207 = vsel %vm1142, %v1125, -inf
    %v1208 = vmax.f32 %v1206, %v1207
    %v1209 = vrot.slane %v1208, 4
    %v1210 = vmax.f32 %v1208, %v1209
    %v1211 = vrot.slane %v1210, 2
    %v1212 = vmax.f32 %v1210, %v1211
    %v1213 = vrot.slane %v1212, 1
    %v1214 = vmax.f32 %v1212, %v1213
    %v1215 = vsel %vm1142, %v1126, -inf
    %v1216 = vsel %vm1142, %v1127, -inf
    %v1217 = vmax.f32 %v1215, %v1216
    %v1218 = vrot.slane %v1217, 4
    %v1219 = vmax.f32 %v1217, %v1218
    %v1220 = vrot.slane %v1219, 2
    %v1221 = vmax.f32 %v1219, %v1220
    %v1222 = vrot.slane %v1221, 1
    %v1223 = vmax.f32 %v1221, %v1222
    %v1224 = vsel %vm1142, %v1128, -inf
    %v1225 = vsel %vm1142, %v1129, -inf
    %v1226 = vmax.f32 %v1224, %v1225
    %v1227 = vrot.slane %v1226, 4
    %v1228 = vmax.f32 %v1226, %v1227
    %v1229 = vrot.slane %v1228, 2
    %v1230 = vmax.f32 %v1228, %v1229
    %v1231 = vrot.slane %v1230, 1
    %v1232 = vmax.f32 %v1230, %v1231
    %v1233 = vsel %vm1142, %v1130, -inf
    %v1234 = vsel %vm1142, %v1131, -inf
    %v1235 = vmax.f32 %v1233, %v1234
    %v1236 = vrot.slane %v1235, 4
    %v1237 = vmax.f32 %v1235, %v1236
    %v1238 = vrot.slane %v1237, 2
    %v1239 = vmax.f32 %v1237, %v1238
    %v1240 = vrot.slane %v1239, 1
    %v1241 = vmax.f32 %v1239, %v1240
    %v1242 = vsel %vm1142, %v1132, -inf
    %v1243 = vsel %vm1142, %v1133, -inf
    %v1244 = vmax.f32 %v1242, %v1243
    %v1245 = vrot.slane %v1244, 4
    %v1246 = vmax.f32 %v1244, %v1245
    %v1247 = vrot.slane %v1246, 2
    %v1248 = vmax.f32 %v1246, %v1247
    %v1249 = vrot.slane %v1248, 1
    %v1250 = vmax.f32 %v1248, %v1249
    %v1251 = vsel %vm1142, %v1134, -inf
    %v1252 = vsel %vm1142, %v1135, -inf
    %v1253 = vmax.f32 %v1251, %v1252
    %v1254 = vrot.slane %v1253, 4
    %v1255 = vmax.f32 %v1253, %v1254
    %v1256 = vrot.slane %v1255, 2
    %v1257 = vmax.f32 %v1255, %v1256
    %v1258 = vrot.slane %v1257, 1
    %v1259 = vmax.f32 %v1257, %v1258
    %v1260 = vsel %vm1142, %v1136, -inf
    %v1261 = vsel %vm1142, %v1137, -inf
    %v1262 = vmax.f32 %v1260, %v1261
    %v1263 = vrot.slane %v1262, 4
    %v1264 = vmax.f32 %v1262, %v1263
    %v1265 = vrot.slane %v1264, 2
    %v1266 = vmax.f32 %v1264, %v1265
    %v1267 = vrot.slane %v1266, 1
    %v1268 = vmax.f32 %v1266, %v1267
    %v1269 = vsel %vm1142, %v1138, -inf
    %v1270 = vsel %vm1142, %v1139, -inf
    %v1271 = vmax.f32 %v1269, %v1270
    %v1272 = vrot.slane %v1271, 4
    %v1273 = vmax.f32 %v1271, %v1272
    %v1274 = vrot.slane %v1273, 2
    %v1275 = vmax.f32 %v1273, %v1274
    %v1276 = vrot.slane %v1275, 1
    %v1277 = vmax.f32 %v1275, %v1276
    %v1278 = vsel %vm1142, %v1140, -inf
    %v1279 = vsel %vm1142, %v1141, -inf
    %v1280 = vmax.f32 %v1278, %v1279
    %v1281 = vrot.slane %v1280, 4
    %v1282 = vmax.f32 %v1280, %v1281
    %v1283 = vrot.slane %v1282, 2
    %v1284 = vmax.f32 %v1282, %v1283
    %v1285 = vrot.slane %v1284, 1
    %v1286 = vmax.f32 %v1284, %v1285
    %v1287 = vsub.f32 %v1110, %v1151
    %v1288 = vsub.f32 %v1111, %v1151
    %v1289 = vsub.f32 %v1112, %v1160
    %v1290 = vsub.f32 %v1113, %v1160
    %v1291 = vsub.f32 %v1114, %v1169
    %v1292 = vsub.f32 %v1115, %v1169
    %v1293 = vsub.f32 %v1116, %v1178
    %v1294 = vsub.f32 %v1117, %v1178
    %v1295 = vsub.f32 %v1118, %v1187
    %v1296 = vsub.f32 %v1119, %v1187
    %v1297 = vsub.f32 %v1120, %v1196
    %v1298 = vsub.f32 %v1121, %v1196
    %v1299 = vsub.f32 %v1122, %v1205
    %v1300 = vsub.f32 %v1123, %v1205
    %v1301 = vsub.f32 %v1124, %v1214
    %v1302 = vsub.f32 %v1125, %v1214
    %v1303 = vsub.f32 %v1126, %v1223
    %v1304 = vsub.f32 %v1127, %v1223
    %v1305 = vsub.f32 %v1128, %v1232
    %v1306 = vsub.f32 %v1129, %v1232
    %v1307 = vsub.f32 %v1130, %v1241
    %v1308 = vsub.f32 %v1131, %v1241
    %v1309 = vsub.f32 %v1132, %v1250
    %v1310 = vsub.f32 %v1133, %v1250
    %v1311 = vsub.f32 %v1134, %v1259
    %v1312 = vsub.f32 %v1135, %v1259
    %v1313 = vsub.f32 %v1136, %v1268
    %v1314 = vsub.f32 %v1137, %v1268
    %v1315 = vsub.f32 %v1138, %v1277
    %v1316 = vsub.f32 %v1139, %v1277
    %v1317 = vsub.f32 %v1140, %v1286
    %v1318 = vsub.f32 %v1141, %v1286
    %v1319 = vmul.f32 %v1287, 1.442695
    %v1320 = vpow.pop %v1319
    %v1321 = vmul.f32 %v1288, 1.442695
    %v1322 = vpow.pop %v1321
    %v1323 = vmul.f32 %v1289, 1.442695
    %v1324 = vpow.pop %v1323
    %v1325 = vmul.f32 %v1290, 1.442695
    %v1326 = vpow.pop %v1325
    %v1327 = vmul.f32 %v1291, 1.442695
    %v1328 = vpow.pop %v1327
    %v1329 = vmul.f32 %v1292, 1.442695
    %v1330 = vpow.pop %v1329
    %v1331 = vmul.f32 %v1293, 1.442695
    %v1332 = vpow.pop %v1331
    %v1333 = vmul.f32 %v1294, 1.442695
    %v1334 = vpow.pop %v1333
    %v1335 = vmul.f32 %v1295, 1.442695
    %v1336 = vpow.pop %v1335
    %v1337 = vmul.f32 %v1296, 1.442695
    %v1338 = vpow.pop %v1337
    %v1339 = vmul.f32 %v1297, 1.442695
    %v1340 = vpow.pop %v1339
    %v1341 = vmul.f32 %v1298, 1.442695
    %v1342 = vpow.pop %v1341
    %v1343 = vmul.f32 %v1299, 1.442695
    %v1344 = vpow.pop %v1343
    %v1345 = vmul.f32 %v1300, 1.442695
    %v1346 = vpow.pop %v1345
    %v1347 = vmul.f32 %v1301, 1.442695
    %v1348 = vpow.pop %v1347
    %v1349 = vmul.f32 %v1302, 1.442695
    %v1350 = vpow.pop %v1349
    %v1351 = vmul.f32 %v1303, 1.442695
    %v1352 = vpow.pop %v1351
    %v1353 = vmul.f32 %v1304, 1.442695
    %v1354 = vpow.pop %v1353
    %v1355 = vmul.f32 %v1305, 1.442695
    %v1356 = vpow.pop %v1355
    %v1357 = vmul.f32 %v1306, 1.442695
    %v1358 = vpow.pop %v1357
    %v1359 = vmul.f32 %v1307, 1.442695
    %v1360 = vpow.pop %v1359
    %v1361 = vmul.f32 %v1308, 1.442695
    %v1362 = vpow.pop %v1361
    %v1363 = vmul.f32 %v1309, 1.442695
    %v1364 = vpow.pop %v1363
    %v1365 = vmul.f32 %v1310, 1.442695
    %v1366 = vpow.pop %v1365
    %v1367 = vmul.f32 %v1311, 1.442695
    %v1368 = vpow.pop %v1367
    %v1369 = vmul.f32 %v1312, 1.442695
    %v1370 = vpow.pop %v1369
    %v1371 = vmul.f32 %v1313, 1.442695
    %v1372 = vpow.pop %v1371
    %v1373 = vmul.f32 %v1314, 1.442695
    %v1374 = vpow.pop %v1373
    %v1375 = vmul.f32 %v1315, 1.442695
    %v1376 = vpow.pop %v1375
    %v1377 = vmul.f32 %v1316, 1.442695
    %v1378 = vpow.pop %v1377
    %v1379 = vmul.f32 %v1317, 1.442695
    %v1380 = vpow.pop %v1379
    %v1381 = vmul.f32 %v1318, 1.442695
    %v1382 = vpow.pop %v1381
    %v1383 = vsel %vm1142, %v1320, 0.0
    %v1384 = vsel %vm1142, %v1322, 0.0
    %v1385 = vadd.f32 %v1383, %v1384
    %v1386 = vrot.slane %v1385, 4
    %v1387 = vadd.f32 %v1385, %v1386
    %v1388 = vrot.slane %v1387, 2
    %v1389 = vadd.f32 %v1387, %v1388
    %v1390 = vrot.slane %v1389, 1
    %v1391 = vadd.f32 %v1389, %v1390
    %v1392 = vsel %vm1142, %v1324, 0.0
    %v1393 = vsel %vm1142, %v1326, 0.0
    %v1394 = vadd.f32 %v1392, %v1393
    %v1395 = vrot.slane %v1394, 4
    %v1396 = vadd.f32 %v1394, %v1395
    %v1397 = vrot.slane %v1396, 2
    %v1398 = vadd.f32 %v1396, %v1397
    %v1399 = vrot.slane %v1398, 1
    %v1400 = vadd.f32 %v1398, %v1399
    %v1401 = vsel %vm1142, %v1328, 0.0
    %v1402 = vsel %vm1142, %v1330, 0.0
    %v1403 = vadd.f32 %v1401, %v1402
    %v1404 = vrot.slane %v1403, 4
    %v1405 = vadd.f32 %v1403, %v1404
    %v1406 = vrot.slane %v1405, 2
    %v1407 = vadd.f32 %v1405, %v1406
    %v1408 = vrot.slane %v1407, 1
    %v1409 = vadd.f32 %v1407, %v1408
    %v1410 = vsel %vm1142, %v1332, 0.0
    %v1411 = vsel %vm1142, %v1334, 0.0
    %v1412 = vadd.f32 %v1410, %v1411
    %v1413 = vrot.slane %v1412, 4
    %v1414 = vadd.f32 %v1412, %v1413
    %v1415 = vrot.slane %v1414, 2
    %v1416 = vadd.f32 %v1414, %v1415
    %v1417 = vrot.slane %v1416, 1
    %v1418 = vadd.f32 %v1416, %v1417
    %v1419 = vsel %vm1142, %v1336, 0.0
    %v1420 = vsel %vm1142, %v1338, 0.0
    %v1421 = vadd.f32 %v1419, %v1420
    %v1422 = vrot.slane %v1421, 4
    %v1423 = vadd.f32 %v1421, %v1422
    %v1424 = vrot.slane %v1423, 2
    %v1425 = vadd.f32 %v1423, %v1424
    %v1426 = vrot.slane %v1425, 1
    %v1427 = vadd.f32 %v1425, %v1426
    %v1428 = vsel %vm1142, %v1340, 0.0
    %v1429 = vsel %vm1142, %v1342, 0.0
    %v1430 = vadd.f32 %v1428, %v1429
    %v1431 = vrot.slane %v1430, 4
    %v1432 = vadd.f32 %v1430, %v1431
    %v1433 = vrot.slane %v1432, 2
    %v1434 = vadd.f32 %v1432, %v1433
    %v1435 = vrot.slane %v1434, 1
    %v1436 = vadd.f32 %v1434, %v1435
    %v1437 = vsel %vm1142, %v1344, 0.0
    %v1438 = vsel %vm1142, %v1346, 0.0
    %v1439 = vadd.f32 %v1437, %v1438
    %v1440 = vrot.slane %v1439, 4
    %v1441 = vadd.f32 %v1439, %v1440
    %v1442 = vrot.slane %v1441, 2
    %v1443 = vadd.f32 %v1441, %v1442
    %v1444 = vrot.slane %v1443, 1
    %v1445 = vadd.f32 %v1443, %v1444
    %v1446 = vsel %vm1142, %v1348, 0.0
    %v1447 = vsel %vm1142, %v1350, 0.0
    %v1448 = vadd.f32 %v1446, %v1447
    %v1449 = vrot.slane %v1448, 4
    %v1450 = vadd.f32 %v1448, %v1449
    %v1451 = vrot.slane %v1450, 2
    %v1452 = vadd.f32 %v1450, %v1451
    %v1453 = vrot.slane %v1452, 1
    %v1454 = vadd.f32 %v1452, %v1453
    %v1455 = vsel %vm1142, %v1352, 0.0
    %v1456 = vsel %vm1142, %v1354, 0.0
    %v1457 = vadd.f32 %v1455, %v1456
    %v1458 = vrot.slane %v1457, 4
    %v1459 = vadd.f32 %v1457, %v1458
    %v1460 = vrot.slane %v1459, 2
    %v1461 = vadd.f32 %v1459, %v1460
    %v1462 = vrot.slane %v1461, 1
    %v1463 = vadd.f32 %v1461, %v1462
    %v1464 = vsel %vm1142, %v1356, 0.0
    %v1465 = vsel %vm1142, %v1358, 0.0
    %v1466 = vadd.f32 %v1464, %v1465
    %v1467 = vrot.slane %v1466, 4
    %v1468 = vadd.f32 %v1466, %v1467
    %v1469 = vrot.slane %v1468, 2
    %v1470 = vadd.f32 %v1468, %v1469
    %v1471 = vrot.slane %v1470, 1
    %v1472 = vadd.f32 %v1470, %v1471
    %v1473 = vsel %vm1142, %v1360, 0.0
    %v1474 = vsel %vm1142, %v1362, 0.0
    %v1475 = vadd.f32 %v1473, %v1474
    %v1476 = vrot.slane %v1475, 4
    %v1477 = vadd.f32 %v1475, %v1476
    %v1478 = vrot.slane %v1477, 2
    %v1479 = vadd.f32 %v1477, %v1478
    %v1480 = vrot.slane %v1479, 1
    %v1481 = vadd.f32 %v1479, %v1480
    %v1482 = vsel %vm1142, %v1364, 0.0
    %v1483 = vsel %vm1142, %v1366, 0.0
    %v1484 = vadd.f32 %v1482, %v1483
    %v1485 = vrot.slane %v1484, 4
    %v1486 = vadd.f32 %v1484, %v1485
    %v1487 = vrot.slane %v1486, 2
    %v1488 = vadd.f32 %v1486, %v1487
    %v1489 = vrot.slane %v1488, 1
    %v1490 = vadd.f32 %v1488, %v1489
    %v1491 = vsel %vm1142, %v1368, 0.0
    %v1492 = vsel %vm1142, %v1370, 0.0
    %v1493 = vadd.f32 %v1491, %v1492
    %v1494 = vrot.slane %v1493, 4
    %v1495 = vadd.f32 %v1493, %v1494
    %v1496 = vrot.slane %v1495, 2
    %v1497 = vadd.f32 %v1495, %v1496
    %v1498 = vrot.slane %v1497, 1
    %v1499 = vadd.f32 %v1497, %v1498
    %v1500 = vsel %vm1142, %v1372, 0.0
    %v1501 = vsel %vm1142, %v1374, 0.0
    %v1502 = vadd.f32 %v1500, %v1501
    %v1503 = vrot.slane %v1502, 4
    %v1504 = vadd.f32 %v1502, %v1503
    %v1505 = vrot.slane %v1504, 2
    %v1506 = vadd.f32 %v1504, %v1505
    %v1507 = vrot.slane %v1506, 1
    %v1508 = vadd.f32 %v1506, %v1507
    %v1509 = vsel %vm1142, %v1376, 0.0
    %v1510 = vsel %vm1142, %v1378, 0.0
    %v1511 = vadd.f32 %v1509, %v1510
    %v1512 = vrot.slane %v1511, 4
    %v1513 = vadd.f32 %v1511, %v1512
    %v1514 = vrot.slane %v1513, 2
    %v1515 = vadd.f32 %v1513, %v1514
    %v1516 = vrot.slane %v1515, 1
    %v1517 = vadd.f32 %v1515, %v1516
    %v1518 = vsel %vm1142, %v1380, 0.0
    %v1519 = vsel %vm1142, %v1382, 0.0
    %v1520 = vadd.f32 %v1518, %v1519
    %v1521 = vrot.slane %v1520, 4
    %v1522 = vadd.f32 %v1520, %v1521
    %v1523 = vrot.slane %v1522, 2
    %v1524 = vadd.f32 %v1522, %v1523
    %v1525 = vrot.slane %v1524, 1
    %v1526 = vadd.f32 %v1524, %v1525
    %v1527 = vrcp.pop %v1391
    %v1528 = vrcp.pop %v1400
    %v1529 = vrcp.pop %v1409
    %v1530 = vrcp.pop %v1418
    %v1531 = vrcp.pop %v1427
    %v1532 = vrcp.pop %v1436
    %v1533 = vrcp.pop %v1445
    %v1534 = vrcp.pop %v1454
    %v1535 = vrcp.pop %v1463
    %v1536 = vrcp.pop %v1472
    %v1537 = vrcp.pop %v1481
    %v1538 = vrcp.pop %v1490
    %v1539 = vrcp.pop %v1499
    %v1540 = vrcp.pop %v1508
    %v1541 = vrcp.pop %v1517
    %v1542 = vrcp.pop %v1526
    %v1543 = vmul.f32 %v1320, %v1527
    %v1544 = vmul.f32 %v1322, %v1527
    %v1545 = vmul.f32 %v1324, %v1528
    %v1546 = vmul.f32 %v1326, %v1528
    %v1547 = vmul.f32 %v1328, %v1529
    %v1548 = vmul.f32 %v1330, %v1529
    %v1549 = vmul.f32 %v1332, %v1530
    %v1550 = vmul.f32 %v1334, %v1530
    %v1551 = vmul.f32 %v1336, %v1531
    %v1552 = vmul.f32 %v1338, %v1531
    %v1553 = vmul.f32 %v1340, %v1532
    %v1554 = vmul.f32 %v1342, %v1532
    %v1555 = vmul.f32 %v1344, %v1533
    %v1556 = vmul.f32 %v1346, %v1533
    %v1557 = vmul.f32 %v1348, %v1534
    %v1558 = vmul.f32 %v1350, %v1534
    %v1559 = vmul.f32 %v1352, %v1535
    %v1560 = vmul.f32 %v1354, %v1535
    %v1561 = vmul.f32 %v1356, %v1536
    %v1562 = vmul.f32 %v1358, %v1536
    %v1563 = vmul.f32 %v1360, %v1537
    %v1564 = vmul.f32 %v1362, %v1537
    %v1565 = vmul.f32 %v1364, %v1538
    %v1566 = vmul.f32 %v1366, %v1538
    %v1567 = vmul.f32 %v1368, %v1539
    %v1568 = vmul.f32 %v1370, %v1539
    %v1569 = vmul.f32 %v1372, %v1540
    %v1570 = vmul.f32 %v1374, %v1540
    %v1571 = vmul.f32 %v1376, %v1541
    %v1572 = vmul.f32 %v1378, %v1541
    %v1573 = vmul.f32 %v1380, %v1542
    %v1574 = vmul.f32 %v1382, %v1542
    %v1575 = vld [vmem:[#allocation14] sm:$0xff]
    %v1576 = vld [vmem:[#allocation14 + $0x8] sm:$0xff]
    %v1577 = vld [vmem:[#allocation14 + $0x10] sm:$0xff]
    %v1578 = vld [vmem:[#allocation14 + $0x18] sm:$0xff]
    %v1579 = vld [vmem:[#allocation14 + $0x20] sm:$0xff]
    %v1580 = vld [vmem:[#allocation14 + $0x28] sm:$0xff]
    %v1581 = vld [vmem:[#allocation14 + $0x30] sm:$0xff]
    %v1582 = vld [vmem:[#allocation14 + $0x38] sm:$0xff]
    %v1583 = vld [vmem:[#allocation14 + $0x40] sm:$0xff]
    %v1584 = vld [vmem:[#allocation14 + $0x48] sm:$0xff]
    %v1585 = vld [vmem:[#allocation14 + $0x50] sm:$0xff]
    %v1586 = vld [vmem:[#allocation14 + $0x58] sm:$0xff]
    %v1587 = vld [vmem:[#allocation14 + $0x60] sm:$0xff]
    %v1588 = vld [vmem:[#allocation14 + $0x68] sm:$0xff]
    %v1589 = vld [vmem:[#allocation14 + $0x70] sm:$0xff]
    %v1590 = vld [vmem:[#allocation14 + $0x78] sm:$0xff]
    %v1591 = vld [vmem:[#allocation14 + $0x80] sm:$0xff]
    %v1592 = vld [vmem:[#allocation14 + $0x88] sm:$0xff]
    %v1593 = vld [vmem:[#allocation14 + $0x90] sm:$0xff]
    %v1594 = vld [vmem:[#allocation14 + $0x98] sm:$0xff]
    %v1595 = vld [vmem:[#allocation14 + $0xa0] sm:$0xff]
    %v1596 = vld [vmem:[#allocation14 + $0xa8] sm:$0xff]
    %v1597 = vld [vmem:[#allocation14 + $0xb0] sm:$0xff]
    %v1598 = vld [vmem:[#allocation14 + $0xb8] sm:$0xff]
    %v1599 = vld [vmem:[#allocation14 + $0xc0] sm:$0xff]
    %v1600 = vld [vmem:[#allocation14 + $0xc8] sm:$0xff]
    %v1601 = vld [vmem:[#allocation14 + $0xd0] sm:$0xff]
    %v1602 = vld [vmem:[#allocation14 + $0xd8] sm:$0xff]
    %v1603 = vld [vmem:[#allocation14 + $0xe0] sm:$0xff]
    %v1604 = vld [vmem:[#allocation14 + $0xe8] sm:$0xff]
    %v1605 = vld [vmem:[#allocation14 + $0xf0] sm:$0xff]
    %v1606 = vld [vmem:[#allocation14 + $0xf8] sm:$0xff]
    %v1607 = vadd.f32 %v398, %v1575
    %v1608 = vadd.f32 %v399, %v1576
    %v1609 = vadd.f32 %v398, %v1577
    %v1610 = vadd.f32 %v399, %v1578
    %v1611 = vadd.f32 %v398, %v1579
    %v1612 = vadd.f32 %v399, %v1580
    %v1613 = vadd.f32 %v398, %v1581
    %v1614 = vadd.f32 %v399, %v1582
    %v1615 = vadd.f32 %v398, %v1583
    %v1616 = vadd.f32 %v399, %v1584
    %v1617 = vadd.f32 %v398, %v1585
    %v1618 = vadd.f32 %v399, %v1586
    %v1619 = vadd.f32 %v398, %v1587
    %v1620 = vadd.f32 %v399, %v1588
    %v1621 = vadd.f32 %v398, %v1589
    %v1622 = vadd.f32 %v399, %v1590
    %v1623 = vadd.f32 %v398, %v1591
    %v1624 = vadd.f32 %v399, %v1592
    %v1625 = vadd.f32 %v398, %v1593
    %v1626 = vadd.f32 %v399, %v1594
    %v1627 = vadd.f32 %v398, %v1595
    %v1628 = vadd.f32 %v399, %v1596
    %v1629 = vadd.f32 %v398, %v1597
    %v1630 = vadd.f32 %v399, %v1598
    %v1631 = vadd.f32 %v398, %v1599
    %v1632 = vadd.f32 %v399, %v1600
    %v1633 = vadd.f32 %v398, %v1601
    %v1634 = vadd.f32 %v399, %v1602
    %v1635 = vadd.f32 %v398, %v1603
    %v1636 = vadd.f32 %v399, %v1604
    %v1637 = vadd.f32 %v398, %v1605
    %v1638 = vadd.f32 %v399, %v1606
    %v1639 = vmul.f32 %v1543, %v1607
    %v1640 = vmul.f32 %v1544, %v1608
    %v1641 = vmul.f32 %v1545, %v1609
    %v1642 = vmul.f32 %v1546, %v1610
    %v1643 = vmul.f32 %v1547, %v1611
    %v1644 = vmul.f32 %v1548, %v1612
    %v1645 = vmul.f32 %v1549, %v1613
    %v1646 = vmul.f32 %v1550, %v1614
    %v1647 = vmul.f32 %v1551, %v1615
    %v1648 = vmul.f32 %v1552, %v1616
    %v1649 = vmul.f32 %v1553, %v1617
    %v1650 = vmul.f32 %v1554, %v1618
    %v1651 = vmul.f32 %v1555, %v1619
    %v1652 = vmul.f32 %v1556, %v1620
    %v1653 = vmul.f32 %v1557, %v1621
    %v1654 = vmul.f32 %v1558, %v1622
    %v1655 = vmul.f32 %v1559, %v1623
    %v1656 = vmul.f32 %v1560, %v1624
    %v1657 = vmul.f32 %v1561, %v1625
    %v1658 = vmul.f32 %v1562, %v1626
    %v1659 = vmul.f32 %v1563, %v1627
    %v1660 = vmul.f32 %v1564, %v1628
    %v1661 = vmul.f32 %v1565, %v1629
    %v1662 = vmul.f32 %v1566, %v1630
    %v1663 = vmul.f32 %v1567, %v1631
    %v1664 = vmul.f32 %v1568, %v1632
    %v1665 = vmul.f32 %v1569, %v1633
    %v1666 = vmul.f32 %v1570, %v1634
    %v1667 = vmul.f32 %v1571, %v1635
    %v1668 = vmul.f32 %v1572, %v1636
    %v1669 = vmul.f32 %v1573, %v1637
    %v1670 = vmul.f32 %v1574, %v1638
    %v1671 = vsel %vm1142, %v1639, 0.0
    %v1672 = vsel %vm1142, %v1640, 0.0
    %v1673 = vadd.f32 %v1671, %v1672
    %v1674 = vrot.slane %v1673, 4
    %v1675 = vadd.f32 %v1673, %v1674
    %v1676 = vrot.slane %v1675, 2
    %v1677 = vadd.f32 %v1675, %v1676
    %v1678 = vrot.slane %v1677, 1
    %v1679 = vadd.f32 %v1677, %v1678
    %v1680 = vsel %vm1142, %v1641, 0.0
    %v1681 = vsel %vm1142, %v1642, 0.0
    %v1682 = vadd.f32 %v1680, %v1681
    %v1683 = vrot.slane %v1682, 4
    %v1684 = vadd.f32 %v1682, %v1683
    %v1685 = vrot.slane %v1684, 2
    %v1686 = vadd.f32 %v1684, %v1685
    %v1687 = vrot.slane %v1686, 1
    %v1688 = vadd.f32 %v1686, %v1687
    %v1689 = vsel %vm1142, %v1643, 0.0
    %v1690 = vsel %vm1142, %v1644, 0.0
    %v1691 = vadd.f32 %v1689, %v1690
    %v1692 = vrot.slane %v1691, 4
    %v1693 = vadd.f32 %v1691, %v1692
    %v1694 = vrot.slane %v1693, 2
    %v1695 = vadd.f32 %v1693, %v1694
    %v1696 = vrot.slane %v1695, 1
    %v1697 = vadd.f32 %v1695, %v1696
    %v1698 = vsel %vm1142, %v1645, 0.0
    %v1699 = vsel %vm1142, %v1646, 0.0
    %v1700 = vadd.f32 %v1698, %v1699
    %v1701 = vrot.slane %v1700, 4
    %v1702 = vadd.f32 %v1700, %v1701
    %v1703 = vrot.slane %v1702, 2
    %v1704 = vadd.f32 %v1702, %v1703
    %v1705 = vrot.slane %v1704, 1
    %v1706 = vadd.f32 %v1704, %v1705
    %v1707 = vsel %vm1142, %v1647, 0.0
    %v1708 = vsel %vm1142, %v1648, 0.0
    %v1709 = vadd.f32 %v1707, %v1708
    %v1710 = vrot.slane %v1709, 4
    %v1711 = vadd.f32 %v1709, %v1710
    %v1712 = vrot.slane %v1711, 2
    %v1713 = vadd.f32 %v1711, %v1712
    %v1714 = vrot.slane %v1713, 1
    %v1715 = vadd.f32 %v1713, %v1714
    %v1716 = vsel %vm1142, %v1649, 0.0
    %v1717 = vsel %vm1142, %v1650, 0.0
    %v1718 = vadd.f32 %v1716, %v1717
    %v1719 = vrot.slane %v1718, 4
    %v1720 = vadd.f32 %v1718, %v1719
    %v1721 = vrot.slane %v1720, 2
    %v1722 = vadd.f32 %v1720, %v1721
    %v1723 = vrot.slane %v1722, 1
    %v1724 = vadd.f32 %v1722, %v1723
    %v1725 = vsel %vm1142, %v1651, 0.0
    %v1726 = vsel %vm1142, %v1652, 0.0
    %v1727 = vadd.f32 %v1725, %v1726
    %v1728 = vrot.slane %v1727, 4
    %v1729 = vadd.f32 %v1727, %v1728
    %v1730 = vrot.slane %v1729, 2
    %v1731 = vadd.f32 %v1729, %v1730
    %v1732 = vrot.slane %v1731, 1
    %v1733 = vadd.f32 %v1731, %v1732
    %v1734 = vsel %vm1142, %v1653, 0.0
    %v1735 = vsel %vm1142, %v1654, 0.0
    %v1736 = vadd.f32 %v1734, %v1735
    %v1737 = vrot.slane %v1736, 4
    %v1738 = vadd.f32 %v1736, %v1737
    %v1739 = vrot.slane %v1738, 2
    %v1740 = vadd.f32 %v1738, %v1739
    %v1741 = vrot.slane %v1740, 1
    %v1742 = vadd.f32 %v1740, %v1741
    %v1743 = vsel %vm1142, %v1655, 0.0
    %v1744 = vsel %vm1142, %v1656, 0.0
    %v1745 = vadd.f32 %v1743, %v1744
    %v1746 = vrot.slane %v1745, 4
    %v1747 = vadd.f32 %v1745, %v1746
    %v1748 = vrot.slane %v1747, 2
    %v1749 = vadd.f32 %v1747, %v1748
    %v1750 = vrot.slane %v1749, 1
    %v1751 = vadd.f32 %v1749, %v1750
    %v1752 = vsel %vm1142, %v1657, 0.0
    %v1753 = vsel %vm1142, %v1658, 0.0
    %v1754 = vadd.f32 %v1752, %v1753
    %v1755 = vrot.slane %v1754, 4
    %v1756 = vadd.f32 %v1754, %v1755
    %v1757 = vrot.slane %v1756, 2
    %v1758 = vadd.f32 %v1756, %v1757
    %v1759 = vrot.slane %v1758, 1
    %v1760 = vadd.f32 %v1758, %v1759
    %v1761 = vsel %vm1142, %v1659, 0.0
    %v1762 = vsel %vm1142, %v1660, 0.0
    %v1763 = vadd.f32 %v1761, %v1762
    %v1764 = vrot.slane %v1763, 4
    %v1765 = vadd.f32 %v1763, %v1764
    %v1766 = vrot.slane %v1765, 2
    %v1767 = vadd.f32 %v1765, %v1766
    %v1768 = vrot.slane %v1767, 1
    %v1769 = vadd.f32 %v1767, %v1768
    %v1770 = vsel %vm1142, %v1661, 0.0
    %v1771 = vsel %vm1142, %v1662, 0.0
    %v1772 = vadd.f32 %v1770, %v1771
    %v1773 = vrot.slane %v1772, 4
    %v1774 = vadd.f32 %v1772, %v1773
    %v1775 = vrot.slane %v1774, 2
    %v1776 = vadd.f32 %v1774, %v1775
    %v1777 = vrot.slane %v1776, 1
    %v1778 = vadd.f32 %v1776, %v1777
    %v1779 = vsel %vm1142, %v1663, 0.0
    %v1780 = vsel %vm1142, %v1664, 0.0
    %v1781 = vadd.f32 %v1779, %v1780
    %v1782 = vrot.slane %v1781, 4
    %v1783 = vadd.f32 %v1781, %v1782
    %v1784 = vrot.slane %v1783, 2
    %v1785 = vadd.f32 %v1783, %v1784
    %v1786 = vrot.slane %v1785, 1
    %v1787 = vadd.f32 %v1785, %v1786
    %v1788 = vsel %vm1142, %v1665, 0.0
    %v1789 = vsel %vm1142, %v1666, 0.0
    %v1790 = vadd.f32 %v1788, %v1789
    %v1791 = vrot.slane %v1790, 4
    %v1792 = vadd.f32 %v1790, %v1791
    %v1793 = vrot.slane %v1792, 2
    %v1794 = vadd.f32 %v1792, %v1793
    %v1795 = vrot.slane %v1794, 1
    %v1796 = vadd.f32 %v1794, %v1795
    %v1797 = vsel %vm1142, %v1667, 0.0
    %v1798 = vsel %vm1142, %v1668, 0.0
    %v1799 = vadd.f32 %v1797, %v1798
    %v1800 = vrot.slane %v1799, 4
    %v1801 = vadd.f32 %v1799, %v1800
    %v1802 = vrot.slane %v1801, 2
    %v1803 = vadd.f32 %v1801, %v1802
    %v1804 = vrot.slane %v1803, 1
    %v1805 = vadd.f32 %v1803, %v1804
    %v1806 = vsel %vm1142, %v1669, 0.0
    %v1807 = vsel %vm1142, %v1670, 0.0
    %v1808 = vadd.f32 %v1806, %v1807
    %v1809 = vrot.slane %v1808, 4
    %v1810 = vadd.f32 %v1808, %v1809
    %v1811 = vrot.slane %v1810, 2
    %v1812 = vadd.f32 %v1810, %v1811
    %v1813 = vrot.slane %v1812, 1
    %v1814 = vadd.f32 %v1812, %v1813
    %vm1831 = vcmask 1041409
    %v1832 = vsel %vm1831, %v1688, %v1679
    %vm1833 = vcmask 1042434
    %v1834 = vsel %vm1833, %v1697, %v1832
    %vm1835 = vcmask 1043459
    %v1836 = vsel %vm1835, %v1706, %v1834
    %vm1837 = vcmask 1044484
    %v1838 = vsel %vm1837, %v1715, %v1836
    %vm1839 = vcmask 1045509
    %v1840 = vsel %vm1839, %v1724, %v1838
    %vm1841 = vcmask 1046534
    %v1842 = vsel %vm1841, %v1733, %v1840
    %vm1843 = vcmask 1047559
    %v1844 = vsel %vm1843, %v1742, %v1842
    %v1845 = vsel %vm1831, %v1760, %v1751
    %v1846 = vsel %vm1833, %v1769, %v1845
    %v1847 = vsel %vm1835, %v1778, %v1846
    %v1848 = vsel %vm1837, %v1787, %v1847
    %v1849 = vsel %vm1839, %v1796, %v1848
    %v1850 = vsel %vm1841, %v1805, %v1849
    %v1851 = vsel %vm1843, %v1814, %v1850
    %1854 = vst.msk [vmem:[#allocation16] sm:$0xff] %vm1142, %v1844
    %1855 = vst.msk [vmem:[#allocation16 + $0x8] sm:$0xff] %vm1142, %v1851
    %s1856 = scalar_lea.vmem [#allocation14], 256
    %v1857 = vld [vmem:[%s1856] sm:$0xff]
    %v1858 = vld [vmem:[%s1856 + $0x8] sm:$0xff]
    %v1859 = vld [vmem:[%s1856 + $0x10] sm:$0xff]
    %v1860 = vld [vmem:[%s1856 + $0x18] sm:$0xff]
    %v1861 = vld [vmem:[%s1856 + $0x20] sm:$0xff]
    %v1862 = vld [vmem:[%s1856 + $0x28] sm:$0xff]
    %v1863 = vld [vmem:[%s1856 + $0x30] sm:$0xff]
    %v1864 = vld [vmem:[%s1856 + $0x38] sm:$0xff]
    %v1865 = vld [vmem:[%s1856 + $0x40] sm:$0xff]
    %v1866 = vld [vmem:[%s1856 + $0x48] sm:$0xff]
    %v1867 = vld [vmem:[%s1856 + $0x50] sm:$0xff]
    %v1868 = vld [vmem:[%s1856 + $0x58] sm:$0xff]
    %v1869 = vld [vmem:[%s1856 + $0x60] sm:$0xff]
    %v1870 = vld [vmem:[%s1856 + $0x68] sm:$0xff]
    %v1871 = vld [vmem:[%s1856 + $0x70] sm:$0xff]
    %v1872 = vld [vmem:[%s1856 + $0x78] sm:$0xff]
    %v1873 = vld [vmem:[%s1856 + $0x80] sm:$0xff]
    %v1874 = vld [vmem:[%s1856 + $0x88] sm:$0xff]
    %v1875 = vld [vmem:[%s1856 + $0x90] sm:$0xff]
    %v1876 = vld [vmem:[%s1856 + $0x98] sm:$0xff]
    %v1877 = vld [vmem:[%s1856 + $0xa0] sm:$0xff]
    %v1878 = vld [vmem:[%s1856 + $0xa8] sm:$0xff]
    %v1879 = vld [vmem:[%s1856 + $0xb0] sm:$0xff]
    %v1880 = vld [vmem:[%s1856 + $0xb8] sm:$0xff]
    %v1881 = vld [vmem:[%s1856 + $0xc0] sm:$0xff]
    %v1882 = vld [vmem:[%s1856 + $0xc8] sm:$0xff]
    %v1883 = vld [vmem:[%s1856 + $0xd0] sm:$0xff]
    %v1884 = vld [vmem:[%s1856 + $0xd8] sm:$0xff]
    %v1885 = vld [vmem:[%s1856 + $0xe0] sm:$0xff]
    %v1886 = vld [vmem:[%s1856 + $0xe8] sm:$0xff]
    %v1887 = vld [vmem:[%s1856 + $0xf0] sm:$0xff]
    %v1888 = vld [vmem:[%s1856 + $0xf8] sm:$0xff]
    %v1889 = vadd.f32 %v448, %v1857
    %v1890 = vadd.f32 %v449, %v1858
    %v1891 = vadd.f32 %v448, %v1859
    %v1892 = vadd.f32 %v449, %v1860
    %v1893 = vadd.f32 %v448, %v1861
    %v1894 = vadd.f32 %v449, %v1862
    %v1895 = vadd.f32 %v448, %v1863
    %v1896 = vadd.f32 %v449, %v1864
    %v1897 = vadd.f32 %v448, %v1865
    %v1898 = vadd.f32 %v449, %v1866
    %v1899 = vadd.f32 %v448, %v1867
    %v1900 = vadd.f32 %v449, %v1868
    %v1901 = vadd.f32 %v448, %v1869
    %v1902 = vadd.f32 %v449, %v1870
    %v1903 = vadd.f32 %v448, %v1871
    %v1904 = vadd.f32 %v449, %v1872
    %v1905 = vadd.f32 %v448, %v1873
    %v1906 = vadd.f32 %v449, %v1874
    %v1907 = vadd.f32 %v448, %v1875
    %v1908 = vadd.f32 %v449, %v1876
    %v1909 = vadd.f32 %v448, %v1877
    %v1910 = vadd.f32 %v449, %v1878
    %v1911 = vadd.f32 %v448, %v1879
    %v1912 = vadd.f32 %v449, %v1880
    %v1913 = vadd.f32 %v448, %v1881
    %v1914 = vadd.f32 %v449, %v1882
    %v1915 = vadd.f32 %v448, %v1883
    %v1916 = vadd.f32 %v449, %v1884
    %v1917 = vadd.f32 %v448, %v1885
    %v1918 = vadd.f32 %v449, %v1886
    %v1919 = vadd.f32 %v448, %v1887
    %v1920 = vadd.f32 %v449, %v1888
    %v1921 = vmul.f32 %v1543, %v1889
    %v1922 = vmul.f32 %v1544, %v1890
    %v1923 = vmul.f32 %v1545, %v1891
    %v1924 = vmul.f32 %v1546, %v1892
    %v1925 = vmul.f32 %v1547, %v1893
    %v1926 = vmul.f32 %v1548, %v1894
    %v1927 = vmul.f32 %v1549, %v1895
    %v1928 = vmul.f32 %v1550, %v1896
    %v1929 = vmul.f32 %v1551, %v1897
    %v1930 = vmul.f32 %v1552, %v1898
    %v1931 = vmul.f32 %v1553, %v1899
    %v1932 = vmul.f32 %v1554, %v1900
    %v1933 = vmul.f32 %v1555, %v1901
    %v1934 = vmul.f32 %v1556, %v1902
    %v1935 = vmul.f32 %v1557, %v1903
    %v1936 = vmul.f32 %v1558, %v1904
    %v1937 = vmul.f32 %v1559, %v1905
    %v1938 = vmul.f32 %v1560, %v1906
    %v1939 = vmul.f32 %v1561, %v1907
    %v1940 = vmul.f32 %v1562, %v1908
    %v1941 = vmul.f32 %v1563, %v1909
    %v1942 = vmul.f32 %v1564, %v1910
    %v1943 = vmul.f32 %v1565, %v1911
    %v1944 = vmul.f32 %v1566, %v1912
    %v1945 = vmul.f32 %v1567, %v1913
    %v1946 = vmul.f32 %v1568, %v1914
    %v1947 = vmul.f32 %v1569, %v1915
    %v1948 = vmul.f32 %v1570, %v1916
    %v1949 = vmul.f32 %v1571, %v1917
    %v1950 = vmul.f32 %v1572, %v1918
    %v1951 = vmul.f32 %v1573, %v1919
    %v1952 = vmul.f32 %v1574, %v1920
    %v1953 = vsel %vm1142, %v1921, 0.0
    %v1954 = vsel %vm1142, %v1922, 0.0
    %v1955 = vadd.f32 %v1953, %v1954
    %v1956 = vrot.slane %v1955, 4
    %v1957 = vadd.f32 %v1955, %v1956
    %v1958 = vrot.slane %v1957, 2
    %v1959 = vadd.f32 %v1957, %v1958
    %v1960 = vrot.slane %v1959, 1
    %v1961 = vadd.f32 %v1959, %v1960
    %v1962 = vsel %vm1142, %v1923, 0.0
    %v1963 = vsel %vm1142, %v1924, 0.0
    %v1964 = vadd.f32 %v1962, %v1963
    %v1965 = vrot.slane %v1964, 4
    %v1966 = vadd.f32 %v1964, %v1965
    %v1967 = vrot.slane %v1966, 2
    %v1968 = vadd.f32 %v1966, %v1967
    %v1969 = vrot.slane %v1968, 1
    %v1970 = vadd.f32 %v1968, %v1969
    %v1971 = vsel %vm1142, %v1925, 0.0
    %v1972 = vsel %vm1142, %v1926, 0.0
    %v1973 = vadd.f32 %v1971, %v1972
    %v1974 = vrot.slane %v1973, 4
    %v1975 = vadd.f32 %v1973, %v1974
    %v1976 = vrot.slane %v1975, 2
    %v1977 = vadd.f32 %v1975, %v1976
    %v1978 = vrot.slane %v1977, 1
    %v1979 = vadd.f32 %v1977, %v1978
    %v1980 = vsel %vm1142, %v1927, 0.0
    %v1981 = vsel %vm1142, %v1928, 0.0
    %v1982 = vadd.f32 %v1980, %v1981
    %v1983 = vrot.slane %v1982, 4
    %v1984 = vadd.f32 %v1982, %v1983
    %v1985 = vrot.slane %v1984, 2
    %v1986 = vadd.f32 %v1984, %v1985
    %v1987 = vrot.slane %v1986, 1
    %v1988 = vadd.f32 %v1986, %v1987
    %v1989 = vsel %vm1142, %v1929, 0.0
    %v1990 = vsel %vm1142, %v1930, 0.0
    %v1991 = vadd.f32 %v1989, %v1990
    %v1992 = vrot.slane %v1991, 4
    %v1993 = vadd.f32 %v1991, %v1992
    %v1994 = vrot.slane %v1993, 2
    %v1995 = vadd.f32 %v1993, %v1994
    %v1996 = vrot.slane %v1995, 1
    %v1997 = vadd.f32 %v1995, %v1996
    %v1998 = vsel %vm1142, %v1931, 0.0
    %v1999 = vsel %vm1142, %v1932, 0.0
    %v2000 = vadd.f32 %v1998, %v1999
    %v2001 = vrot.slane %v2000, 4
    %v2002 = vadd.f32 %v2000, %v2001
    %v2003 = vrot.slane %v2002, 2
    %v2004 = vadd.f32 %v2002, %v2003
    %v2005 = vrot.slane %v2004, 1
    %v2006 = vadd.f32 %v2004, %v2005
    %v2007 = vsel %vm1142, %v1933, 0.0
    %v2008 = vsel %vm1142, %v1934, 0.0
    %v2009 = vadd.f32 %v2007, %v2008
    %v2010 = vrot.slane %v2009, 4
    %v2011 = vadd.f32 %v2009, %v2010
    %v2012 = vrot.slane %v2011, 2
    %v2013 = vadd.f32 %v2011, %v2012
    %v2014 = vrot.slane %v2013, 1
    %v2015 = vadd.f32 %v2013, %v2014
    %v2016 = vsel %vm1142, %v1935, 0.0
    %v2017 = vsel %vm1142, %v1936, 0.0
    %v2018 = vadd.f32 %v2016, %v2017
    %v2019 = vrot.slane %v2018, 4
    %v2020 = vadd.f32 %v2018, %v2019
    %v2021 = vrot.slane %v2020, 2
    %v2022 = vadd.f32 %v2020, %v2021
    %v2023 = vrot.slane %v2022, 1
    %v2024 = vadd.f32 %v2022, %v2023
    %v2025 = vsel %vm1142, %v1937, 0.0
    %v2026 = vsel %vm1142, %v1938, 0.0
    %v2027 = vadd.f32 %v2025, %v2026
    %v2028 = vrot.slane %v2027, 4
    %v2029 = vadd.f32 %v2027, %v2028
    %v2030 = vrot.slane %v2029, 2
    %v2031 = vadd.f32 %v2029, %v2030
    %v2032 = vrot.slane %v2031, 1
    %v2033 = vadd.f32 %v2031, %v2032
    %v2034 = vsel %vm1142, %v1939, 0.0
    %v2035 = vsel %vm1142, %v1940, 0.0
    %v2036 = vadd.f32 %v2034, %v2035
    %v2037 = vrot.slane %v2036, 4
    %v2038 = vadd.f32 %v2036, %v2037
    %v2039 = vrot.slane %v2038, 2
    %v2040 = vadd.f32 %v2038, %v2039
    %v2041 = vrot.slane %v2040, 1
    %v2042 = vadd.f32 %v2040, %v2041
    %v2043 = vsel %vm1142, %v1941, 0.0
    %v2044 = vsel %vm1142, %v1942, 0.0
    %v2045 = vadd.f32 %v2043, %v2044
    %v2046 = vrot.slane %v2045, 4
    %v2047 = vadd.f32 %v2045, %v2046
    %v2048 = vrot.slane %v2047, 2
    %v2049 = vadd.f32 %v2047, %v2048
    %v2050 = vrot.slane %v2049, 1
    %v2051 = vadd.f32 %v2049, %v2050
    %v2052 = vsel %vm1142, %v1943, 0.0
    %v2053 = vsel %vm1142, %v1944, 0.0
    %v2054 = vadd.f32 %v2052, %v2053
    %v2055 = vrot.slane %v2054, 4
    %v2056 = vadd.f32 %v2054, %v2055
    %v2057 = vrot.slane %v2056, 2
    %v2058 = vadd.f32 %v2056, %v2057
    %v2059 = vrot.slane %v2058, 1
    %v2060 = vadd.f32 %v2058, %v2059
    %v2061 = vsel %vm1142, %v1945, 0.0
    %v2062 = vsel %vm1142, %v1946, 0.0
    %v2063 = vadd.f32 %v2061, %v2062
    %v2064 = vrot.slane %v2063, 4
    %v2065 = vadd.f32 %v2063, %v2064
    %v2066 = vrot.slane %v2065, 2
    %v2067 = vadd.f32 %v2065, %v2066
    %v2068 = vrot.slane %v2067, 1
    %v2069 = vadd.f32 %v2067, %v2068
    %v2070 = vsel %vm1142, %v1947, 0.0
    %v2071 = vsel %vm1142, %v1948, 0.0
    %v2072 = vadd.f32 %v2070, %v2071
    %v2073 = vrot.slane %v2072, 4
    %v2074 = vadd.f32 %v2072, %v2073
    %v2075 = vrot.slane %v2074, 2
    %v2076 = vadd.f32 %v2074, %v2075
    %v2077 = vrot.slane %v2076, 1
    %v2078 = vadd.f32 %v2076, %v2077
    %v2079 = vsel %vm1142, %v1949, 0.0
    %v2080 = vsel %vm1142, %v1950, 0.0
    %v2081 = vadd.f32 %v2079, %v2080
    %v2082 = vrot.slane %v2081, 4
    %v2083 = vadd.f32 %v2081, %v2082
    %v2084 = vrot.slane %v2083, 2
    %v2085 = vadd.f32 %v2083, %v2084
    %v2086 = vrot.slane %v2085, 1
    %v2087 = vadd.f32 %v2085, %v2086
    %v2088 = vsel %vm1142, %v1951, 0.0
    %v2089 = vsel %vm1142, %v1952, 0.0
    %v2090 = vadd.f32 %v2088, %v2089
    %v2091 = vrot.slane %v2090, 4
    %v2092 = vadd.f32 %v2090, %v2091
    %v2093 = vrot.slane %v2092, 2
    %v2094 = vadd.f32 %v2092, %v2093
    %v2095 = vrot.slane %v2094, 1
    %v2096 = vadd.f32 %v2094, %v2095
    %v2113 = vsel %vm1831, %v1970, %v1961
    %v2114 = vsel %vm1833, %v1979, %v2113
    %v2115 = vsel %vm1835, %v1988, %v2114
    %v2116 = vsel %vm1837, %v1997, %v2115
    %v2117 = vsel %vm1839, %v2006, %v2116
    %v2118 = vsel %vm1841, %v2015, %v2117
    %v2119 = vsel %vm1843, %v2024, %v2118
    %v2120 = vsel %vm1831, %v2042, %v2033
    %v2121 = vsel %vm1833, %v2051, %v2120
    %v2122 = vsel %vm1835, %v2060, %v2121
    %v2123 = vsel %vm1837, %v2069, %v2122
    %v2124 = vsel %vm1839, %v2078, %v2123
    %v2125 = vsel %vm1841, %v2087, %v2124
    %v2126 = vsel %vm1843, %v2096, %v2125
    %s2129 = scalar_lea.vmem [#allocation16], 16
    %2130 = vst.msk [vmem:[%s2129] sm:$0xff] %vm1142, %v2119
    %2131 = vst.msk [vmem:[%s2129 + $0x8] sm:$0xff] %vm1142, %v2126
    %s2132 = scalar_lea.vmem [#allocation14], 512
    %v2133 = vld [vmem:[%s2132] sm:$0xff]
    %v2134 = vld [vmem:[%s2132 + $0x8] sm:$0xff]
    %v2135 = vld [vmem:[%s2132 + $0x10] sm:$0xff]
    %v2136 = vld [vmem:[%s2132 + $0x18] sm:$0xff]
    %v2137 = vld [vmem:[%s2132 + $0x20] sm:$0xff]
    %v2138 = vld [vmem:[%s2132 + $0x28] sm:$0xff]
    %v2139 = vld [vmem:[%s2132 + $0x30] sm:$0xff]
    %v2140 = vld [vmem:[%s2132 + $0x38] sm:$0xff]
    %v2141 = vld [vmem:[%s2132 + $0x40] sm:$0xff]
    %v2142 = vld [vmem:[%s2132 + $0x48] sm:$0xff]
    %v2143 = vld [vmem:[%s2132 + $0x50] sm:$0xff]
    %v2144 = vld [vmem:[%s2132 + $0x58] sm:$0xff]
    %v2145 = vld [vmem:[%s2132 + $0x60] sm:$0xff]
    %v2146 = vld [vmem:[%s2132 + $0x68] sm:$0xff]
    %v2147 = vld [vmem:[%s2132 + $0x70] sm:$0xff]
    %v2148 = vld [vmem:[%s2132 + $0x78] sm:$0xff]
    %v2149 = vld [vmem:[%s2132 + $0x80] sm:$0xff]
    %v2150 = vld [vmem:[%s2132 + $0x88] sm:$0xff]
    %v2151 = vld [vmem:[%s2132 + $0x90] sm:$0xff]
    %v2152 = vld [vmem:[%s2132 + $0x98] sm:$0xff]
    %v2153 = vld [vmem:[%s2132 + $0xa0] sm:$0xff]
    %v2154 = vld [vmem:[%s2132 + $0xa8] sm:$0xff]
    %v2155 = vld [vmem:[%s2132 + $0xb0] sm:$0xff]
    %v2156 = vld [vmem:[%s2132 + $0xb8] sm:$0xff]
    %v2157 = vld [vmem:[%s2132 + $0xc0] sm:$0xff]
    %v2158 = vld [vmem:[%s2132 + $0xc8] sm:$0xff]
    %v2159 = vld [vmem:[%s2132 + $0xd0] sm:$0xff]
    %v2160 = vld [vmem:[%s2132 + $0xd8] sm:$0xff]
    %v2161 = vld [vmem:[%s2132 + $0xe0] sm:$0xff]
    %v2162 = vld [vmem:[%s2132 + $0xe8] sm:$0xff]
    %v2163 = vld [vmem:[%s2132 + $0xf0] sm:$0xff]
    %v2164 = vld [vmem:[%s2132 + $0xf8] sm:$0xff]
    %v2165 = vadd.f32 %v498, %v2133
    %v2166 = vadd.f32 %v499, %v2134
    %v2167 = vadd.f32 %v498, %v2135
    %v2168 = vadd.f32 %v499, %v2136
    %v2169 = vadd.f32 %v498, %v2137
    %v2170 = vadd.f32 %v499, %v2138
    %v2171 = vadd.f32 %v498, %v2139
    %v2172 = vadd.f32 %v499, %v2140
    %v2173 = vadd.f32 %v498, %v2141
    %v2174 = vadd.f32 %v499, %v2142
    %v2175 = vadd.f32 %v498, %v2143
    %v2176 = vadd.f32 %v499, %v2144
    %v2177 = vadd.f32 %v498, %v2145
    %v2178 = vadd.f32 %v499, %v2146
    %v2179 = vadd.f32 %v498, %v2147
    %v2180 = vadd.f32 %v499, %v2148
    %v2181 = vadd.f32 %v498, %v2149
    %v2182 = vadd.f32 %v499, %v2150
    %v2183 = vadd.f32 %v498, %v2151
    %v2184 = vadd.f32 %v499, %v2152
    %v2185 = vadd.f32 %v498, %v2153
    %v2186 = vadd.f32 %v499, %v2154
    %v2187 = vadd.f32 %v498, %v2155
    %v2188 = vadd.f32 %v499, %v2156
    %v2189 = vadd.f32 %v498, %v2157
    %v2190 = vadd.f32 %v499, %v2158
    %v2191 = vadd.f32 %v498, %v2159
    %v2192 = vadd.f32 %v499, %v2160
    %v2193 = vadd.f32 %v498, %v2161
    %v2194 = vadd.f32 %v499, %v2162
    %v2195 = vadd.f32 %v498, %v2163
    %v2196 = vadd.f32 %v499, %v2164
    %v2197 = vmul.f32 %v1543, %v2165
    %v2198 = vmul.f32 %v1544, %v2166
    %v2199 = vmul.f32 %v1545, %v2167
    %v2200 = vmul.f32 %v1546, %v2168
    %v2201 = vmul.f32 %v1547, %v2169
    %v2202 = vmul.f32 %v1548, %v2170
    %v2203 = vmul.f32 %v1549, %v2171
    %v2204 = vmul.f32 %v1550, %v2172
    %v2205 = vmul.f32 %v1551, %v2173
    %v2206 = vmul.f32 %v1552, %v2174
    %v2207 = vmul.f32 %v1553, %v2175
    %v2208 = vmul.f32 %v1554, %v2176
    %v2209 = vmul.f32 %v1555, %v2177
    %v2210 = vmul.f32 %v1556, %v2178
    %v2211 = vmul.f32 %v1557, %v2179
    %v2212 = vmul.f32 %v1558, %v2180
    %v2213 = vmul.f32 %v1559, %v2181
    %v2214 = vmul.f32 %v1560, %v2182
    %v2215 = vmul.f32 %v1561, %v2183
    %v2216 = vmul.f32 %v1562, %v2184
    %v2217 = vmul.f32 %v1563, %v2185
    %v2218 = vmul.f32 %v1564, %v2186
    %v2219 = vmul.f32 %v1565, %v2187
    %v2220 = vmul.f32 %v1566, %v2188
    %v2221 = vmul.f32 %v1567, %v2189
    %v2222 = vmul.f32 %v1568, %v2190
    %v2223 = vmul.f32 %v1569, %v2191
    %v2224 = vmul.f32 %v1570, %v2192
    %v2225 = vmul.f32 %v1571, %v2193
    %v2226 = vmul.f32 %v1572, %v2194
    %v2227 = vmul.f32 %v1573, %v2195
    %v2228 = vmul.f32 %v1574, %v2196
    %v2229 = vsel %vm1142, %v2197, 0.0
    %v2230 = vsel %vm1142, %v2198, 0.0
    %v2231 = vadd.f32 %v2229, %v2230
    %v2232 = vrot.slane %v2231, 4
    %v2233 = vadd.f32 %v2231, %v2232
    %v2234 = vrot.slane %v2233, 2
    %v2235 = vadd.f32 %v2233, %v2234
    %v2236 = vrot.slane %v2235, 1
    %v2237 = vadd.f32 %v2235, %v2236
    %v2238 = vsel %vm1142, %v2199, 0.0
    %v2239 = vsel %vm1142, %v2200, 0.0
    %v2240 = vadd.f32 %v2238, %v2239
    %v2241 = vrot.slane %v2240, 4
    %v2242 = vadd.f32 %v2240, %v2241
    %v2243 = vrot.slane %v2242, 2
    %v2244 = vadd.f32 %v2242, %v2243
    %v2245 = vrot.slane %v2244, 1
    %v2246 = vadd.f32 %v2244, %v2245
    %v2247 = vsel %vm1142, %v2201, 0.0
    %v2248 = vsel %vm1142, %v2202, 0.0
    %v2249 = vadd.f32 %v2247, %v2248
    %v2250 = vrot.slane %v2249, 4
    %v2251 = vadd.f32 %v2249, %v2250
    %v2252 = vrot.slane %v2251, 2
    %v2253 = vadd.f32 %v2251, %v2252
    %v2254 = vrot.slane %v2253, 1
    %v2255 = vadd.f32 %v2253, %v2254
    %v2256 = vsel %vm1142, %v2203, 0.0
    %v2257 = vsel %vm1142, %v2204, 0.0
    %v2258 = vadd.f32 %v2256, %v2257
    %v2259 = vrot.slane %v2258, 4
    %v2260 = vadd.f32 %v2258, %v2259
    %v2261 = vrot.slane %v2260, 2
    %v2262 = vadd.f32 %v2260, %v2261
    %v2263 = vrot.slane %v2262, 1
    %v2264 = vadd.f32 %v2262, %v2263
    %v2265 = vsel %vm1142, %v2205, 0.0
    %v2266 = vsel %vm1142, %v2206, 0.0
    %v2267 = vadd.f32 %v2265, %v2266
    %v2268 = vrot.slane %v2267, 4
    %v2269 = vadd.f32 %v2267, %v2268
    %v2270 = vrot.slane %v2269, 2
    %v2271 = vadd.f32 %v2269, %v2270
    %v2272 = vrot.slane %v2271, 1
    %v2273 = vadd.f32 %v2271, %v2272
    %v2274 = vsel %vm1142, %v2207, 0.0
    %v2275 = vsel %vm1142, %v2208, 0.0
    %v2276 = vadd.f32 %v2274, %v2275
    %v2277 = vrot.slane %v2276, 4
    %v2278 = vadd.f32 %v2276, %v2277
    %v2279 = vrot.slane %v2278, 2
    %v2280 = vadd.f32 %v2278, %v2279
    %v2281 = vrot.slane %v2280, 1
    %v2282 = vadd.f32 %v2280, %v2281
    %v2283 = vsel %vm1142, %v2209, 0.0
    %v2284 = vsel %vm1142, %v2210, 0.0
    %v2285 = vadd.f32 %v2283, %v2284
    %v2286 = vrot.slane %v2285, 4
    %v2287 = vadd.f32 %v2285, %v2286
    %v2288 = vrot.slane %v2287, 2
    %v2289 = vadd.f32 %v2287, %v2288
    %v2290 = vrot.slane %v2289, 1
    %v2291 = vadd.f32 %v2289, %v2290
    %v2292 = vsel %vm1142, %v2211, 0.0
    %v2293 = vsel %vm1142, %v2212, 0.0
    %v2294 = vadd.f32 %v2292, %v2293
    %v2295 = vrot.slane %v2294, 4
    %v2296 = vadd.f32 %v2294, %v2295
    %v2297 = vrot.slane %v2296, 2
    %v2298 = vadd.f32 %v2296, %v2297
    %v2299 = vrot.slane %v2298, 1
    %v2300 = vadd.f32 %v2298, %v2299
    %v2301 = vsel %vm1142, %v2213, 0.0
    %v2302 = vsel %vm1142, %v2214, 0.0
    %v2303 = vadd.f32 %v2301, %v2302
    %v2304 = vrot.slane %v2303, 4
    %v2305 = vadd.f32 %v2303, %v2304
    %v2306 = vrot.slane %v2305, 2
    %v2307 = vadd.f32 %v2305, %v2306
    %v2308 = vrot.slane %v2307, 1
    %v2309 = vadd.f32 %v2307, %v2308
    %v2310 = vsel %vm1142, %v2215, 0.0
    %v2311 = vsel %vm1142, %v2216, 0.0
    %v2312 = vadd.f32 %v2310, %v2311
    %v2313 = vrot.slane %v2312, 4
    %v2314 = vadd.f32 %v2312, %v2313
    %v2315 = vrot.slane %v2314, 2
    %v2316 = vadd.f32 %v2314, %v2315
    %v2317 = vrot.slane %v2316, 1
    %v2318 = vadd.f32 %v2316, %v2317
    %v2319 = vsel %vm1142, %v2217, 0.0
    %v2320 = vsel %vm1142, %v2218, 0.0
    %v2321 = vadd.f32 %v2319, %v2320
    %v2322 = vrot.slane %v2321, 4
    %v2323 = vadd.f32 %v2321, %v2322
    %v2324 = vrot.slane %v2323, 2
    %v2325 = vadd.f32 %v2323, %v2324
    %v2326 = vrot.slane %v2325, 1
    %v2327 = vadd.f32 %v2325, %v2326
    %v2328 = vsel %vm1142, %v2219, 0.0
    %v2329 = vsel %vm1142, %v2220, 0.0
    %v2330 = vadd.f32 %v2328, %v2329
    %v2331 = vrot.slane %v2330, 4
    %v2332 = vadd.f32 %v2330, %v2331
    %v2333 = vrot.slane %v2332, 2
    %v2334 = vadd.f32 %v2332, %v2333
    %v2335 = vrot.slane %v2334, 1
    %v2336 = vadd.f32 %v2334, %v2335
    %v2337 = vsel %vm1142, %v2221, 0.0
    %v2338 = vsel %vm1142, %v2222, 0.0
    %v2339 = vadd.f32 %v2337, %v2338
    %v2340 = vrot.slane %v2339, 4
    %v2341 = vadd.f32 %v2339, %v2340
    %v2342 = vrot.slane %v2341, 2
    %v2343 = vadd.f32 %v2341, %v2342
    %v2344 = vrot.slane %v2343, 1
    %v2345 = vadd.f32 %v2343, %v2344
    %v2346 = vsel %vm1142, %v2223, 0.0
    %v2347 = vsel %vm1142, %v2224, 0.0
    %v2348 = vadd.f32 %v2346, %v2347
    %v2349 = vrot.slane %v2348, 4
    %v2350 = vadd.f32 %v2348, %v2349
    %v2351 = vrot.slane %v2350, 2
    %v2352 = vadd.f32 %v2350, %v2351
    %v2353 = vrot.slane %v2352, 1
    %v2354 = vadd.f32 %v2352, %v2353
    %v2355 = vsel %vm1142, %v2225, 0.0
    %v2356 = vsel %vm1142, %v2226, 0.0
    %v2357 = vadd.f32 %v2355, %v2356
    %v2358 = vrot.slane %v2357, 4
    %v2359 = vadd.f32 %v2357, %v2358
    %v2360 = vrot.slane %v2359, 2
    %v2361 = vadd.f32 %v2359, %v2360
    %v2362 = vrot.slane %v2361, 1
    %v2363 = vadd.f32 %v2361, %v2362
    %v2364 = vsel %vm1142, %v2227, 0.0
    %v2365 = vsel %vm1142, %v2228, 0.0
    %v2366 = vadd.f32 %v2364, %v2365
    %v2367 = vrot.slane %v2366, 4
    %v2368 = vadd.f32 %v2366, %v2367
    %v2369 = vrot.slane %v2368, 2
    %v2370 = vadd.f32 %v2368, %v2369
    %v2371 = vrot.slane %v2370, 1
    %v2372 = vadd.f32 %v2370, %v2371
    %v2389 = vsel %vm1831, %v2246, %v2237
    %v2390 = vsel %vm1833, %v2255, %v2389
    %v2391 = vsel %vm1835, %v2264, %v2390
    %v2392 = vsel %vm1837, %v2273, %v2391
    %v2393 = vsel %vm1839, %v2282, %v2392
    %v2394 = vsel %vm1841, %v2291, %v2393
    %v2395 = vsel %vm1843, %v2300, %v2394
    %v2396 = vsel %vm1831, %v2318, %v2309
    %v2397 = vsel %vm1833, %v2327, %v2396
    %v2398 = vsel %vm1835, %v2336, %v2397
    %v2399 = vsel %vm1837, %v2345, %v2398
    %v2400 = vsel %vm1839, %v2354, %v2399
    %v2401 = vsel %vm1841, %v2363, %v2400
    %v2402 = vsel %vm1843, %v2372, %v2401
    %s2405 = scalar_lea.vmem [#allocation16], 32
    %2406 = vst.msk [vmem:[%s2405] sm:$0xff] %vm1142, %v2395
    %2407 = vst.msk [vmem:[%s2405 + $0x8] sm:$0xff] %vm1142, %v2402
    %s2408 = scalar_lea.vmem [#allocation14], 768
    %v2409 = vld [vmem:[%s2408] sm:$0xff]
    %v2410 = vld [vmem:[%s2408 + $0x8] sm:$0xff]
    %v2411 = vld [vmem:[%s2408 + $0x10] sm:$0xff]
    %v2412 = vld [vmem:[%s2408 + $0x18] sm:$0xff]
    %v2413 = vld [vmem:[%s2408 + $0x20] sm:$0xff]
    %v2414 = vld [vmem:[%s2408 + $0x28] sm:$0xff]
    %v2415 = vld [vmem:[%s2408 + $0x30] sm:$0xff]
    %v2416 = vld [vmem:[%s2408 + $0x38] sm:$0xff]
    %v2417 = vld [vmem:[%s2408 + $0x40] sm:$0xff]
    %v2418 = vld [vmem:[%s2408 + $0x48] sm:$0xff]
    %v2419 = vld [vmem:[%s2408 + $0x50] sm:$0xff]
    %v2420 = vld [vmem:[%s2408 + $0x58] sm:$0xff]
    %v2421 = vld [vmem:[%s2408 + $0x60] sm:$0xff]
    %v2422 = vld [vmem:[%s2408 + $0x68] sm:$0xff]
    %v2423 = vld [vmem:[%s2408 + $0x70] sm:$0xff]
    %v2424 = vld [vmem:[%s2408 + $0x78] sm:$0xff]
    %v2425 = vld [vmem:[%s2408 + $0x80] sm:$0xff]
    %v2426 = vld [vmem:[%s2408 + $0x88] sm:$0xff]
    %v2427 = vld [vmem:[%s2408 + $0x90] sm:$0xff]
    %v2428 = vld [vmem:[%s2408 + $0x98] sm:$0xff]
    %v2429 = vld [vmem:[%s2408 + $0xa0] sm:$0xff]
    %v2430 = vld [vmem:[%s2408 + $0xa8] sm:$0xff]
    %v2431 = vld [vmem:[%s2408 + $0xb0] sm:$0xff]
    %v2432 = vld [vmem:[%s2408 + $0xb8] sm:$0xff]
    %v2433 = vld [vmem:[%s2408 + $0xc0] sm:$0xff]
    %v2434 = vld [vmem:[%s2408 + $0xc8] sm:$0xff]
    %v2435 = vld [vmem:[%s2408 + $0xd0] sm:$0xff]
    %v2436 = vld [vmem:[%s2408 + $0xd8] sm:$0xff]
    %v2437 = vld [vmem:[%s2408 + $0xe0] sm:$0xff]
    %v2438 = vld [vmem:[%s2408 + $0xe8] sm:$0xff]
    %v2439 = vld [vmem:[%s2408 + $0xf0] sm:$0xff]
    %v2440 = vld [vmem:[%s2408 + $0xf8] sm:$0xff]
    %v2441 = vadd.f32 %v548, %v2409
    %v2442 = vadd.f32 %v549, %v2410
    %v2443 = vadd.f32 %v548, %v2411
    %v2444 = vadd.f32 %v549, %v2412
    %v2445 = vadd.f32 %v548, %v2413
    %v2446 = vadd.f32 %v549, %v2414
    %v2447 = vadd.f32 %v548, %v2415
    %v2448 = vadd.f32 %v549, %v2416
    %v2449 = vadd.f32 %v548, %v2417
    %v2450 = vadd.f32 %v549, %v2418
    %v2451 = vadd.f32 %v548, %v2419
    %v2452 = vadd.f32 %v549, %v2420
    %v2453 = vadd.f32 %v548, %v2421
    %v2454 = vadd.f32 %v549, %v2422
    %v2455 = vadd.f32 %v548, %v2423
    %v2456 = vadd.f32 %v549, %v2424
    %v2457 = vadd.f32 %v548, %v2425
    %v2458 = vadd.f32 %v549, %v2426
    %v2459 = vadd.f32 %v548, %v2427
    %v2460 = vadd.f32 %v549, %v2428
    %v2461 = vadd.f32 %v548, %v2429
    %v2462 = vadd.f32 %v549, %v2430
    %v2463 = vadd.f32 %v548, %v2431
    %v2464 = vadd.f32 %v549, %v2432
    %v2465 = vadd.f32 %v548, %v2433
    %v2466 = vadd.f32 %v549, %v2434
    %v2467 = vadd.f32 %v548, %v2435
    %v2468 = vadd.f32 %v549, %v2436
    %v2469 = vadd.f32 %v548, %v2437
    %v2470 = vadd.f32 %v549, %v2438
    %v2471 = vadd.f32 %v548, %v2439
    %v2472 = vadd.f32 %v549, %v2440
    %v2473 = vmul.f32 %v1543, %v2441
    %v2474 = vmul.f32 %v1544, %v2442
    %v2475 = vmul.f32 %v1545, %v2443
    %v2476 = vmul.f32 %v1546, %v2444
    %v2477 = vmul.f32 %v1547, %v2445
    %v2478 = vmul.f32 %v1548, %v2446
    %v2479 = vmul.f32 %v1549, %v2447
    %v2480 = vmul.f32 %v1550, %v2448
    %v2481 = vmul.f32 %v1551, %v2449
    %v2482 = vmul.f32 %v1552, %v2450
    %v2483 = vmul.f32 %v1553, %v2451
    %v2484 = vmul.f32 %v1554, %v2452
    %v2485 = vmul.f32 %v1555, %v2453
    %v2486 = vmul.f32 %v1556, %v2454
    %v2487 = vmul.f32 %v1557, %v2455
    %v2488 = vmul.f32 %v1558, %v2456
    %v2489 = vmul.f32 %v1559, %v2457
    %v2490 = vmul.f32 %v1560, %v2458
    %v2491 = vmul.f32 %v1561, %v2459
    %v2492 = vmul.f32 %v1562, %v2460
    %v2493 = vmul.f32 %v1563, %v2461
    %v2494 = vmul.f32 %v1564, %v2462
    %v2495 = vmul.f32 %v1565, %v2463
    %v2496 = vmul.f32 %v1566, %v2464
    %v2497 = vmul.f32 %v1567, %v2465
    %v2498 = vmul.f32 %v1568, %v2466
    %v2499 = vmul.f32 %v1569, %v2467
    %v2500 = vmul.f32 %v1570, %v2468
    %v2501 = vmul.f32 %v1571, %v2469
    %v2502 = vmul.f32 %v1572, %v2470
    %v2503 = vmul.f32 %v1573, %v2471
    %v2504 = vmul.f32 %v1574, %v2472
    %v2505 = vsel %vm1142, %v2473, 0.0
    %v2506 = vsel %vm1142, %v2474, 0.0
    %v2507 = vadd.f32 %v2505, %v2506
    %v2508 = vrot.slane %v2507, 4
    %v2509 = vadd.f32 %v2507, %v2508
    %v2510 = vrot.slane %v2509, 2
    %v2511 = vadd.f32 %v2509, %v2510
    %v2512 = vrot.slane %v2511, 1
    %v2513 = vadd.f32 %v2511, %v2512
    %v2514 = vsel %vm1142, %v2475, 0.0
    %v2515 = vsel %vm1142, %v2476, 0.0
    %v2516 = vadd.f32 %v2514, %v2515
    %v2517 = vrot.slane %v2516, 4
    %v2518 = vadd.f32 %v2516, %v2517
    %v2519 = vrot.slane %v2518, 2
    %v2520 = vadd.f32 %v2518, %v2519
    %v2521 = vrot.slane %v2520, 1
    %v2522 = vadd.f32 %v2520, %v2521
    %v2523 = vsel %vm1142, %v2477, 0.0
    %v2524 = vsel %vm1142, %v2478, 0.0
    %v2525 = vadd.f32 %v2523, %v2524
    %v2526 = vrot.slane %v2525, 4
    %v2527 = vadd.f32 %v2525, %v2526
    %v2528 = vrot.slane %v2527, 2
    %v2529 = vadd.f32 %v2527, %v2528
    %v2530 = vrot.slane %v2529, 1
    %v2531 = vadd.f32 %v2529, %v2530
    %v2532 = vsel %vm1142, %v2479, 0.0
    %v2533 = vsel %vm1142, %v2480, 0.0
    %v2534 = vadd.f32 %v2532, %v2533
    %v2535 = vrot.slane %v2534, 4
    %v2536 = vadd.f32 %v2534, %v2535
    %v2537 = vrot.slane %v2536, 2
    %v2538 = vadd.f32 %v2536, %v2537
    %v2539 = vrot.slane %v2538, 1
    %v2540 = vadd.f32 %v2538, %v2539
    %v2541 = vsel %vm1142, %v2481, 0.0
    %v2542 = vsel %vm1142, %v2482, 0.0
    %v2543 = vadd.f32 %v2541, %v2542
    %v2544 = vrot.slane %v2543, 4
    %v2545 = vadd.f32 %v2543, %v2544
    %v2546 = vrot.slane %v2545, 2
    %v2547 = vadd.f32 %v2545, %v2546
    %v2548 = vrot.slane %v2547, 1
    %v2549 = vadd.f32 %v2547, %v2548
    %v2550 = vsel %vm1142, %v2483, 0.0
    %v2551 = vsel %vm1142, %v2484, 0.0
    %v2552 = vadd.f32 %v2550, %v2551
    %v2553 = vrot.slane %v2552, 4
    %v2554 = vadd.f32 %v2552, %v2553
    %v2555 = vrot.slane %v2554, 2
    %v2556 = vadd.f32 %v2554, %v2555
    %v2557 = vrot.slane %v2556, 1
    %v2558 = vadd.f32 %v2556, %v2557
    %v2559 = vsel %vm1142, %v2485, 0.0
    %v2560 = vsel %vm1142, %v2486, 0.0
    %v2561 = vadd.f32 %v2559, %v2560
    %v2562 = vrot.slane %v2561, 4
    %v2563 = vadd.f32 %v2561, %v2562
    %v2564 = vrot.slane %v2563, 2
    %v2565 = vadd.f32 %v2563, %v2564
    %v2566 = vrot.slane %v2565, 1
    %v2567 = vadd.f32 %v2565, %v2566
    %v2568 = vsel %vm1142, %v2487, 0.0
    %v2569 = vsel %vm1142, %v2488, 0.0
    %v2570 = vadd.f32 %v2568, %v2569
    %v2571 = vrot.slane %v2570, 4
    %v2572 = vadd.f32 %v2570, %v2571
    %v2573 = vrot.slane %v2572, 2
    %v2574 = vadd.f32 %v2572, %v2573
    %v2575 = vrot.slane %v2574, 1
    %v2576 = vadd.f32 %v2574, %v2575
    %v2577 = vsel %vm1142, %v2489, 0.0
    %v2578 = vsel %vm1142, %v2490, 0.0
    %v2579 = vadd.f32 %v2577, %v2578
    %v2580 = vrot.slane %v2579, 4
    %v2581 = vadd.f32 %v2579, %v2580
    %v2582 = vrot.slane %v2581, 2
    %v2583 = vadd.f32 %v2581, %v2582
    %v2584 = vrot.slane %v2583, 1
    %v2585 = vadd.f32 %v2583, %v2584
    %v2586 = vsel %vm1142, %v2491, 0.0
    %v2587 = vsel %vm1142, %v2492, 0.0
    %v2588 = vadd.f32 %v2586, %v2587
    %v2589 = vrot.slane %v2588, 4
    %v2590 = vadd.f32 %v2588, %v2589
    %v2591 = vrot.slane %v2590, 2
    %v2592 = vadd.f32 %v2590, %v2591
    %v2593 = vrot.slane %v2592, 1
    %v2594 = vadd.f32 %v2592, %v2593
    %v2595 = vsel %vm1142, %v2493, 0.0
    %v2596 = vsel %vm1142, %v2494, 0.0
    %v2597 = vadd.f32 %v2595, %v2596
    %v2598 = vrot.slane %v2597, 4
    %v2599 = vadd.f32 %v2597, %v2598
    %v2600 = vrot.slane %v2599, 2
    %v2601 = vadd.f32 %v2599, %v2600
    %v2602 = vrot.slane %v2601, 1
    %v2603 = vadd.f32 %v2601, %v2602
    %v2604 = vsel %vm1142, %v2495, 0.0
    %v2605 = vsel %vm1142, %v2496, 0.0
    %v2606 = vadd.f32 %v2604, %v2605
    %v2607 = vrot.slane %v2606, 4
    %v2608 = vadd.f32 %v2606, %v2607
    %v2609 = vrot.slane %v2608, 2
    %v2610 = vadd.f32 %v2608, %v2609
    %v2611 = vrot.slane %v2610, 1
    %v2612 = vadd.f32 %v2610, %v2611
    %v2613 = vsel %vm1142, %v2497, 0.0
    %v2614 = vsel %vm1142, %v2498, 0.0
    %v2615 = vadd.f32 %v2613, %v2614
    %v2616 = vrot.slane %v2615, 4
    %v2617 = vadd.f32 %v2615, %v2616
    %v2618 = vrot.slane %v2617, 2
    %v2619 = vadd.f32 %v2617, %v2618
    %v2620 = vrot.slane %v2619, 1
    %v2621 = vadd.f32 %v2619, %v2620
    %v2622 = vsel %vm1142, %v2499, 0.0
    %v2623 = vsel %vm1142, %v2500, 0.0
    %v2624 = vadd.f32 %v2622, %v2623
    %v2625 = vrot.slane %v2624, 4
    %v2626 = vadd.f32 %v2624, %v2625
    %v2627 = vrot.slane %v2626, 2
    %v2628 = vadd.f32 %v2626, %v2627
    %v2629 = vrot.slane %v2628, 1
    %v2630 = vadd.f32 %v2628, %v2629
    %v2631 = vsel %vm1142, %v2501, 0.0
    %v2632 = vsel %vm1142, %v2502, 0.0
    %v2633 = vadd.f32 %v2631, %v2632
    %v2634 = vrot.slane %v2633, 4
    %v2635 = vadd.f32 %v2633, %v2634
    %v2636 = vrot.slane %v2635, 2
    %v2637 = vadd.f32 %v2635, %v2636
    %v2638 = vrot.slane %v2637, 1
    %v2639 = vadd.f32 %v2637, %v2638
    %v2640 = vsel %vm1142, %v2503, 0.0
    %v2641 = vsel %vm1142, %v2504, 0.0
    %v2642 = vadd.f32 %v2640, %v2641
    %v2643 = vrot.slane %v2642, 4
    %v2644 = vadd.f32 %v2642, %v2643
    %v2645 = vrot.slane %v2644, 2
    %v2646 = vadd.f32 %v2644, %v2645
    %v2647 = vrot.slane %v2646, 1
    %v2648 = vadd.f32 %v2646, %v2647
    %v2665 = vsel %vm1831, %v2522, %v2513
    %v2666 = vsel %vm1833, %v2531, %v2665
    %v2667 = vsel %vm1835, %v2540, %v2666
    %v2668 = vsel %vm1837, %v2549, %v2667
    %v2669 = vsel %vm1839, %v2558, %v2668
    %v2670 = vsel %vm1841, %v2567, %v2669
    %v2671 = vsel %vm1843, %v2576, %v2670
    %v2672 = vsel %vm1831, %v2594, %v2585
    %v2673 = vsel %vm1833, %v2603, %v2672
    %v2674 = vsel %vm1835, %v2612, %v2673
    %v2675 = vsel %vm1837, %v2621, %v2674
    %v2676 = vsel %vm1839, %v2630, %v2675
    %v2677 = vsel %vm1841, %v2639, %v2676
    %v2678 = vsel %vm1843, %v2648, %v2677
    %s2681 = scalar_lea.vmem [#allocation16], 48
    %2682 = vst.msk [vmem:[%s2681] sm:$0xff] %vm1142, %v2671
    %2683 = vst.msk [vmem:[%s2681 + $0x8] sm:$0xff] %vm1142, %v2678
    %s2684 = sld [smem:[#allocation7 + $0x40]]
    %v2685 = vstv %s2684
    %v2686 = vmul.f32 %v127, %v2685
    %v2687 = vmul.f32 %v128, %v2685
    %s2688 = sld [smem:[#allocation7 + $0x41]]
    %v2689 = vstv %s2688
    %v2690 = vmul.f32 %v130, %v2689
    %v2691 = vmul.f32 %v131, %v2689
    %v2692 = vadd.f32 %v2686, %v2690
    %v2693 = vadd.f32 %v2687, %v2691
    %s2694 = sld [smem:[#allocation7 + $0x42]]
    %v2695 = vstv %s2694
    %v2696 = vmul.f32 %v133, %v2695
    %v2697 = vmul.f32 %v134, %v2695
    %v2698 = vadd.f32 %v2692, %v2696
    %v2699 = vadd.f32 %v2693, %v2697
    %s2700 = sld [smem:[#allocation7 + $0x43]]
    %v2701 = vstv %s2700
    %v2702 = vmul.f32 %v136, %v2701
    %v2703 = vmul.f32 %v137, %v2701
    %v2704 = vadd.f32 %v2698, %v2702
    %v2705 = vadd.f32 %v2699, %v2703
    %s2706 = sld [smem:[#allocation7 + $0x44]]
    %v2707 = vstv %s2706
    %v2708 = vmul.f32 %v139, %v2707
    %v2709 = vmul.f32 %v140, %v2707
    %v2710 = vadd.f32 %v2704, %v2708
    %v2711 = vadd.f32 %v2705, %v2709
    %s2712 = sld [smem:[#allocation7 + $0x45]]
    %v2713 = vstv %s2712
    %v2714 = vmul.f32 %v142, %v2713
    %v2715 = vmul.f32 %v143, %v2713
    %v2716 = vadd.f32 %v2710, %v2714
    %v2717 = vadd.f32 %v2711, %v2715
    %s2718 = sld [smem:[#allocation7 + $0x46]]
    %v2719 = vstv %s2718
    %v2720 = vmul.f32 %v145, %v2719
    %v2721 = vmul.f32 %v146, %v2719
    %v2722 = vadd.f32 %v2716, %v2720
    %v2723 = vadd.f32 %v2717, %v2721
    %s2724 = sld [smem:[#allocation7 + $0x47]]
    %v2725 = vstv %s2724
    %v2726 = vmul.f32 %v148, %v2725
    %v2727 = vmul.f32 %v149, %v2725
    %v2728 = vadd.f32 %v2722, %v2726
    %v2729 = vadd.f32 %v2723, %v2727
    %s2730 = sld [smem:[#allocation8 + $0x8]]
    %v2731 = vstv %s2730
    %v2732 = vadd.f32 %v2728, %v2731
    %v2733 = vadd.f32 %v2729, %v2731
    %s2734 = sld [smem:[#allocation7 + $0x48]]
    %v2735 = vstv %s2734
    %v2736 = vmul.f32 %v127, %v2735
    %v2737 = vmul.f32 %v128, %v2735
    %s2738 = sld [smem:[#allocation7 + $0x49]]
    %v2739 = vstv %s2738
    %v2740 = vmul.f32 %v130, %v2739
    %v2741 = vmul.f32 %v131, %v2739
    %v2742 = vadd.f32 %v2736, %v2740
    %v2743 = vadd.f32 %v2737, %v2741
    %s2744 = sld [smem:[#allocation7 + $0x4a]]
    %v2745 = vstv %s2744
    %v2746 = vmul.f32 %v133, %v2745
    %v2747 = vmul.f32 %v134, %v2745
    %v2748 = vadd.f32 %v2742, %v2746
    %v2749 = vadd.f32 %v2743, %v2747
    %s2750 = sld [smem:[#allocation7 + $0x4b]]
    %v2751 = vstv %s2750
    %v2752 = vmul.f32 %v136, %v2751
    %v2753 = vmul.f32 %v137, %v2751
    %v2754 = vadd.f32 %v2748, %v2752
    %v2755 = vadd.f32 %v2749, %v2753
    %s2756 = sld [smem:[#allocation7 + $0x4c]]
    %v2757 = vstv %s2756
    %v2758 = vmul.f32 %v139, %v2757
    %v2759 = vmul.f32 %v140, %v2757
    %v2760 = vadd.f32 %v2754, %v2758
    %v2761 = vadd.f32 %v2755, %v2759
    %s2762 = sld [smem:[#allocation7 + $0x4d]]
    %v2763 = vstv %s2762
    %v2764 = vmul.f32 %v142, %v2763
    %v2765 = vmul.f32 %v143, %v2763
    %v2766 = vadd.f32 %v2760, %v2764
    %v2767 = vadd.f32 %v2761, %v2765
    %s2768 = sld [smem:[#allocation7 + $0x4e]]
    %v2769 = vstv %s2768
    %v2770 = vmul.f32 %v145, %v2769
    %v2771 = vmul.f32 %v146, %v2769
    %v2772 = vadd.f32 %v2766, %v2770
    %v2773 = vadd.f32 %v2767, %v2771
    %s2774 = sld [smem:[#allocation7 + $0x4f]]
    %v2775 = vstv %s2774
    %v2776 = vmul.f32 %v148, %v2775
    %v2777 = vmul.f32 %v149, %v2775
    %v2778 = vadd.f32 %v2772, %v2776
    %v2779 = vadd.f32 %v2773, %v2777
    %s2780 = sld [smem:[#allocation8 + $0x9]]
    %v2781 = vstv %s2780
    %v2782 = vadd.f32 %v2778, %v2781
    %v2783 = vadd.f32 %v2779, %v2781
    %s2784 = sld [smem:[#allocation7 + $0x50]]
    %v2785 = vstv %s2784
    %v2786 = vmul.f32 %v127, %v2785
    %v2787 = vmul.f32 %v128, %v2785
    %s2788 = sld [smem:[#allocation7 + $0x51]]
    %v2789 = vstv %s2788
    %v2790 = vmul.f32 %v130, %v2789
    %v2791 = vmul.f32 %v131, %v2789
    %v2792 = vadd.f32 %v2786, %v2790
    %v2793 = vadd.f32 %v2787, %v2791
    %s2794 = sld [smem:[#allocation7 + $0x52]]
    %v2795 = vstv %s2794
    %v2796 = vmul.f32 %v133, %v2795
    %v2797 = vmul.f32 %v134, %v2795
    %v2798 = vadd.f32 %v2792, %v2796
    %v2799 = vadd.f32 %v2793, %v2797
    %s2800 = sld [smem:[#allocation7 + $0x53]]
    %v2801 = vstv %s2800
    %v2802 = vmul.f32 %v136, %v2801
    %v2803 = vmul.f32 %v137, %v2801
    %v2804 = vadd.f32 %v2798, %v2802
    %v2805 = vadd.f32 %v2799, %v2803
    %s2806 = sld [smem:[#allocation7 + $0x54]]
    %v2807 = vstv %s2806
    %v2808 = vmul.f32 %v139, %v2807
    %v2809 = vmul.f32 %v140, %v2807
    %v2810 = vadd.f32 %v2804, %v2808
    %v2811 = vadd.f32 %v2805, %v2809
    %s2812 = sld [smem:[#allocation7 + $0x55]]
    %v2813 = vstv %s2812
    %v2814 = vmul.f32 %v142, %v2813
    %v2815 = vmul.f32 %v143, %v2813
    %v2816 = vadd.f32 %v2810, %v2814
    %v2817 = vadd.f32 %v2811, %v2815
    %s2818 = sld [smem:[#allocation7 + $0x56]]
    %v2819 = vstv %s2818
    %v2820 = vmul.f32 %v145, %v2819
    %v2821 = vmul.f32 %v146, %v2819
    %v2822 = vadd.f32 %v2816, %v2820
    %v2823 = vadd.f32 %v2817, %v2821
    %s2824 = sld [smem:[#allocation7 + $0x57]]
    %v2825 = vstv %s2824
    %v2826 = vmul.f32 %v148, %v2825
    %v2827 = vmul.f32 %v149, %v2825
    %v2828 = vadd.f32 %v2822, %v2826
    %v2829 = vadd.f32 %v2823, %v2827
    %s2830 = sld [smem:[#allocation8 + $0xa]]
    %v2831 = vstv %s2830
    %v2832 = vadd.f32 %v2828, %v2831
    %v2833 = vadd.f32 %v2829, %v2831
    %s2834 = sld [smem:[#allocation7 + $0x58]]
    %v2835 = vstv %s2834
    %v2836 = vmul.f32 %v127, %v2835
    %v2837 = vmul.f32 %v128, %v2835
    %s2838 = sld [smem:[#allocation7 + $0x59]]
    %v2839 = vstv %s2838
    %v2840 = vmul.f32 %v130, %v2839
    %v2841 = vmul.f32 %v131, %v2839
    %v2842 = vadd.f32 %v2836, %v2840
    %v2843 = vadd.f32 %v2837, %v2841
    %s2844 = sld [smem:[#allocation7 + $0x5a]]
    %v2845 = vstv %s2844
    %v2846 = vmul.f32 %v133, %v2845
    %v2847 = vmul.f32 %v134, %v2845
    %v2848 = vadd.f32 %v2842, %v2846
    %v2849 = vadd.f32 %v2843, %v2847
    %s2850 = sld [smem:[#allocation7 + $0x5b]]
    %v2851 = vstv %s2850
    %v2852 = vmul.f32 %v136, %v2851
    %v2853 = vmul.f32 %v137, %v2851
    %v2854 = vadd.f32 %v2848, %v2852
    %v2855 = vadd.f32 %v2849, %v2853
    %s2856 = sld [smem:[#allocation7 + $0x5c]]
    %v2857 = vstv %s2856
    %v2858 = vmul.f32 %v139, %v2857
    %v2859 = vmul.f32 %v140, %v2857
    %v2860 = vadd.f32 %v2854, %v2858
    %v2861 = vadd.f32 %v2855, %v2859
    %s2862 = sld [smem:[#allocation7 + $0x5d]]
    %v2863 = vstv %s2862
    %v2864 = vmul.f32 %v142, %v2863
    %v2865 = vmul.f32 %v143, %v2863
    %v2866 = vadd.f32 %v2860, %v2864
    %v2867 = vadd.f32 %v2861, %v2865
    %s2868 = sld [smem:[#allocation7 + $0x5e]]
    %v2869 = vstv %s2868
    %v2870 = vmul.f32 %v145, %v2869
    %v2871 = vmul.f32 %v146, %v2869
    %v2872 = vadd.f32 %v2866, %v2870
    %v2873 = vadd.f32 %v2867, %v2871
    %s2874 = sld [smem:[#allocation7 + $0x5f]]
    %v2875 = vstv %s2874
    %v2876 = vmul.f32 %v148, %v2875
    %v2877 = vmul.f32 %v149, %v2875
    %v2878 = vadd.f32 %v2872, %v2876
    %v2879 = vadd.f32 %v2873, %v2877
    %s2880 = sld [smem:[#allocation8 + $0xb]]
    %v2881 = vstv %s2880
    %v2882 = vadd.f32 %v2878, %v2881
    %v2883 = vadd.f32 %v2879, %v2881
    %s2884 = sld [smem:[#allocation7 + $0x60]]
    %v2885 = vstv %s2884
    %v2886 = vmul.f32 %v127, %v2885
    %v2887 = vmul.f32 %v128, %v2885
    %s2888 = sld [smem:[#allocation7 + $0x61]]
    %v2889 = vstv %s2888
    %v2890 = vmul.f32 %v130, %v2889
    %v2891 = vmul.f32 %v131, %v2889
    %v2892 = vadd.f32 %v2886, %v2890
    %v2893 = vadd.f32 %v2887, %v2891
    %s2894 = sld [smem:[#allocation7 + $0x62]]
    %v2895 = vstv %s2894
    %v2896 = vmul.f32 %v133, %v2895
    %v2897 = vmul.f32 %v134, %v2895
    %v2898 = vadd.f32 %v2892, %v2896
    %v2899 = vadd.f32 %v2893, %v2897
    %s2900 = sld [smem:[#allocation7 + $0x63]]
    %v2901 = vstv %s2900
    %v2902 = vmul.f32 %v136, %v2901
    %v2903 = vmul.f32 %v137, %v2901
    %v2904 = vadd.f32 %v2898, %v2902
    %v2905 = vadd.f32 %v2899, %v2903
    %s2906 = sld [smem:[#allocation7 + $0x64]]
    %v2907 = vstv %s2906
    %v2908 = vmul.f32 %v139, %v2907
    %v2909 = vmul.f32 %v140, %v2907
    %v2910 = vadd.f32 %v2904, %v2908
    %v2911 = vadd.f32 %v2905, %v2909
    %s2912 = sld [smem:[#allocation7 + $0x65]]
    %v2913 = vstv %s2912
    %v2914 = vmul.f32 %v142, %v2913
    %v2915 = vmul.f32 %v143, %v2913
    %v2916 = vadd.f32 %v2910, %v2914
    %v2917 = vadd.f32 %v2911, %v2915
    %s2918 = sld [smem:[#allocation7 + $0x66]]
    %v2919 = vstv %s2918
    %v2920 = vmul.f32 %v145, %v2919
    %v2921 = vmul.f32 %v146, %v2919
    %v2922 = vadd.f32 %v2916, %v2920
    %v2923 = vadd.f32 %v2917, %v2921
    %s2924 = sld [smem:[#allocation7 + $0x67]]
    %v2925 = vstv %s2924
    %v2926 = vmul.f32 %v148, %v2925
    %v2927 = vmul.f32 %v149, %v2925
    %v2928 = vadd.f32 %v2922, %v2926
    %v2929 = vadd.f32 %v2923, %v2927
    %s2930 = sld [smem:[#allocation8 + $0xc]]
    %v2931 = vstv %s2930
    %v2932 = vadd.f32 %v2928, %v2931
    %v2933 = vadd.f32 %v2929, %v2931
    %s2934 = sld [smem:[#allocation7 + $0x68]]
    %v2935 = vstv %s2934
    %v2936 = vmul.f32 %v127, %v2935
    %v2937 = vmul.f32 %v128, %v2935
    %s2938 = sld [smem:[#allocation7 + $0x69]]
    %v2939 = vstv %s2938
    %v2940 = vmul.f32 %v130, %v2939
    %v2941 = vmul.f32 %v131, %v2939
    %v2942 = vadd.f32 %v2936, %v2940
    %v2943 = vadd.f32 %v2937, %v2941
    %s2944 = sld [smem:[#allocation7 + $0x6a]]
    %v2945 = vstv %s2944
    %v2946 = vmul.f32 %v133, %v2945
    %v2947 = vmul.f32 %v134, %v2945
    %v2948 = vadd.f32 %v2942, %v2946
    %v2949 = vadd.f32 %v2943, %v2947
    %s2950 = sld [smem:[#allocation7 + $0x6b]]
    %v2951 = vstv %s2950
    %v2952 = vmul.f32 %v136, %v2951
    %v2953 = vmul.f32 %v137, %v2951
    %v2954 = vadd.f32 %v2948, %v2952
    %v2955 = vadd.f32 %v2949, %v2953
    %s2956 = sld [smem:[#allocation7 + $0x6c]]
    %v2957 = vstv %s2956
    %v2958 = vmul.f32 %v139, %v2957
    %v2959 = vmul.f32 %v140, %v2957
    %v2960 = vadd.f32 %v2954, %v2958
    %v2961 = vadd.f32 %v2955, %v2959
    %s2962 = sld [smem:[#allocation7 + $0x6d]]
    %v2963 = vstv %s2962
    %v2964 = vmul.f32 %v142, %v2963
    %v2965 = vmul.f32 %v143, %v2963
    %v2966 = vadd.f32 %v2960, %v2964
    %v2967 = vadd.f32 %v2961, %v2965
    %s2968 = sld [smem:[#allocation7 + $0x6e]]
    %v2969 = vstv %s2968
    %v2970 = vmul.f32 %v145, %v2969
    %v2971 = vmul.f32 %v146, %v2969
    %v2972 = vadd.f32 %v2966, %v2970
    %v2973 = vadd.f32 %v2967, %v2971
    %s2974 = sld [smem:[#allocation7 + $0x6f]]
    %v2975 = vstv %s2974
    %v2976 = vmul.f32 %v148, %v2975
    %v2977 = vmul.f32 %v149, %v2975
    %v2978 = vadd.f32 %v2972, %v2976
    %v2979 = vadd.f32 %v2973, %v2977
    %s2980 = sld [smem:[#allocation8 + $0xd]]
    %v2981 = vstv %s2980
    %v2982 = vadd.f32 %v2978, %v2981
    %v2983 = vadd.f32 %v2979, %v2981
    %s2984 = sld [smem:[#allocation7 + $0x70]]
    %v2985 = vstv %s2984
    %v2986 = vmul.f32 %v127, %v2985
    %v2987 = vmul.f32 %v128, %v2985
    %s2988 = sld [smem:[#allocation7 + $0x71]]
    %v2989 = vstv %s2988
    %v2990 = vmul.f32 %v130, %v2989
    %v2991 = vmul.f32 %v131, %v2989
    %v2992 = vadd.f32 %v2986, %v2990
    %v2993 = vadd.f32 %v2987, %v2991
    %s2994 = sld [smem:[#allocation7 + $0x72]]
    %v2995 = vstv %s2994
    %v2996 = vmul.f32 %v133, %v2995
    %v2997 = vmul.f32 %v134, %v2995
    %v2998 = vadd.f32 %v2992, %v2996
    %v2999 = vadd.f32 %v2993, %v2997
    %s3000 = sld [smem:[#allocation7 + $0x73]]
    %v3001 = vstv %s3000
    %v3002 = vmul.f32 %v136, %v3001
    %v3003 = vmul.f32 %v137, %v3001
    %v3004 = vadd.f32 %v2998, %v3002
    %v3005 = vadd.f32 %v2999, %v3003
    %s3006 = sld [smem:[#allocation7 + $0x74]]
    %v3007 = vstv %s3006
    %v3008 = vmul.f32 %v139, %v3007
    %v3009 = vmul.f32 %v140, %v3007
    %v3010 = vadd.f32 %v3004, %v3008
    %v3011 = vadd.f32 %v3005, %v3009
    %s3012 = sld [smem:[#allocation7 + $0x75]]
    %v3013 = vstv %s3012
    %v3014 = vmul.f32 %v142, %v3013
    %v3015 = vmul.f32 %v143, %v3013
    %v3016 = vadd.f32 %v3010, %v3014
    %v3017 = vadd.f32 %v3011, %v3015
    %s3018 = sld [smem:[#allocation7 + $0x76]]
    %v3019 = vstv %s3018
    %v3020 = vmul.f32 %v145, %v3019
    %v3021 = vmul.f32 %v146, %v3019
    %v3022 = vadd.f32 %v3016, %v3020
    %v3023 = vadd.f32 %v3017, %v3021
    %s3024 = sld [smem:[#allocation7 + $0x77]]
    %v3025 = vstv %s3024
    %v3026 = vmul.f32 %v148, %v3025
    %v3027 = vmul.f32 %v149, %v3025
    %v3028 = vadd.f32 %v3022, %v3026
    %v3029 = vadd.f32 %v3023, %v3027
    %s3030 = sld [smem:[#allocation8 + $0xe]]
    %v3031 = vstv %s3030
    %v3032 = vadd.f32 %v3028, %v3031
    %v3033 = vadd.f32 %v3029, %v3031
    %s3034 = sld [smem:[#allocation7 + $0x78]]
    %v3035 = vstv %s3034
    %v3036 = vmul.f32 %v127, %v3035
    %v3037 = vmul.f32 %v128, %v3035
    %s3038 = sld [smem:[#allocation7 + $0x79]]
    %v3039 = vstv %s3038
    %v3040 = vmul.f32 %v130, %v3039
    %v3041 = vmul.f32 %v131, %v3039
    %v3042 = vadd.f32 %v3036, %v3040
    %v3043 = vadd.f32 %v3037, %v3041
    %s3044 = sld [smem:[#allocation7 + $0x7a]]
    %v3045 = vstv %s3044
    %v3046 = vmul.f32 %v133, %v3045
    %v3047 = vmul.f32 %v134, %v3045
    %v3048 = vadd.f32 %v3042, %v3046
    %v3049 = vadd.f32 %v3043, %v3047
    %s3050 = sld [smem:[#allocation7 + $0x7b]]
    %v3051 = vstv %s3050
    %v3052 = vmul.f32 %v136, %v3051
    %v3053 = vmul.f32 %v137, %v3051
    %v3054 = vadd.f32 %v3048, %v3052
    %v3055 = vadd.f32 %v3049, %v3053
    %s3056 = sld [smem:[#allocation7 + $0x7c]]
    %v3057 = vstv %s3056
    %v3058 = vmul.f32 %v139, %v3057
    %v3059 = vmul.f32 %v140, %v3057
    %v3060 = vadd.f32 %v3054, %v3058
    %v3061 = vadd.f32 %v3055, %v3059
    %s3062 = sld [smem:[#allocation7 + $0x7d]]
    %v3063 = vstv %s3062
    %v3064 = vmul.f32 %v142, %v3063
    %v3065 = vmul.f32 %v143, %v3063
    %v3066 = vadd.f32 %v3060, %v3064
    %v3067 = vadd.f32 %v3061, %v3065
    %s3068 = sld [smem:[#allocation7 + $0x7e]]
    %v3069 = vstv %s3068
    %v3070 = vmul.f32 %v145, %v3069
    %v3071 = vmul.f32 %v146, %v3069
    %v3072 = vadd.f32 %v3066, %v3070
    %v3073 = vadd.f32 %v3067, %v3071
    %s3074 = sld [smem:[#allocation7 + $0x7f]]
    %v3075 = vstv %s3074
    %v3076 = vmul.f32 %v148, %v3075
    %v3077 = vmul.f32 %v149, %v3075
    %v3078 = vadd.f32 %v3072, %v3076
    %v3079 = vadd.f32 %v3073, %v3077
    %s3080 = sld [smem:[#allocation8 + $0xf]]
    %v3081 = vstv %s3080
    %v3082 = vadd.f32 %v3078, %v3081
    %v3083 = vadd.f32 %v3079, %v3081
    %s3084 = sld [smem:[#allocation9 + $0x1]]
    %s3085 = sld [smem:[#allocation9 + $0x3]]
    %s3086 = sld [smem:[#allocation9 + $0x5]]
    %v3087 = vstv %s3084
    %v3088 = vmul.f32 %v2732, %v3087
    %v3089 = vmul.f32 %v2733, %v3087
    %v3090 = vld [vmem:[#allocation11] sm:$0xff]
    %v3091 = vld [vmem:[#allocation11 + $0x8] sm:$0xff]
    %v3092 = vld [vmem:[#allocation11 + $0x10] sm:$0xff]
    %v3093 = vld [vmem:[#allocation11 + $0x18] sm:$0xff]
    %v3094 = vld [vmem:[#allocation11 + $0x20] sm:$0xff]
    %v3095 = vld [vmem:[#allocation11 + $0x28] sm:$0xff]
    %v3096 = vld [vmem:[#allocation11 + $0x30] sm:$0xff]
    %v3097 = vld [vmem:[#allocation11 + $0x38] sm:$0xff]
    %v3098 = vld [vmem:[#allocation11 + $0x40] sm:$0xff]
    %v3099 = vld [vmem:[#allocation11 + $0x48] sm:$0xff]
    %v3100 = vld [vmem:[#allocation11 + $0x50] sm:$0xff]
    %v3101 = vld [vmem:[#allocation11 + $0x58] sm:$0xff]
    %v3102 = vld [vmem:[#allocation11 + $0x60] sm:$0xff]
    %v3103 = vld [vmem:[#allocation11 + $0x68] sm:$0xff]
    %v3104 = vld [vmem:[#allocation11 + $0x70] sm:$0xff]
    %v3105 = vld [vmem:[#allocation11 + $0x78] sm:$0xff]
    %v3106 = vld [vmem:[#allocation11 + $0x80] sm:$0xff]
    %v3107 = vld [vmem:[#allocation11 + $0x88] sm:$0xff]
    %v3108 = vld [vmem:[#allocation11 + $0x90] sm:$0xff]
    %v3109 = vld [vmem:[#allocation11 + $0x98] sm:$0xff]
    %v3110 = vld [vmem:[#allocation11 + $0xa0] sm:$0xff]
    %v3111 = vld [vmem:[#allocation11 + $0xa8] sm:$0xff]
    %v3112 = vld [vmem:[#allocation11 + $0xb0] sm:$0xff]
    %v3113 = vld [vmem:[#allocation11 + $0xb8] sm:$0xff]
    %v3114 = vld [vmem:[#allocation11 + $0xc0] sm:$0xff]
    %v3115 = vld [vmem:[#allocation11 + $0xc8] sm:$0xff]
    %v3116 = vld [vmem:[#allocation11 + $0xd0] sm:$0xff]
    %v3117 = vld [vmem:[#allocation11 + $0xd8] sm:$0xff]
    %v3118 = vld [vmem:[#allocation11 + $0xe0] sm:$0xff]
    %v3119 = vld [vmem:[#allocation11 + $0xe8] sm:$0xff]
    %v3120 = vld [vmem:[#allocation11 + $0xf0] sm:$0xff]
    %v3121 = vld [vmem:[#allocation11 + $0xf8] sm:$0xff]
    %v3122 = vstv %s3085
    %v3123 = vmul.f32 %v3090, %v3122
    %v3124 = vmul.f32 %v3091, %v3122
    %v3125 = vmul.f32 %v3092, %v3122
    %v3126 = vmul.f32 %v3093, %v3122
    %v3127 = vmul.f32 %v3094, %v3122
    %v3128 = vmul.f32 %v3095, %v3122
    %v3129 = vmul.f32 %v3096, %v3122
    %v3130 = vmul.f32 %v3097, %v3122
    %v3131 = vmul.f32 %v3098, %v3122
    %v3132 = vmul.f32 %v3099, %v3122
    %v3133 = vmul.f32 %v3100, %v3122
    %v3134 = vmul.f32 %v3101, %v3122
    %v3135 = vmul.f32 %v3102, %v3122
    %v3136 = vmul.f32 %v3103, %v3122
    %v3137 = vmul.f32 %v3104, %v3122
    %v3138 = vmul.f32 %v3105, %v3122
    %v3139 = vmul.f32 %v3106, %v3122
    %v3140 = vmul.f32 %v3107, %v3122
    %v3141 = vmul.f32 %v3108, %v3122
    %v3142 = vmul.f32 %v3109, %v3122
    %v3143 = vmul.f32 %v3110, %v3122
    %v3144 = vmul.f32 %v3111, %v3122
    %v3145 = vmul.f32 %v3112, %v3122
    %v3146 = vmul.f32 %v3113, %v3122
    %v3147 = vmul.f32 %v3114, %v3122
    %v3148 = vmul.f32 %v3115, %v3122
    %v3149 = vmul.f32 %v3116, %v3122
    %v3150 = vmul.f32 %v3117, %v3122
    %v3151 = vmul.f32 %v3118, %v3122
    %v3152 = vmul.f32 %v3119, %v3122
    %v3153 = vmul.f32 %v3120, %v3122
    %v3154 = vmul.f32 %v3121, %v3122
    %v3155 = vadd.f32 %v3088, %v3123
    %v3156 = vadd.f32 %v3089, %v3124
    %v3157 = vadd.f32 %v3088, %v3125
    %v3158 = vadd.f32 %v3089, %v3126
    %v3159 = vadd.f32 %v3088, %v3127
    %v3160 = vadd.f32 %v3089, %v3128
    %v3161 = vadd.f32 %v3088, %v3129
    %v3162 = vadd.f32 %v3089, %v3130
    %v3163 = vadd.f32 %v3088, %v3131
    %v3164 = vadd.f32 %v3089, %v3132
    %v3165 = vadd.f32 %v3088, %v3133
    %v3166 = vadd.f32 %v3089, %v3134
    %v3167 = vadd.f32 %v3088, %v3135
    %v3168 = vadd.f32 %v3089, %v3136
    %v3169 = vadd.f32 %v3088, %v3137
    %v3170 = vadd.f32 %v3089, %v3138
    %v3171 = vadd.f32 %v3088, %v3139
    %v3172 = vadd.f32 %v3089, %v3140
    %v3173 = vadd.f32 %v3088, %v3141
    %v3174 = vadd.f32 %v3089, %v3142
    %v3175 = vadd.f32 %v3088, %v3143
    %v3176 = vadd.f32 %v3089, %v3144
    %v3177 = vadd.f32 %v3088, %v3145
    %v3178 = vadd.f32 %v3089, %v3146
    %v3179 = vadd.f32 %v3088, %v3147
    %v3180 = vadd.f32 %v3089, %v3148
    %v3181 = vadd.f32 %v3088, %v3149
    %v3182 = vadd.f32 %v3089, %v3150
    %v3183 = vadd.f32 %v3088, %v3151
    %v3184 = vadd.f32 %v3089, %v3152
    %v3185 = vadd.f32 %v3088, %v3153
    %v3186 = vadd.f32 %v3089, %v3154
    %v3189 = vrot.slane %v2832, 1
    %v3190 = vrot.slane %v2832, 2
    %v3191 = vrot.slane %v2832, 3
    %v3192 = vrot.slane %v2832, 4
    %v3193 = vrot.slane %v2832, 5
    %v3194 = vrot.slane %v2832, 6
    %v3195 = vrot.slane %v2832, 7
    %v3196 = vrot.slane %v2833, 1
    %v3197 = vrot.slane %v2833, 2
    %v3198 = vrot.slane %v2833, 3
    %v3199 = vrot.slane %v2833, 4
    %v3200 = vrot.slane %v2833, 5
    %v3201 = vrot.slane %v2833, 6
    %v3202 = vrot.slane %v2833, 7
    %v3203 = vperm.slane %v2832, 0
    %v3204 = vperm.slane %v3189, 0
    %v3205 = vperm.slane %v3190, 0
    %v3206 = vperm.slane %v3191, 0
    %v3207 = vperm.slane %v3192, 0
    %v3208 = vperm.slane %v3193, 0
    %v3209 = vperm.slane %v3194, 0
    %v3210 = vperm.slane %v3195, 0
    %v3211 = vperm.slane %v2833, 0
    %v3212 = vperm.slane %v3196, 0
    %v3213 = vperm.slane %v3197, 0
    %v3214 = vperm.slane %v3198, 0
    %v3215 = vperm.slane %v3199, 0
    %v3216 = vperm.slane %v3200, 0
    %v3217 = vperm.slane %v3201, 0
    %v3218 = vperm.slane %v3202, 0
    %v3235 = vmul.f32 %v3203, %v3155
    %v3236 = vmul.f32 %v3203, %v3156
    %v3237 = vmul.f32 %v3204, %v3157
    %v3238 = vmul.f32 %v3204, %v3158
    %v3239 = vmul.f32 %v3205, %v3159
    %v3240 = vmul.f32 %v3205, %v3160
    %v3241 = vmul.f32 %v3206, %v3161
    %v3242 = vmul.f32 %v3206, %v3162
    %v3243 = vmul.f32 %v3207, %v3163
    %v3244 = vmul.f32 %v3207, %v3164
    %v3245 = vmul.f32 %v3208, %v3165
    %v3246 = vmul.f32 %v3208, %v3166
    %v3247 = vmul.f32 %v3209, %v3167
    %v3248 = vmul.f32 %v3209, %v3168
    %v3249 = vmul.f32 %v3210, %v3169
    %v3250 = vmul.f32 %v3210, %v3170
    %v3251 = vmul.f32 %v3211, %v3171
    %v3252 = vmul.f32 %v3211, %v3172
    %v3253 = vmul.f32 %v3212, %v3173
    %v3254 = vmul.f32 %v3212, %v3174
    %v3255 = vmul.f32 %v3213, %v3175
    %v3256 = vmul.f32 %v3213, %v3176
    %v3257 = vmul.f32 %v3214, %v3177
    %v3258 = vmul.f32 %v3214, %v3178
    %v3259 = vmul.f32 %v3215, %v3179
    %v3260 = vmul.f32 %v3215, %v3180
    %v3261 = vmul.f32 %v3216, %v3181
    %v3262 = vmul.f32 %v3216, %v3182
    %v3263 = vmul.f32 %v3217, %v3183
    %v3264 = vmul.f32 %v3217, %v3184
    %v3265 = vmul.f32 %v3218, %v3185
    %v3266 = vmul.f32 %v3218, %v3186
    %v3267 = vstv %s3086
    %v3268 = vmul.f32 %v2732, %v3267
    %v3269 = vmul.f32 %v2733, %v3267
    %v3270 = vld [vmem:[#allocation13] sm:$0xff]
    %v3271 = vld [vmem:[#allocation13 + $0x8] sm:$0xff]
    %v3272 = vld [vmem:[#allocation13 + $0x10] sm:$0xff]
    %v3273 = vld [vmem:[#allocation13 + $0x18] sm:$0xff]
    %v3274 = vld [vmem:[#allocation13 + $0x20] sm:$0xff]
    %v3275 = vld [vmem:[#allocation13 + $0x28] sm:$0xff]
    %v3276 = vld [vmem:[#allocation13 + $0x30] sm:$0xff]
    %v3277 = vld [vmem:[#allocation13 + $0x38] sm:$0xff]
    %v3278 = vld [vmem:[#allocation13 + $0x40] sm:$0xff]
    %v3279 = vld [vmem:[#allocation13 + $0x48] sm:$0xff]
    %v3280 = vld [vmem:[#allocation13 + $0x50] sm:$0xff]
    %v3281 = vld [vmem:[#allocation13 + $0x58] sm:$0xff]
    %v3282 = vld [vmem:[#allocation13 + $0x60] sm:$0xff]
    %v3283 = vld [vmem:[#allocation13 + $0x68] sm:$0xff]
    %v3284 = vld [vmem:[#allocation13 + $0x70] sm:$0xff]
    %v3285 = vld [vmem:[#allocation13 + $0x78] sm:$0xff]
    %v3286 = vld [vmem:[#allocation13 + $0x80] sm:$0xff]
    %v3287 = vld [vmem:[#allocation13 + $0x88] sm:$0xff]
    %v3288 = vld [vmem:[#allocation13 + $0x90] sm:$0xff]
    %v3289 = vld [vmem:[#allocation13 + $0x98] sm:$0xff]
    %v3290 = vld [vmem:[#allocation13 + $0xa0] sm:$0xff]
    %v3291 = vld [vmem:[#allocation13 + $0xa8] sm:$0xff]
    %v3292 = vld [vmem:[#allocation13 + $0xb0] sm:$0xff]
    %v3293 = vld [vmem:[#allocation13 + $0xb8] sm:$0xff]
    %v3294 = vld [vmem:[#allocation13 + $0xc0] sm:$0xff]
    %v3295 = vld [vmem:[#allocation13 + $0xc8] sm:$0xff]
    %v3296 = vld [vmem:[#allocation13 + $0xd0] sm:$0xff]
    %v3297 = vld [vmem:[#allocation13 + $0xd8] sm:$0xff]
    %v3298 = vld [vmem:[#allocation13 + $0xe0] sm:$0xff]
    %v3299 = vld [vmem:[#allocation13 + $0xe8] sm:$0xff]
    %v3300 = vld [vmem:[#allocation13 + $0xf0] sm:$0xff]
    %v3301 = vld [vmem:[#allocation13 + $0xf8] sm:$0xff]
    %v3302 = vmul.f32 %v3268, %v3270
    %v3303 = vmul.f32 %v3269, %v3271
    %v3304 = vmul.f32 %v3268, %v3272
    %v3305 = vmul.f32 %v3269, %v3273
    %v3306 = vmul.f32 %v3268, %v3274
    %v3307 = vmul.f32 %v3269, %v3275
    %v3308 = vmul.f32 %v3268, %v3276
    %v3309 = vmul.f32 %v3269, %v3277
    %v3310 = vmul.f32 %v3268, %v3278
    %v3311 = vmul.f32 %v3269, %v3279
    %v3312 = vmul.f32 %v3268, %v3280
    %v3313 = vmul.f32 %v3269, %v3281
    %v3314 = vmul.f32 %v3268, %v3282
    %v3315 = vmul.f32 %v3269, %v3283
    %v3316 = vmul.f32 %v3268, %v3284
    %v3317 = vmul.f32 %v3269, %v3285
    %v3318 = vmul.f32 %v3268, %v3286
    %v3319 = vmul.f32 %v3269, %v3287
    %v3320 = vmul.f32 %v3268, %v3288
    %v3321 = vmul.f32 %v3269, %v3289
    %v3322 = vmul.f32 %v3268, %v3290
    %v3323 = vmul.f32 %v3269, %v3291
    %v3324 = vmul.f32 %v3268, %v3292
    %v3325 = vmul.f32 %v3269, %v3293
    %v3326 = vmul.f32 %v3268, %v3294
    %v3327 = vmul.f32 %v3269, %v3295
    %v3328 = vmul.f32 %v3268, %v3296
    %v3329 = vmul.f32 %v3269, %v3297
    %v3330 = vmul.f32 %v3268, %v3298
    %v3331 = vmul.f32 %v3269, %v3299
    %v3332 = vmul.f32 %v3268, %v3300
    %v3333 = vmul.f32 %v3269, %v3301
    %v3334 = vadd.f32 %v3235, %v3302
    %v3335 = vadd.f32 %v3236, %v3303
    %v3336 = vadd.f32 %v3237, %v3304
    %v3337 = vadd.f32 %v3238, %v3305
    %v3338 = vadd.f32 %v3239, %v3306
    %v3339 = vadd.f32 %v3240, %v3307
    %v3340 = vadd.f32 %v3241, %v3308
    %v3341 = vadd.f32 %v3242, %v3309
    %v3342 = vadd.f32 %v3243, %v3310
    %v3343 = vadd.f32 %v3244, %v3311
    %v3344 = vadd.f32 %v3245, %v3312
    %v3345 = vadd.f32 %v3246, %v3313
    %v3346 = vadd.f32 %v3247, %v3314
    %v3347 = vadd.f32 %v3248, %v3315
    %v3348 = vadd.f32 %v3249, %v3316
    %v3349 = vadd.f32 %v3250, %v3317
    %v3350 = vadd.f32 %v3251, %v3318
    %v3351 = vadd.f32 %v3252, %v3319
    %v3352 = vadd.f32 %v3253, %v3320
    %v3353 = vadd.f32 %v3254, %v3321
    %v3354 = vadd.f32 %v3255, %v3322
    %v3355 = vadd.f32 %v3256, %v3323
    %v3356 = vadd.f32 %v3257, %v3324
    %v3357 = vadd.f32 %v3258, %v3325
    %v3358 = vadd.f32 %v3259, %v3326
    %v3359 = vadd.f32 %v3260, %v3327
    %v3360 = vadd.f32 %v3261, %v3328
    %v3361 = vadd.f32 %v3262, %v3329
    %v3362 = vadd.f32 %v3263, %v3330
    %v3363 = vadd.f32 %v3264, %v3331
    %v3364 = vadd.f32 %v3265, %v3332
    %v3365 = vadd.f32 %v3266, %v3333
    %v3366 = vmul.f32 %v2782, %v3087
    %v3367 = vmul.f32 %v2783, %v3087
    %v3368 = vld [vmem:[%s834] sm:$0xff]
    %v3369 = vld [vmem:[%s834 + $0x8] sm:$0xff]
    %v3370 = vld [vmem:[%s834 + $0x10] sm:$0xff]
    %v3371 = vld [vmem:[%s834 + $0x18] sm:$0xff]
    %v3372 = vld [vmem:[%s834 + $0x20] sm:$0xff]
    %v3373 = vld [vmem:[%s834 + $0x28] sm:$0xff]
    %v3374 = vld [vmem:[%s834 + $0x30] sm:$0xff]
    %v3375 = vld [vmem:[%s834 + $0x38] sm:$0xff]
    %v3376 = vld [vmem:[%s834 + $0x40] sm:$0xff]
    %v3377 = vld [vmem:[%s834 + $0x48] sm:$0xff]
    %v3378 = vld [vmem:[%s834 + $0x50] sm:$0xff]
    %v3379 = vld [vmem:[%s834 + $0x58] sm:$0xff]
    %v3380 = vld [vmem:[%s834 + $0x60] sm:$0xff]
    %v3381 = vld [vmem:[%s834 + $0x68] sm:$0xff]
    %v3382 = vld [vmem:[%s834 + $0x70] sm:$0xff]
    %v3383 = vld [vmem:[%s834 + $0x78] sm:$0xff]
    %v3384 = vld [vmem:[%s834 + $0x80] sm:$0xff]
    %v3385 = vld [vmem:[%s834 + $0x88] sm:$0xff]
    %v3386 = vld [vmem:[%s834 + $0x90] sm:$0xff]
    %v3387 = vld [vmem:[%s834 + $0x98] sm:$0xff]
    %v3388 = vld [vmem:[%s834 + $0xa0] sm:$0xff]
    %v3389 = vld [vmem:[%s834 + $0xa8] sm:$0xff]
    %v3390 = vld [vmem:[%s834 + $0xb0] sm:$0xff]
    %v3391 = vld [vmem:[%s834 + $0xb8] sm:$0xff]
    %v3392 = vld [vmem:[%s834 + $0xc0] sm:$0xff]
    %v3393 = vld [vmem:[%s834 + $0xc8] sm:$0xff]
    %v3394 = vld [vmem:[%s834 + $0xd0] sm:$0xff]
    %v3395 = vld [vmem:[%s834 + $0xd8] sm:$0xff]
    %v3396 = vld [vmem:[%s834 + $0xe0] sm:$0xff]
    %v3397 = vld [vmem:[%s834 + $0xe8] sm:$0xff]
    %v3398 = vld [vmem:[%s834 + $0xf0] sm:$0xff]
    %v3399 = vld [vmem:[%s834 + $0xf8] sm:$0xff]
    %v3400 = vmul.f32 %v3368, %v3122
    %v3401 = vmul.f32 %v3369, %v3122
    %v3402 = vmul.f32 %v3370, %v3122
    %v3403 = vmul.f32 %v3371, %v3122
    %v3404 = vmul.f32 %v3372, %v3122
    %v3405 = vmul.f32 %v3373, %v3122
    %v3406 = vmul.f32 %v3374, %v3122
    %v3407 = vmul.f32 %v3375, %v3122
    %v3408 = vmul.f32 %v3376, %v3122
    %v3409 = vmul.f32 %v3377, %v3122
    %v3410 = vmul.f32 %v3378, %v3122
    %v3411 = vmul.f32 %v3379, %v3122
    %v3412 = vmul.f32 %v3380, %v3122
    %v3413 = vmul.f32 %v3381, %v3122
    %v3414 = vmul.f32 %v3382, %v3122
    %v3415 = vmul.f32 %v3383, %v3122
    %v3416 = vmul.f32 %v3384, %v3122
    %v3417 = vmul.f32 %v3385, %v3122
    %v3418 = vmul.f32 %v3386, %v3122
    %v3419 = vmul.f32 %v3387, %v3122
    %v3420 = vmul.f32 %v3388, %v3122
    %v3421 = vmul.f32 %v3389, %v3122
    %v3422 = vmul.f32 %v3390, %v3122
    %v3423 = vmul.f32 %v3391, %v3122
    %v3424 = vmul.f32 %v3392, %v3122
    %v3425 = vmul.f32 %v3393, %v3122
    %v3426 = vmul.f32 %v3394, %v3122
    %v3427 = vmul.f32 %v3395, %v3122
    %v3428 = vmul.f32 %v3396, %v3122
    %v3429 = vmul.f32 %v3397, %v3122
    %v3430 = vmul.f32 %v3398, %v3122
    %v3431 = vmul.f32 %v3399, %v3122
    %v3432 = vadd.f32 %v3366, %v3400
    %v3433 = vadd.f32 %v3367, %v3401
    %v3434 = vadd.f32 %v3366, %v3402
    %v3435 = vadd.f32 %v3367, %v3403
    %v3436 = vadd.f32 %v3366, %v3404
    %v3437 = vadd.f32 %v3367, %v3405
    %v3438 = vadd.f32 %v3366, %v3406
    %v3439 = vadd.f32 %v3367, %v3407
    %v3440 = vadd.f32 %v3366, %v3408
    %v3441 = vadd.f32 %v3367, %v3409
    %v3442 = vadd.f32 %v3366, %v3410
    %v3443 = vadd.f32 %v3367, %v3411
    %v3444 = vadd.f32 %v3366, %v3412
    %v3445 = vadd.f32 %v3367, %v3413
    %v3446 = vadd.f32 %v3366, %v3414
    %v3447 = vadd.f32 %v3367, %v3415
    %v3448 = vadd.f32 %v3366, %v3416
    %v3449 = vadd.f32 %v3367, %v3417
    %v3450 = vadd.f32 %v3366, %v3418
    %v3451 = vadd.f32 %v3367, %v3419
    %v3452 = vadd.f32 %v3366, %v3420
    %v3453 = vadd.f32 %v3367, %v3421
    %v3454 = vadd.f32 %v3366, %v3422
    %v3455 = vadd.f32 %v3367, %v3423
    %v3456 = vadd.f32 %v3366, %v3424
    %v3457 = vadd.f32 %v3367, %v3425
    %v3458 = vadd.f32 %v3366, %v3426
    %v3459 = vadd.f32 %v3367, %v3427
    %v3460 = vadd.f32 %v3366, %v3428
    %v3461 = vadd.f32 %v3367, %v3429
    %v3462 = vadd.f32 %v3366, %v3430
    %v3463 = vadd.f32 %v3367, %v3431
    %v3466 = vrot.slane %v2882, 1
    %v3467 = vrot.slane %v2882, 2
    %v3468 = vrot.slane %v2882, 3
    %v3469 = vrot.slane %v2882, 4
    %v3470 = vrot.slane %v2882, 5
    %v3471 = vrot.slane %v2882, 6
    %v3472 = vrot.slane %v2882, 7
    %v3473 = vrot.slane %v2883, 1
    %v3474 = vrot.slane %v2883, 2
    %v3475 = vrot.slane %v2883, 3
    %v3476 = vrot.slane %v2883, 4
    %v3477 = vrot.slane %v2883, 5
    %v3478 = vrot.slane %v2883, 6
    %v3479 = vrot.slane %v2883, 7
    %v3480 = vperm.slane %v2882, 0
    %v3481 = vperm.slane %v3466, 0
    %v3482 = vperm.slane %v3467, 0
    %v3483 = vperm.slane %v3468, 0
    %v3484 = vperm.slane %v3469, 0
    %v3485 = vperm.slane %v3470, 0
    %v3486 = vperm.slane %v3471, 0
    %v3487 = vperm.slane %v3472, 0
    %v3488 = vperm.slane %v2883, 0
    %v3489 = vperm.slane %v3473, 0
    %v3490 = vperm.slane %v3474, 0
    %v3491 = vperm.slane %v3475, 0
    %v3492 = vperm.slane %v3476, 0
    %v3493 = vperm.slane %v3477, 0
    %v3494 = vperm.slane %v3478, 0
    %v3495 = vperm.slane %v3479, 0
    %v3512 = vmul.f32 %v3480, %v3432
    %v3513 = vmul.f32 %v3480, %v3433
    %v3514 = vmul.f32 %v3481, %v3434
    %v3515 = vmul.f32 %v3481, %v3435
    %v3516 = vmul.f32 %v3482, %v3436
    %v3517 = vmul.f32 %v3482, %v3437
    %v3518 = vmul.f32 %v3483, %v3438
    %v3519 = vmul.f32 %v3483, %v3439
    %v3520 = vmul.f32 %v3484, %v3440
    %v3521 = vmul.f32 %v3484, %v3441
    %v3522 = vmul.f32 %v3485, %v3442
    %v3523 = vmul.f32 %v3485, %v3443
    %v3524 = vmul.f32 %v3486, %v3444
    %v3525 = vmul.f32 %v3486, %v3445
    %v3526 = vmul.f32 %v3487, %v3446
    %v3527 = vmul.f32 %v3487, %v3447
    %v3528 = vmul.f32 %v3488, %v3448
    %v3529 = vmul.f32 %v3488, %v3449
    %v3530 = vmul.f32 %v3489, %v3450
    %v3531 = vmul.f32 %v3489, %v3451
    %v3532 = vmul.f32 %v3490, %v3452
    %v3533 = vmul.f32 %v3490, %v3453
    %v3534 = vmul.f32 %v3491, %v3454
    %v3535 = vmul.f32 %v3491, %v3455
    %v3536 = vmul.f32 %v3492, %v3456
    %v3537 = vmul.f32 %v3492, %v3457
    %v3538 = vmul.f32 %v3493, %v3458
    %v3539 = vmul.f32 %v3493, %v3459
    %v3540 = vmul.f32 %v3494, %v3460
    %v3541 = vmul.f32 %v3494, %v3461
    %v3542 = vmul.f32 %v3495, %v3462
    %v3543 = vmul.f32 %v3495, %v3463
    %v3544 = vmul.f32 %v2782, %v3267
    %v3545 = vmul.f32 %v2783, %v3267
    %v3546 = vld [vmem:[%s1013] sm:$0xff]
    %v3547 = vld [vmem:[%s1013 + $0x8] sm:$0xff]
    %v3548 = vld [vmem:[%s1013 + $0x10] sm:$0xff]
    %v3549 = vld [vmem:[%s1013 + $0x18] sm:$0xff]
    %v3550 = vld [vmem:[%s1013 + $0x20] sm:$0xff]
    %v3551 = vld [vmem:[%s1013 + $0x28] sm:$0xff]
    %v3552 = vld [vmem:[%s1013 + $0x30] sm:$0xff]
    %v3553 = vld [vmem:[%s1013 + $0x38] sm:$0xff]
    %v3554 = vld [vmem:[%s1013 + $0x40] sm:$0xff]
    %v3555 = vld [vmem:[%s1013 + $0x48] sm:$0xff]
    %v3556 = vld [vmem:[%s1013 + $0x50] sm:$0xff]
    %v3557 = vld [vmem:[%s1013 + $0x58] sm:$0xff]
    %v3558 = vld [vmem:[%s1013 + $0x60] sm:$0xff]
    %v3559 = vld [vmem:[%s1013 + $0x68] sm:$0xff]
    %v3560 = vld [vmem:[%s1013 + $0x70] sm:$0xff]
    %v3561 = vld [vmem:[%s1013 + $0x78] sm:$0xff]
    %v3562 = vld [vmem:[%s1013 + $0x80] sm:$0xff]
    %v3563 = vld [vmem:[%s1013 + $0x88] sm:$0xff]
    %v3564 = vld [vmem:[%s1013 + $0x90] sm:$0xff]
    %v3565 = vld [vmem:[%s1013 + $0x98] sm:$0xff]
    %v3566 = vld [vmem:[%s1013 + $0xa0] sm:$0xff]
    %v3567 = vld [vmem:[%s1013 + $0xa8] sm:$0xff]
    %v3568 = vld [vmem:[%s1013 + $0xb0] sm:$0xff]
    %v3569 = vld [vmem:[%s1013 + $0xb8] sm:$0xff]
    %v3570 = vld [vmem:[%s1013 + $0xc0] sm:$0xff]
    %v3571 = vld [vmem:[%s1013 + $0xc8] sm:$0xff]
    %v3572 = vld [vmem:[%s1013 + $0xd0] sm:$0xff]
    %v3573 = vld [vmem:[%s1013 + $0xd8] sm:$0xff]
    %v3574 = vld [vmem:[%s1013 + $0xe0] sm:$0xff]
    %v3575 = vld [vmem:[%s1013 + $0xe8] sm:$0xff]
    %v3576 = vld [vmem:[%s1013 + $0xf0] sm:$0xff]
    %v3577 = vld [vmem:[%s1013 + $0xf8] sm:$0xff]
    %v3578 = vmul.f32 %v3544, %v3546
    %v3579 = vmul.f32 %v3545, %v3547
    %v3580 = vmul.f32 %v3544, %v3548
    %v3581 = vmul.f32 %v3545, %v3549
    %v3582 = vmul.f32 %v3544, %v3550
    %v3583 = vmul.f32 %v3545, %v3551
    %v3584 = vmul.f32 %v3544, %v3552
    %v3585 = vmul.f32 %v3545, %v3553
    %v3586 = vmul.f32 %v3544, %v3554
    %v3587 = vmul.f32 %v3545, %v3555
    %v3588 = vmul.f32 %v3544, %v3556
    %v3589 = vmul.f32 %v3545, %v3557
    %v3590 = vmul.f32 %v3544, %v3558
    %v3591 = vmul.f32 %v3545, %v3559
    %v3592 = vmul.f32 %v3544, %v3560
    %v3593 = vmul.f32 %v3545, %v3561
    %v3594 = vmul.f32 %v3544, %v3562
    %v3595 = vmul.f32 %v3545, %v3563
    %v3596 = vmul.f32 %v3544, %v3564
    %v3597 = vmul.f32 %v3545, %v3565
    %v3598 = vmul.f32 %v3544, %v3566
    %v3599 = vmul.f32 %v3545, %v3567
    %v3600 = vmul.f32 %v3544, %v3568
    %v3601 = vmul.f32 %v3545, %v3569
    %v3602 = vmul.f32 %v3544, %v3570
    %v3603 = vmul.f32 %v3545, %v3571
    %v3604 = vmul.f32 %v3544, %v3572
    %v3605 = vmul.f32 %v3545, %v3573
    %v3606 = vmul.f32 %v3544, %v3574
    %v3607 = vmul.f32 %v3545, %v3575
    %v3608 = vmul.f32 %v3544, %v3576
    %v3609 = vmul.f32 %v3545, %v3577
    %v3610 = vadd.f32 %v3512, %v3578
    %v3611 = vadd.f32 %v3513, %v3579
    %v3612 = vadd.f32 %v3514, %v3580
    %v3613 = vadd.f32 %v3515, %v3581
    %v3614 = vadd.f32 %v3516, %v3582
    %v3615 = vadd.f32 %v3517, %v3583
    %v3616 = vadd.f32 %v3518, %v3584
    %v3617 = vadd.f32 %v3519, %v3585
    %v3618 = vadd.f32 %v3520, %v3586
    %v3619 = vadd.f32 %v3521, %v3587
    %v3620 = vadd.f32 %v3522, %v3588
    %v3621 = vadd.f32 %v3523, %v3589
    %v3622 = vadd.f32 %v3524, %v3590
    %v3623 = vadd.f32 %v3525, %v3591
    %v3624 = vadd.f32 %v3526, %v3592
    %v3625 = vadd.f32 %v3527, %v3593
    %v3626 = vadd.f32 %v3528, %v3594
    %v3627 = vadd.f32 %v3529, %v3595
    %v3628 = vadd.f32 %v3530, %v3596
    %v3629 = vadd.f32 %v3531, %v3597
    %v3630 = vadd.f32 %v3532, %v3598
    %v3631 = vadd.f32 %v3533, %v3599
    %v3632 = vadd.f32 %v3534, %v3600
    %v3633 = vadd.f32 %v3535, %v3601
    %v3634 = vadd.f32 %v3536, %v3602
    %v3635 = vadd.f32 %v3537, %v3603
    %v3636 = vadd.f32 %v3538, %v3604
    %v3637 = vadd.f32 %v3539, %v3605
    %v3638 = vadd.f32 %v3540, %v3606
    %v3639 = vadd.f32 %v3541, %v3607
    %v3640 = vadd.f32 %v3542, %v3608
    %v3641 = vadd.f32 %v3543, %v3609
    %v3642 = vadd.f32 %v3334, %v3610
    %v3643 = vadd.f32 %v3335, %v3611
    %v3644 = vadd.f32 %v3336, %v3612
    %v3645 = vadd.f32 %v3337, %v3613
    %v3646 = vadd.f32 %v3338, %v3614
    %v3647 = vadd.f32 %v3339, %v3615
    %v3648 = vadd.f32 %v3340, %v3616
    %v3649 = vadd.f32 %v3341, %v3617
    %v3650 = vadd.f32 %v3342, %v3618
    %v3651 = vadd.f32 %v3343, %v3619
    %v3652 = vadd.f32 %v3344, %v3620
    %v3653 = vadd.f32 %v3345, %v3621
    %v3654 = vadd.f32 %v3346, %v3622
    %v3655 = vadd.f32 %v3347, %v3623
    %v3656 = vadd.f32 %v3348, %v3624
    %v3657 = vadd.f32 %v3349, %v3625
    %v3658 = vadd.f32 %v3350, %v3626
    %v3659 = vadd.f32 %v3351, %v3627
    %v3660 = vadd.f32 %v3352, %v3628
    %v3661 = vadd.f32 %v3353, %v3629
    %v3662 = vadd.f32 %v3354, %v3630
    %v3663 = vadd.f32 %v3355, %v3631
    %v3664 = vadd.f32 %v3356, %v3632
    %v3665 = vadd.f32 %v3357, %v3633
    %v3666 = vadd.f32 %v3358, %v3634
    %v3667 = vadd.f32 %v3359, %v3635
    %v3668 = vadd.f32 %v3360, %v3636
    %v3669 = vadd.f32 %v3361, %v3637
    %v3670 = vadd.f32 %v3362, %v3638
    %v3671 = vadd.f32 %v3363, %v3639
    %v3672 = vadd.f32 %v3364, %v3640
    %v3673 = vadd.f32 %v3365, %v3641
    %v3674 = vsel %vm1142, %v3642, -inf
    %v3675 = vsel %vm1142, %v3643, -inf
    %v3676 = vmax.f32 %v3674, %v3675
    %v3677 = vrot.slane %v3676, 4
    %v3678 = vmax.f32 %v3676, %v3677
    %v3679 = vrot.slane %v3678, 2
    %v3680 = vmax.f32 %v3678, %v3679
    %v3681 = vrot.slane %v3680, 1
    %v3682 = vmax.f32 %v3680, %v3681
    %v3683 = vsel %vm1142, %v3644, -inf
    %v3684 = vsel %vm1142, %v3645, -inf
    %v3685 = vmax.f32 %v3683, %v3684
    %v3686 = vrot.slane %v3685, 4
    %v3687 = vmax.f32 %v3685, %v3686
    %v3688 = vrot.slane %v3687, 2
    %v3689 = vmax.f32 %v3687, %v3688
    %v3690 = vrot.slane %v3689, 1
    %v3691 = vmax.f32 %v3689, %v3690
    %v3692 = vsel %vm1142, %v3646, -inf
    %v3693 = vsel %vm1142, %v3647, -inf
    %v3694 = vmax.f32 %v3692, %v3693
    %v3695 = vrot.slane %v3694, 4
    %v3696 = vmax.f32 %v3694, %v3695
    %v3697 = vrot.slane %v3696, 2
    %v3698 = vmax.f32 %v3696, %v3697
    %v3699 = vrot.slane %v3698, 1
    %v3700 = vmax.f32 %v3698, %v3699
    %v3701 = vsel %vm1142, %v3648, -inf
    %v3702 = vsel %vm1142, %v3649, -inf
    %v3703 = vmax.f32 %v3701, %v3702
    %v3704 = vrot.slane %v3703, 4
    %v3705 = vmax.f32 %v3703, %v3704
    %v3706 = vrot.slane %v3705, 2
    %v3707 = vmax.f32 %v3705, %v3706
    %v3708 = vrot.slane %v3707, 1
    %v3709 = vmax.f32 %v3707, %v3708
    %v3710 = vsel %vm1142, %v3650, -inf
    %v3711 = vsel %vm1142, %v3651, -inf
    %v3712 = vmax.f32 %v3710, %v3711
    %v3713 = vrot.slane %v3712, 4
    %v3714 = vmax.f32 %v3712, %v3713
    %v3715 = vrot.slane %v3714, 2
    %v3716 = vmax.f32 %v3714, %v3715
    %v3717 = vrot.slane %v3716, 1
    %v3718 = vmax.f32 %v3716, %v3717
    %v3719 = vsel %vm1142, %v3652, -inf
    %v3720 = vsel %vm1142, %v3653, -inf
    %v3721 = vmax.f32 %v3719, %v3720
    %v3722 = vrot.slane %v3721, 4
    %v3723 = vmax.f32 %v3721, %v3722
    %v3724 = vrot.slane %v3723, 2
    %v3725 = vmax.f32 %v3723, %v3724
    %v3726 = vrot.slane %v3725, 1
    %v3727 = vmax.f32 %v3725, %v3726
    %v3728 = vsel %vm1142, %v3654, -inf
    %v3729 = vsel %vm1142, %v3655, -inf
    %v3730 = vmax.f32 %v3728, %v3729
    %v3731 = vrot.slane %v3730, 4
    %v3732 = vmax.f32 %v3730, %v3731
    %v3733 = vrot.slane %v3732, 2
    %v3734 = vmax.f32 %v3732, %v3733
    %v3735 = vrot.slane %v3734, 1
    %v3736 = vmax.f32 %v3734, %v3735
    %v3737 = vsel %vm1142, %v3656, -inf
    %v3738 = vsel %vm1142, %v3657, -inf
    %v3739 = vmax.f32 %v3737, %v3738
    %v3740 = vrot.slane %v3739, 4
    %v3741 = vmax.f32 %v3739, %v3740
    %v3742 = vrot.slane %v3741, 2
    %v3743 = vmax.f32 %v3741, %v3742
    %v3744 = vrot.slane %v3743, 1
    %v3745 = vmax.f32 %v3743, %v3744
    %v3746 = vsel %vm1142, %v3658, -inf
    %v3747 = vsel %vm1142, %v3659, -inf
    %v3748 = vmax.f32 %v3746, %v3747
    %v3749 = vrot.slane %v3748, 4
    %v3750 = vmax.f32 %v3748, %v3749
    %v3751 = vrot.slane %v3750, 2
    %v3752 = vmax.f32 %v3750, %v3751
    %v3753 = vrot.slane %v3752, 1
    %v3754 = vmax.f32 %v3752, %v3753
    %v3755 = vsel %vm1142, %v3660, -inf
    %v3756 = vsel %vm1142, %v3661, -inf
    %v3757 = vmax.f32 %v3755, %v3756
    %v3758 = vrot.slane %v3757, 4
    %v3759 = vmax.f32 %v3757, %v3758
    %v3760 = vrot.slane %v3759, 2
    %v3761 = vmax.f32 %v3759, %v3760
    %v3762 = vrot.slane %v3761, 1
    %v3763 = vmax.f32 %v3761, %v3762
    %v3764 = vsel %vm1142, %v3662, -inf
    %v3765 = vsel %vm1142, %v3663, -inf
    %v3766 = vmax.f32 %v3764, %v3765
    %v3767 = vrot.slane %v3766, 4
    %v3768 = vmax.f32 %v3766, %v3767
    %v3769 = vrot.slane %v3768, 2
    %v3770 = vmax.f32 %v3768, %v3769
    %v3771 = vrot.slane %v3770, 1
    %v3772 = vmax.f32 %v3770, %v3771
    %v3773 = vsel %vm1142, %v3664, -inf
    %v3774 = vsel %vm1142, %v3665, -inf
    %v3775 = vmax.f32 %v3773, %v3774
    %v3776 = vrot.slane %v3775, 4
    %v3777 = vmax.f32 %v3775, %v3776
    %v3778 = vrot.slane %v3777, 2
    %v3779 = vmax.f32 %v3777, %v3778
    %v3780 = vrot.slane %v3779, 1
    %v3781 = vmax.f32 %v3779, %v3780
    %v3782 = vsel %vm1142, %v3666, -inf
    %v3783 = vsel %vm1142, %v3667, -inf
    %v3784 = vmax.f32 %v3782, %v3783
    %v3785 = vrot.slane %v3784, 4
    %v3786 = vmax.f32 %v3784, %v3785
    %v3787 = vrot.slane %v3786, 2
    %v3788 = vmax.f32 %v3786, %v3787
    %v3789 = vrot.slane %v3788, 1
    %v3790 = vmax.f32 %v3788, %v3789
    %v3791 = vsel %vm1142, %v3668, -inf
    %v3792 = vsel %vm1142, %v3669, -inf
    %v3793 = vmax.f32 %v3791, %v3792
    %v3794 = vrot.slane %v3793, 4
    %v3795 = vmax.f32 %v3793, %v3794
    %v3796 = vrot.slane %v3795, 2
    %v3797 = vmax.f32 %v3795, %v3796
    %v3798 = vrot.slane %v3797, 1
    %v3799 = vmax.f32 %v3797, %v3798
    %v3800 = vsel %vm1142, %v3670, -inf
    %v3801 = vsel %vm1142, %v3671, -inf
    %v3802 = vmax.f32 %v3800, %v3801
    %v3803 = vrot.slane %v3802, 4
    %v3804 = vmax.f32 %v3802, %v3803
    %v3805 = vrot.slane %v3804, 2
    %v3806 = vmax.f32 %v3804, %v3805
    %v3807 = vrot.slane %v3806, 1
    %v3808 = vmax.f32 %v3806, %v3807
    %v3809 = vsel %vm1142, %v3672, -inf
    %v3810 = vsel %vm1142, %v3673, -inf
    %v3811 = vmax.f32 %v3809, %v3810
    %v3812 = vrot.slane %v3811, 4
    %v3813 = vmax.f32 %v3811, %v3812
    %v3814 = vrot.slane %v3813, 2
    %v3815 = vmax.f32 %v3813, %v3814
    %v3816 = vrot.slane %v3815, 1
    %v3817 = vmax.f32 %v3815, %v3816
    %v3818 = vsub.f32 %v3642, %v3682
    %v3819 = vsub.f32 %v3643, %v3682
    %v3820 = vsub.f32 %v3644, %v3691
    %v3821 = vsub.f32 %v3645, %v3691
    %v3822 = vsub.f32 %v3646, %v3700
    %v3823 = vsub.f32 %v3647, %v3700
    %v3824 = vsub.f32 %v3648, %v3709
    %v3825 = vsub.f32 %v3649, %v3709
    %v3826 = vsub.f32 %v3650, %v3718
    %v3827 = vsub.f32 %v3651, %v3718
    %v3828 = vsub.f32 %v3652, %v3727
    %v3829 = vsub.f32 %v3653, %v3727
    %v3830 = vsub.f32 %v3654, %v3736
    %v3831 = vsub.f32 %v3655, %v3736
    %v3832 = vsub.f32 %v3656, %v3745
    %v3833 = vsub.f32 %v3657, %v3745
    %v3834 = vsub.f32 %v3658, %v3754
    %v3835 = vsub.f32 %v3659, %v3754
    %v3836 = vsub.f32 %v3660, %v3763
    %v3837 = vsub.f32 %v3661, %v3763
    %v3838 = vsub.f32 %v3662, %v3772
    %v3839 = vsub.f32 %v3663, %v3772
    %v3840 = vsub.f32 %v3664, %v3781
    %v3841 = vsub.f32 %v3665, %v3781
    %v3842 = vsub.f32 %v3666, %v3790
    %v3843 = vsub.f32 %v3667, %v3790
    %v3844 = vsub.f32 %v3668, %v3799
    %v3845 = vsub.f32 %v3669, %v3799
    %v3846 = vsub.f32 %v3670, %v3808
    %v3847 = vsub.f32 %v3671, %v3808
    %v3848 = vsub.f32 %v3672, %v3817
    %v3849 = vsub.f32 %v3673, %v3817
    %v3850 = vmul.f32 %v3818, 1.442695
    %v3851 = vpow.pop %v3850
    %v3852 = vmul.f32 %v3819, 1.442695
    %v3853 = vpow.pop %v3852
    %v3854 = vmul.f32 %v3820, 1.442695
    %v3855 = vpow.pop %v3854
    %v3856 = vmul.f32 %v3821, 1.442695
    %v3857 = vpow.pop %v3856
    %v3858 = vmul.f32 %v3822, 1.442695
    %v3859 = vpow.pop %v3858
    %v3860 = vmul.f32 %v3823, 1.442695
    %v3861 = vpow.pop %v3860
    %v3862 = vmul.f32 %v3824, 1.442695
    %v3863 = vpow.pop %v3862
    %v3864 = vmul.f32 %v3825, 1.442695
    %v3865 = vpow.pop %v3864
    %v3866 = vmul.f32 %v3826, 1.442695
    %v3867 = vpow.pop %v3866
    %v3868 = vmul.f32 %v3827, 1.442695
    %v3869 = vpow.pop %v3868
    %v3870 = vmul.f32 %v3828, 1.442695
    %v3871 = vpow.pop %v3870
    %v3872 = vmul.f32 %v3829, 1.442695
    %v3873 = vpow.pop %v3872
    %v3874 = vmul.f32 %v3830, 1.442695
    %v3875 = vpow.pop %v3874
    %v3876 = vmul.f32 %v3831, 1.442695
    %v3877 = vpow.pop %v3876
    %v3878 = vmul.f32 %v3832, 1.442695
    %v3879 = vpow.pop %v3878
    %v3880 = vmul.f32 %v3833, 1.442695
    %v3881 = vpow.pop %v3880
    %v3882 = vmul.f32 %v3834, 1.442695
    %v3883 = vpow.pop %v3882
    %v3884 = vmul.f32 %v3835, 1.442695
    %v3885 = vpow.pop %v3884
    %v3886 = vmul.f32 %v3836, 1.442695
    %v3887 = vpow.pop %v3886
    %v3888 = vmul.f32 %v3837, 1.442695
    %v3889 = vpow.pop %v3888
    %v3890 = vmul.f32 %v3838, 1.442695
    %v3891 = vpow.pop %v3890
    %v3892 = vmul.f32 %v3839, 1.442695
    %v3893 = vpow.pop %v3892
    %v3894 = vmul.f32 %v3840, 1.442695
    %v3895 = vpow.pop %v3894
    %v3896 = vmul.f32 %v3841, 1.442695
    %v3897 = vpow.pop %v3896
    %v3898 = vmul.f32 %v3842, 1.442695
    %v3899 = vpow.pop %v3898
    %v3900 = vmul.f32 %v3843, 1.442695
    %v3901 = vpow.pop %v3900
    %v3902 = vmul.f32 %v3844, 1.442695
    %v3903 = vpow.pop %v3902
    %v3904 = vmul.f32 %v3845, 1.442695
    %v3905 = vpow.pop %v3904
    %v3906 = vmul.f32 %v3846, 1.442695
    %v3907 = vpow.pop %v3906
    %v3908 = vmul.f32 %v3847, 1.442695
    %v3909 = vpow.pop %v3908
    %v3910 = vmul.f32 %v3848, 1.442695
    %v3911 = vpow.pop %v3910
    %v3912 = vmul.f32 %v3849, 1.442695
    %v3913 = vpow.pop %v3912
    %v3914 = vsel %vm1142, %v3851, 0.0
    %v3915 = vsel %vm1142, %v3853, 0.0
    %v3916 = vadd.f32 %v3914, %v3915
    %v3917 = vrot.slane %v3916, 4
    %v3918 = vadd.f32 %v3916, %v3917
    %v3919 = vrot.slane %v3918, 2
    %v3920 = vadd.f32 %v3918, %v3919
    %v3921 = vrot.slane %v3920, 1
    %v3922 = vadd.f32 %v3920, %v3921
    %v3923 = vsel %vm1142, %v3855, 0.0
    %v3924 = vsel %vm1142, %v3857, 0.0
    %v3925 = vadd.f32 %v3923, %v3924
    %v3926 = vrot.slane %v3925, 4
    %v3927 = vadd.f32 %v3925, %v3926
    %v3928 = vrot.slane %v3927, 2
    %v3929 = vadd.f32 %v3927, %v3928
    %v3930 = vrot.slane %v3929, 1
    %v3931 = vadd.f32 %v3929, %v3930
    %v3932 = vsel %vm1142, %v3859, 0.0
    %v3933 = vsel %vm1142, %v3861, 0.0
    %v3934 = vadd.f32 %v3932, %v3933
    %v3935 = vrot.slane %v3934, 4
    %v3936 = vadd.f32 %v3934, %v3935
    %v3937 = vrot.slane %v3936, 2
    %v3938 = vadd.f32 %v3936, %v3937
    %v3939 = vrot.slane %v3938, 1
    %v3940 = vadd.f32 %v3938, %v3939
    %v3941 = vsel %vm1142, %v3863, 0.0
    %v3942 = vsel %vm1142, %v3865, 0.0
    %v3943 = vadd.f32 %v3941, %v3942
    %v3944 = vrot.slane %v3943, 4
    %v3945 = vadd.f32 %v3943, %v3944
    %v3946 = vrot.slane %v3945, 2
    %v3947 = vadd.f32 %v3945, %v3946
    %v3948 = vrot.slane %v3947, 1
    %v3949 = vadd.f32 %v3947, %v3948
    %v3950 = vsel %vm1142, %v3867, 0.0
    %v3951 = vsel %vm1142, %v3869, 0.0
    %v3952 = vadd.f32 %v3950, %v3951
    %v3953 = vrot.slane %v3952, 4
    %v3954 = vadd.f32 %v3952, %v3953
    %v3955 = vrot.slane %v3954, 2
    %v3956 = vadd.f32 %v3954, %v3955
    %v3957 = vrot.slane %v3956, 1
    %v3958 = vadd.f32 %v3956, %v3957
    %v3959 = vsel %vm1142, %v3871, 0.0
    %v3960 = vsel %vm1142, %v3873, 0.0
    %v3961 = vadd.f32 %v3959, %v3960
    %v3962 = vrot.slane %v3961, 4
    %v3963 = vadd.f32 %v3961, %v3962
    %v3964 = vrot.slane %v3963, 2
    %v3965 = vadd.f32 %v3963, %v3964
    %v3966 = vrot.slane %v3965, 1
    %v3967 = vadd.f32 %v3965, %v3966
    %v3968 = vsel %vm1142, %v3875, 0.0
    %v3969 = vsel %vm1142, %v3877, 0.0
    %v3970 = vadd.f32 %v3968, %v3969
    %v3971 = vrot.slane %v3970, 4
    %v3972 = vadd.f32 %v3970, %v3971
    %v3973 = vrot.slane %v3972, 2
    %v3974 = vadd.f32 %v3972, %v3973
    %v3975 = vrot.slane %v3974, 1
    %v3976 = vadd.f32 %v3974, %v3975
    %v3977 = vsel %vm1142, %v3879, 0.0
    %v3978 = vsel %vm1142, %v3881, 0.0
    %v3979 = vadd.f32 %v3977, %v3978
    %v3980 = vrot.slane %v3979, 4
    %v3981 = vadd.f32 %v3979, %v3980
    %v3982 = vrot.slane %v3981, 2
    %v3983 = vadd.f32 %v3981, %v3982
    %v3984 = vrot.slane %v3983, 1
    %v3985 = vadd.f32 %v3983, %v3984
    %v3986 = vsel %vm1142, %v3883, 0.0
    %v3987 = vsel %vm1142, %v3885, 0.0
    %v3988 = vadd.f32 %v3986, %v3987
    %v3989 = vrot.slane %v3988, 4
    %v3990 = vadd.f32 %v3988, %v3989
    %v3991 = vrot.slane %v3990, 2
    %v3992 = vadd.f32 %v3990, %v3991
    %v3993 = vrot.slane %v3992, 1
    %v3994 = vadd.f32 %v3992, %v3993
    %v3995 = vsel %vm1142, %v3887, 0.0
    %v3996 = vsel %vm1142, %v3889, 0.0
    %v3997 = vadd.f32 %v3995, %v3996
    %v3998 = vrot.slane %v3997, 4
    %v3999 = vadd.f32 %v3997, %v3998
    %v4000 = vrot.slane %v3999, 2
    %v4001 = vadd.f32 %v3999, %v4000
    %v4002 = vrot.slane %v4001, 1
    %v4003 = vadd.f32 %v4001, %v4002
    %v4004 = vsel %vm1142, %v3891, 0.0
    %v4005 = vsel %vm1142, %v3893, 0.0
    %v4006 = vadd.f32 %v4004, %v4005
    %v4007 = vrot.slane %v4006, 4
    %v4008 = vadd.f32 %v4006, %v4007
    %v4009 = vrot.slane %v4008, 2
    %v4010 = vadd.f32 %v4008, %v4009
    %v4011 = vrot.slane %v4010, 1
    %v4012 = vadd.f32 %v4010, %v4011
    %v4013 = vsel %vm1142, %v3895, 0.0
    %v4014 = vsel %vm1142, %v3897, 0.0
    %v4015 = vadd.f32 %v4013, %v4014
    %v4016 = vrot.slane %v4015, 4
    %v4017 = vadd.f32 %v4015, %v4016
    %v4018 = vrot.slane %v4017, 2
    %v4019 = vadd.f32 %v4017, %v4018
    %v4020 = vrot.slane %v4019, 1
    %v4021 = vadd.f32 %v4019, %v4020
    %v4022 = vsel %vm1142, %v3899, 0.0
    %v4023 = vsel %vm1142, %v3901, 0.0
    %v4024 = vadd.f32 %v4022, %v4023
    %v4025 = vrot.slane %v4024, 4
    %v4026 = vadd.f32 %v4024, %v4025
    %v4027 = vrot.slane %v4026, 2
    %v4028 = vadd.f32 %v4026, %v4027
    %v4029 = vrot.slane %v4028, 1
    %v4030 = vadd.f32 %v4028, %v4029
    %v4031 = vsel %vm1142, %v3903, 0.0
    %v4032 = vsel %vm1142, %v3905, 0.0
    %v4033 = vadd.f32 %v4031, %v4032
    %v4034 = vrot.slane %v4033, 4
    %v4035 = vadd.f32 %v4033, %v4034
    %v4036 = vrot.slane %v4035, 2
    %v4037 = vadd.f32 %v4035, %v4036
    %v4038 = vrot.slane %v4037, 1
    %v4039 = vadd.f32 %v4037, %v4038
    %v4040 = vsel %vm1142, %v3907, 0.0
    %v4041 = vsel %vm1142, %v3909, 0.0
    %v4042 = vadd.f32 %v4040, %v4041
    %v4043 = vrot.slane %v4042, 4
    %v4044 = vadd.f32 %v4042, %v4043
    %v4045 = vrot.slane %v4044, 2
    %v4046 = vadd.f32 %v4044, %v4045
    %v4047 = vrot.slane %v4046, 1
    %v4048 = vadd.f32 %v4046, %v4047
    %v4049 = vsel %vm1142, %v3911, 0.0
    %v4050 = vsel %vm1142, %v3913, 0.0
    %v4051 = vadd.f32 %v4049, %v4050
    %v4052 = vrot.slane %v4051, 4
    %v4053 = vadd.f32 %v4051, %v4052
    %v4054 = vrot.slane %v4053, 2
    %v4055 = vadd.f32 %v4053, %v4054
    %v4056 = vrot.slane %v4055, 1
    %v4057 = vadd.f32 %v4055, %v4056
    %v4058 = vrcp.pop %v3922
    %v4059 = vrcp.pop %v3931
    %v4060 = vrcp.pop %v3940
    %v4061 = vrcp.pop %v3949
    %v4062 = vrcp.pop %v3958
    %v4063 = vrcp.pop %v3967
    %v4064 = vrcp.pop %v3976
    %v4065 = vrcp.pop %v3985
    %v4066 = vrcp.pop %v3994
    %v4067 = vrcp.pop %v4003
    %v4068 = vrcp.pop %v4012
    %v4069 = vrcp.pop %v4021
    %v4070 = vrcp.pop %v4030
    %v4071 = vrcp.pop %v4039
    %v4072 = vrcp.pop %v4048
    %v4073 = vrcp.pop %v4057
    %v4074 = vmul.f32 %v3851, %v4058
    %v4075 = vmul.f32 %v3853, %v4058
    %v4076 = vmul.f32 %v3855, %v4059
    %v4077 = vmul.f32 %v3857, %v4059
    %v4078 = vmul.f32 %v3859, %v4060
    %v4079 = vmul.f32 %v3861, %v4060
    %v4080 = vmul.f32 %v3863, %v4061
    %v4081 = vmul.f32 %v3865, %v4061
    %v4082 = vmul.f32 %v3867, %v4062
    %v4083 = vmul.f32 %v3869, %v4062
    %v4084 = vmul.f32 %v3871, %v4063
    %v4085 = vmul.f32 %v3873, %v4063
    %v4086 = vmul.f32 %v3875, %v4064
    %v4087 = vmul.f32 %v3877, %v4064
    %v4088 = vmul.f32 %v3879, %v4065
    %v4089 = vmul.f32 %v3881, %v4065
    %v4090 = vmul.f32 %v3883, %v4066
    %v4091 = vmul.f32 %v3885, %v4066
    %v4092 = vmul.f32 %v3887, %v4067
    %v4093 = vmul.f32 %v3889, %v4067
    %v4094 = vmul.f32 %v3891, %v4068
    %v4095 = vmul.f32 %v3893, %v4068
    %v4096 = vmul.f32 %v3895, %v4069
    %v4097 = vmul.f32 %v3897, %v4069
    %v4098 = vmul.f32 %v3899, %v4070
    %v4099 = vmul.f32 %v3901, %v4070
    %v4100 = vmul.f32 %v3903, %v4071
    %v4101 = vmul.f32 %v3905, %v4071
    %v4102 = vmul.f32 %v3907, %v4072
    %v4103 = vmul.f32 %v3909, %v4072
    %v4104 = vmul.f32 %v3911, %v4073
    %v4105 = vmul.f32 %v3913, %v4073
    %v4106 = vld [vmem:[#allocation14] sm:$0xff]
    %v4107 = vld [vmem:[#allocation14 + $0x8] sm:$0xff]
    %v4108 = vld [vmem:[#allocation14 + $0x10] sm:$0xff]
    %v4109 = vld [vmem:[#allocation14 + $0x18] sm:$0xff]
    %v4110 = vld [vmem:[#allocation14 + $0x20] sm:$0xff]
    %v4111 = vld [vmem:[#allocation14 + $0x28] sm:$0xff]
    %v4112 = vld [vmem:[#allocation14 + $0x30] sm:$0xff]
    %v4113 = vld [vmem:[#allocation14 + $0x38] sm:$0xff]
    %v4114 = vld [vmem:[#allocation14 + $0x40] sm:$0xff]
    %v4115 = vld [vmem:[#allocation14 + $0x48] sm:$0xff]
    %v4116 = vld [vmem:[#allocation14 + $0x50] sm:$0xff]
    %v4117 = vld [vmem:[#allocation14 + $0x58] sm:$0xff]
    %v4118 = vld [vmem:[#allocation14 + $0x60] sm:$0xff]
    %v4119 = vld [vmem:[#allocation14 + $0x68] sm:$0xff]
    %v4120 = vld [vmem:[#allocation14 + $0x70] sm:$0xff]
    %v4121 = vld [vmem:[#allocation14 + $0x78] sm:$0xff]
    %v4122 = vld [vmem:[#allocation14 + $0x80] sm:$0xff]
    %v4123 = vld [vmem:[#allocation14 + $0x88] sm:$0xff]
    %v4124 = vld [vmem:[#allocation14 + $0x90] sm:$0xff]
    %v4125 = vld [vmem:[#allocation14 + $0x98] sm:$0xff]
    %v4126 = vld [vmem:[#allocation14 + $0xa0] sm:$0xff]
    %v4127 = vld [vmem:[#allocation14 + $0xa8] sm:$0xff]
    %v4128 = vld [vmem:[#allocation14 + $0xb0] sm:$0xff]
    %v4129 = vld [vmem:[#allocation14 + $0xb8] sm:$0xff]
    %v4130 = vld [vmem:[#allocation14 + $0xc0] sm:$0xff]
    %v4131 = vld [vmem:[#allocation14 + $0xc8] sm:$0xff]
    %v4132 = vld [vmem:[#allocation14 + $0xd0] sm:$0xff]
    %v4133 = vld [vmem:[#allocation14 + $0xd8] sm:$0xff]
    %v4134 = vld [vmem:[#allocation14 + $0xe0] sm:$0xff]
    %v4135 = vld [vmem:[#allocation14 + $0xe8] sm:$0xff]
    %v4136 = vld [vmem:[#allocation14 + $0xf0] sm:$0xff]
    %v4137 = vld [vmem:[#allocation14 + $0xf8] sm:$0xff]
    %v4138 = vadd.f32 %v2932, %v4106
    %v4139 = vadd.f32 %v2933, %v4107
    %v4140 = vadd.f32 %v2932, %v4108
    %v4141 = vadd.f32 %v2933, %v4109
    %v4142 = vadd.f32 %v2932, %v4110
    %v4143 = vadd.f32 %v2933, %v4111
    %v4144 = vadd.f32 %v2932, %v4112
    %v4145 = vadd.f32 %v2933, %v4113
    %v4146 = vadd.f32 %v2932, %v4114
    %v4147 = vadd.f32 %v2933, %v4115
    %v4148 = vadd.f32 %v2932, %v4116
    %v4149 = vadd.f32 %v2933, %v4117
    %v4150 = vadd.f32 %v2932, %v4118
    %v4151 = vadd.f32 %v2933, %v4119
    %v4152 = vadd.f32 %v2932, %v4120
    %v4153 = vadd.f32 %v2933, %v4121
    %v4154 = vadd.f32 %v2932, %v4122
    %v4155 = vadd.f32 %v2933, %v4123
    %v4156 = vadd.f32 %v2932, %v4124
    %v4157 = vadd.f32 %v2933, %v4125
    %v4158 = vadd.f32 %v2932, %v4126
    %v4159 = vadd.f32 %v2933, %v4127
    %v4160 = vadd.f32 %v2932, %v4128
    %v4161 = vadd.f32 %v2933, %v4129
    %v4162 = vadd.f32 %v2932, %v4130
    %v4163 = vadd.f32 %v2933, %v4131
    %v4164 = vadd.f32 %v2932, %v4132
    %v4165 = vadd.f32 %v2933, %v4133
    %v4166 = vadd.f32 %v2932, %v4134
    %v4167 = vadd.f32 %v2933, %v4135
    %v4168 = vadd.f32 %v2932, %v4136
    %v4169 = vadd.f32 %v2933, %v4137
    %v4170 = vmul.f32 %v4074, %v4138
    %v4171 = vmul.f32 %v4075, %v4139
    %v4172 = vmul.f32 %v4076, %v4140
    %v4173 = vmul.f32 %v4077, %v4141
    %v4174 = vmul.f32 %v4078, %v4142
    %v4175 = vmul.f32 %v4079, %v4143
    %v4176 = vmul.f32 %v4080, %v4144
    %v4177 = vmul.f32 %v4081, %v4145
    %v4178 = vmul.f32 %v4082, %v4146
    %v4179 = vmul.f32 %v4083, %v4147
    %v4180 = vmul.f32 %v4084, %v4148
    %v4181 = vmul.f32 %v4085, %v4149
    %v4182 = vmul.f32 %v4086, %v4150
    %v4183 = vmul.f32 %v4087, %v4151
    %v4184 = vmul.f32 %v4088, %v4152
    %v4185 = vmul.f32 %v4089, %v4153
    %v4186 = vmul.f32 %v4090, %v4154
    %v4187 = vmul.f32 %v4091, %v4155
    %v4188 = vmul.f32 %v4092, %v4156
    %v4189 = vmul.f32 %v4093, %v4157
    %v4190 = vmul.f32 %v4094, %v4158
    %v4191 = vmul.f32 %v4095, %v4159
    %v4192 = vmul.f32 %v4096, %v4160
    %v4193 = vmul.f32 %v4097, %v4161
    %v4194 = vmul.f32 %v4098, %v4162
    %v4195 = vmul.f32 %v4099, %v4163
    %v4196 = vmul.f32 %v4100, %v4164
    %v4197 = vmul.f32 %v4101, %v4165
    %v4198 = vmul.f32 %v4102, %v4166
    %v4199 = vmul.f32 %v4103, %v4167
    %v4200 = vmul.f32 %v4104, %v4168
    %v4201 = vmul.f32 %v4105, %v4169
    %v4202 = vsel %vm1142, %v4170, 0.0
    %v4203 = vsel %vm1142, %v4171, 0.0
    %v4204 = vadd.f32 %v4202, %v4203
    %v4205 = vrot.slane %v4204, 4
    %v4206 = vadd.f32 %v4204, %v4205
    %v4207 = vrot.slane %v4206, 2
    %v4208 = vadd.f32 %v4206, %v4207
    %v4209 = vrot.slane %v4208, 1
    %v4210 = vadd.f32 %v4208, %v4209
    %v4211 = vsel %vm1142, %v4172, 0.0
    %v4212 = vsel %vm1142, %v4173, 0.0
    %v4213 = vadd.f32 %v4211, %v4212
    %v4214 = vrot.slane %v4213, 4
    %v4215 = vadd.f32 %v4213, %v4214
    %v4216 = vrot.slane %v4215, 2
    %v4217 = vadd.f32 %v4215, %v4216
    %v4218 = vrot.slane %v4217, 1
    %v4219 = vadd.f32 %v4217, %v4218
    %v4220 = vsel %vm1142, %v4174, 0.0
    %v4221 = vsel %vm1142, %v4175, 0.0
    %v4222 = vadd.f32 %v4220, %v4221
    %v4223 = vrot.slane %v4222, 4
    %v4224 = vadd.f32 %v4222, %v4223
    %v4225 = vrot.slane %v4224, 2
    %v4226 = vadd.f32 %v4224, %v4225
    %v4227 = vrot.slane %v4226, 1
    %v4228 = vadd.f32 %v4226, %v4227
    %v4229 = vsel %vm1142, %v4176, 0.0
    %v4230 = vsel %vm1142, %v4177, 0.0
    %v4231 = vadd.f32 %v4229, %v4230
    %v4232 = vrot.slane %v4231, 4
    %v4233 = vadd.f32 %v4231, %v4232
    %v4234 = vrot.slane %v4233, 2
    %v4235 = vadd.f32 %v4233, %v4234
    %v4236 = vrot.slane %v4235, 1
    %v4237 = vadd.f32 %v4235, %v4236
    %v4238 = vsel %vm1142, %v4178, 0.0
    %v4239 = vsel %vm1142, %v4179, 0.0
    %v4240 = vadd.f32 %v4238, %v4239
    %v4241 = vrot.slane %v4240, 4
    %v4242 = vadd.f32 %v4240, %v4241
    %v4243 = vrot.slane %v4242, 2
    %v4244 = vadd.f32 %v4242, %v4243
    %v4245 = vrot.slane %v4244, 1
    %v4246 = vadd.f32 %v4244, %v4245
    %v4247 = vsel %vm1142, %v4180, 0.0
    %v4248 = vsel %vm1142, %v4181, 0.0
    %v4249 = vadd.f32 %v4247, %v4248
    %v4250 = vrot.slane %v4249, 4
    %v4251 = vadd.f32 %v4249, %v4250
    %v4252 = vrot.slane %v4251, 2
    %v4253 = vadd.f32 %v4251, %v4252
    %v4254 = vrot.slane %v4253, 1
    %v4255 = vadd.f32 %v4253, %v4254
    %v4256 = vsel %vm1142, %v4182, 0.0
    %v4257 = vsel %vm1142, %v4183, 0.0
    %v4258 = vadd.f32 %v4256, %v4257
    %v4259 = vrot.slane %v4258, 4
    %v4260 = vadd.f32 %v4258, %v4259
    %v4261 = vrot.slane %v4260, 2
    %v4262 = vadd.f32 %v4260, %v4261
    %v4263 = vrot.slane %v4262, 1
    %v4264 = vadd.f32 %v4262, %v4263
    %v4265 = vsel %vm1142, %v4184, 0.0
    %v4266 = vsel %vm1142, %v4185, 0.0
    %v4267 = vadd.f32 %v4265, %v4266
    %v4268 = vrot.slane %v4267, 4
    %v4269 = vadd.f32 %v4267, %v4268
    %v4270 = vrot.slane %v4269, 2
    %v4271 = vadd.f32 %v4269, %v4270
    %v4272 = vrot.slane %v4271, 1
    %v4273 = vadd.f32 %v4271, %v4272
    %v4274 = vsel %vm1142, %v4186, 0.0
    %v4275 = vsel %vm1142, %v4187, 0.0
    %v4276 = vadd.f32 %v4274, %v4275
    %v4277 = vrot.slane %v4276, 4
    %v4278 = vadd.f32 %v4276, %v4277
    %v4279 = vrot.slane %v4278, 2
    %v4280 = vadd.f32 %v4278, %v4279
    %v4281 = vrot.slane %v4280, 1
    %v4282 = vadd.f32 %v4280, %v4281
    %v4283 = vsel %vm1142, %v4188, 0.0
    %v4284 = vsel %vm1142, %v4189, 0.0
    %v4285 = vadd.f32 %v4283, %v4284
    %v4286 = vrot.slane %v4285, 4
    %v4287 = vadd.f32 %v4285, %v4286
    %v4288 = vrot.slane %v4287, 2
    %v4289 = vadd.f32 %v4287, %v4288
    %v4290 = vrot.slane %v4289, 1
    %v4291 = vadd.f32 %v4289, %v4290
    %v4292 = vsel %vm1142, %v4190, 0.0
    %v4293 = vsel %vm1142, %v4191, 0.0
    %v4294 = vadd.f32 %v4292, %v4293
    %v4295 = vrot.slane %v4294, 4
    %v4296 = vadd.f32 %v4294, %v4295
    %v4297 = vrot.slane %v4296, 2
    %v4298 = vadd.f32 %v4296, %v4297
    %v4299 = vrot.slane %v4298, 1
    %v4300 = vadd.f32 %v4298, %v4299
    %v4301 = vsel %vm1142, %v4192, 0.0
    %v4302 = vsel %vm1142, %v4193, 0.0
    %v4303 = vadd.f32 %v4301, %v4302
    %v4304 = vrot.slane %v4303, 4
    %v4305 = vadd.f32 %v4303, %v4304
    %v4306 = vrot.slane %v4305, 2
    %v4307 = vadd.f32 %v4305, %v4306
    %v4308 = vrot.slane %v4307, 1
    %v4309 = vadd.f32 %v4307, %v4308
    %v4310 = vsel %vm1142, %v4194, 0.0
    %v4311 = vsel %vm1142, %v4195, 0.0
    %v4312 = vadd.f32 %v4310, %v4311
    %v4313 = vrot.slane %v4312, 4
    %v4314 = vadd.f32 %v4312, %v4313
    %v4315 = vrot.slane %v4314, 2
    %v4316 = vadd.f32 %v4314, %v4315
    %v4317 = vrot.slane %v4316, 1
    %v4318 = vadd.f32 %v4316, %v4317
    %v4319 = vsel %vm1142, %v4196, 0.0
    %v4320 = vsel %vm1142, %v4197, 0.0
    %v4321 = vadd.f32 %v4319, %v4320
    %v4322 = vrot.slane %v4321, 4
    %v4323 = vadd.f32 %v4321, %v4322
    %v4324 = vrot.slane %v4323, 2
    %v4325 = vadd.f32 %v4323, %v4324
    %v4326 = vrot.slane %v4325, 1
    %v4327 = vadd.f32 %v4325, %v4326
    %v4328 = vsel %vm1142, %v4198, 0.0
    %v4329 = vsel %vm1142, %v4199, 0.0
    %v4330 = vadd.f32 %v4328, %v4329
    %v4331 = vrot.slane %v4330, 4
    %v4332 = vadd.f32 %v4330, %v4331
    %v4333 = vrot.slane %v4332, 2
    %v4334 = vadd.f32 %v4332, %v4333
    %v4335 = vrot.slane %v4334, 1
    %v4336 = vadd.f32 %v4334, %v4335
    %v4337 = vsel %vm1142, %v4200, 0.0
    %v4338 = vsel %vm1142, %v4201, 0.0
    %v4339 = vadd.f32 %v4337, %v4338
    %v4340 = vrot.slane %v4339, 4
    %v4341 = vadd.f32 %v4339, %v4340
    %v4342 = vrot.slane %v4341, 2
    %v4343 = vadd.f32 %v4341, %v4342
    %v4344 = vrot.slane %v4343, 1
    %v4345 = vadd.f32 %v4343, %v4344
    %v4362 = vsel %vm1831, %v4219, %v4210
    %v4363 = vsel %vm1833, %v4228, %v4362
    %v4364 = vsel %vm1835, %v4237, %v4363
    %v4365 = vsel %vm1837, %v4246, %v4364
    %v4366 = vsel %vm1839, %v4255, %v4365
    %v4367 = vsel %vm1841, %v4264, %v4366
    %v4368 = vsel %vm1843, %v4273, %v4367
    %v4369 = vsel %vm1831, %v4291, %v4282
    %v4370 = vsel %vm1833, %v4300, %v4369
    %v4371 = vsel %vm1835, %v4309, %v4370
    %v4372 = vsel %vm1837, %v4318, %v4371
    %v4373 = vsel %vm1839, %v4327, %v4372
    %v4374 = vsel %vm1841, %v4336, %v4373
    %v4375 = vsel %vm1843, %v4345, %v4374
    %s4378 = scalar_lea.vmem [#allocation16], 64
    %4379 = vst.msk [vmem:[%s4378] sm:$0xff] %vm1142, %v4368
    %4380 = vst.msk [vmem:[%s4378 + $0x8] sm:$0xff] %vm1142, %v4375
    %v4381 = vld [vmem:[%s1856] sm:$0xff]
    %v4382 = vld [vmem:[%s1856 + $0x8] sm:$0xff]
    %v4383 = vld [vmem:[%s1856 + $0x10] sm:$0xff]
    %v4384 = vld [vmem:[%s1856 + $0x18] sm:$0xff]
    %v4385 = vld [vmem:[%s1856 + $0x20] sm:$0xff]
    %v4386 = vld [vmem:[%s1856 + $0x28] sm:$0xff]
    %v4387 = vld [vmem:[%s1856 + $0x30] sm:$0xff]
    %v4388 = vld [vmem:[%s1856 + $0x38] sm:$0xff]
    %v4389 = vld [vmem:[%s1856 + $0x40] sm:$0xff]
    %v4390 = vld [vmem:[%s1856 + $0x48] sm:$0xff]
    %v4391 = vld [vmem:[%s1856 + $0x50] sm:$0xff]
    %v4392 = vld [vmem:[%s1856 + $0x58] sm:$0xff]
    %v4393 = vld [vmem:[%s1856 + $0x60] sm:$0xff]
    %v4394 = vld [vmem:[%s1856 + $0x68] sm:$0xff]
    %v4395 = vld [vmem:[%s1856 + $0x70] sm:$0xff]
    %v4396 = vld [vmem:[%s1856 + $0x78] sm:$0xff]
    %v4397 = vld [vmem:[%s1856 + $0x80] sm:$0xff]
    %v4398 = vld [vmem:[%s1856 + $0x88] sm:$0xff]
    %v4399 = vld [vmem:[%s1856 + $0x90] sm:$0xff]
    %v4400 = vld [vmem:[%s1856 + $0x98] sm:$0xff]
    %v4401 = vld [vmem:[%s1856 + $0xa0] sm:$0xff]
    %v4402 = vld [vmem:[%s1856 + $0xa8] sm:$0xff]
    %v4403 = vld [vmem:[%s1856 + $0xb0] sm:$0xff]
    %v4404 = vld [vmem:[%s1856 + $0xb8] sm:$0xff]
    %v4405 = vld [vmem:[%s1856 + $0xc0] sm:$0xff]
    %v4406 = vld [vmem:[%s1856 + $0xc8] sm:$0xff]
    %v4407 = vld [vmem:[%s1856 + $0xd0] sm:$0xff]
    %v4408 = vld [vmem:[%s1856 + $0xd8] sm:$0xff]
    %v4409 = vld [vmem:[%s1856 + $0xe0] sm:$0xff]
    %v4410 = vld [vmem:[%s1856 + $0xe8] sm:$0xff]
    %v4411 = vld [vmem:[%s1856 + $0xf0] sm:$0xff]
    %v4412 = vld [vmem:[%s1856 + $0xf8] sm:$0xff]
    %v4413 = vadd.f32 %v2982, %v4381
    %v4414 = vadd.f32 %v2983, %v4382
    %v4415 = vadd.f32 %v2982, %v4383
    %v4416 = vadd.f32 %v2983, %v4384
    %v4417 = vadd.f32 %v2982, %v4385
    %v4418 = vadd.f32 %v2983, %v4386
    %v4419 = vadd.f32 %v2982, %v4387
    %v4420 = vadd.f32 %v2983, %v4388
    %v4421 = vadd.f32 %v2982, %v4389
    %v4422 = vadd.f32 %v2983, %v4390
    %v4423 = vadd.f32 %v2982, %v4391
    %v4424 = vadd.f32 %v2983, %v4392
    %v4425 = vadd.f32 %v2982, %v4393
    %v4426 = vadd.f32 %v2983, %v4394
    %v4427 = vadd.f32 %v2982, %v4395
    %v4428 = vadd.f32 %v2983, %v4396
    %v4429 = vadd.f32 %v2982, %v4397
    %v4430 = vadd.f32 %v2983, %v4398
    %v4431 = vadd.f32 %v2982, %v4399
    %v4432 = vadd.f32 %v2983, %v4400
    %v4433 = vadd.f32 %v2982, %v4401
    %v4434 = vadd.f32 %v2983, %v4402
    %v4435 = vadd.f32 %v2982, %v4403
    %v4436 = vadd.f32 %v2983, %v4404
    %v4437 = vadd.f32 %v2982, %v4405
    %v4438 = vadd.f32 %v2983, %v4406
    %v4439 = vadd.f32 %v2982, %v4407
    %v4440 = vadd.f32 %v2983, %v4408
    %v4441 = vadd.f32 %v2982, %v4409
    %v4442 = vadd.f32 %v2983, %v4410
    %v4443 = vadd.f32 %v2982, %v4411
    %v4444 = vadd.f32 %v2983, %v4412
    %v4445 = vmul.f32 %v4074, %v4413
    %v4446 = vmul.f32 %v4075, %v4414
    %v4447 = vmul.f32 %v4076, %v4415
    %v4448 = vmul.f32 %v4077, %v4416
    %v4449 = vmul.f32 %v4078, %v4417
    %v4450 = vmul.f32 %v4079, %v4418
    %v4451 = vmul.f32 %v4080, %v4419
    %v4452 = vmul.f32 %v4081, %v4420
    %v4453 = vmul.f32 %v4082, %v4421
    %v4454 = vmul.f32 %v4083, %v4422
    %v4455 = vmul.f32 %v4084, %v4423
    %v4456 = vmul.f32 %v4085, %v4424
    %v4457 = vmul.f32 %v4086, %v4425
    %v4458 = vmul.f32 %v4087, %v4426
    %v4459 = vmul.f32 %v4088, %v4427
    %v4460 = vmul.f32 %v4089, %v4428
    %v4461 = vmul.f32 %v4090, %v4429
    %v4462 = vmul.f32 %v4091, %v4430
    %v4463 = vmul.f32 %v4092, %v4431
    %v4464 = vmul.f32 %v4093, %v4432
    %v4465 = vmul.f32 %v4094, %v4433
    %v4466 = vmul.f32 %v4095, %v4434
    %v4467 = vmul.f32 %v4096, %v4435
    %v4468 = vmul.f32 %v4097, %v4436
    %v4469 = vmul.f32 %v4098, %v4437
    %v4470 = vmul.f32 %v4099, %v4438
    %v4471 = vmul.f32 %v4100, %v4439
    %v4472 = vmul.f32 %v4101, %v4440
    %v4473 = vmul.f32 %v4102, %v4441
    %v4474 = vmul.f32 %v4103, %v4442
    %v4475 = vmul.f32 %v4104, %v4443
    %v4476 = vmul.f32 %v4105, %v4444
    %v4477 = vsel %vm1142, %v4445, 0.0
    %v4478 = vsel %vm1142, %v4446, 0.0
    %v4479 = vadd.f32 %v4477, %v4478
    %v4480 = vrot.slane %v4479, 4
    %v4481 = vadd.f32 %v4479, %v4480
    %v4482 = vrot.slane %v4481, 2
    %v4483 = vadd.f32 %v4481, %v4482
    %v4484 = vrot.slane %v4483, 1
    %v4485 = vadd.f32 %v4483, %v4484
    %v4486 = vsel %vm1142, %v4447, 0.0
    %v4487 = vsel %vm1142, %v4448, 0.0
    %v4488 = vadd.f32 %v4486, %v4487
    %v4489 = vrot.slane %v4488, 4
    %v4490 = vadd.f32 %v4488, %v4489
    %v4491 = vrot.slane %v4490, 2
    %v4492 = vadd.f32 %v4490, %v4491
    %v4493 = vrot.slane %v4492, 1
    %v4494 = vadd.f32 %v4492, %v4493
    %v4495 = vsel %vm1142, %v4449, 0.0
    %v4496 = vsel %vm1142, %v4450, 0.0
    %v4497 = vadd.f32 %v4495, %v4496
    %v4498 = vrot.slane %v4497, 4
    %v4499 = vadd.f32 %v4497, %v4498
    %v4500 = vrot.slane %v4499, 2
    %v4501 = vadd.f32 %v4499, %v4500
    %v4502 = vrot.slane %v4501, 1
    %v4503 = vadd.f32 %v4501, %v4502
    %v4504 = vsel %vm1142, %v4451, 0.0
    %v4505 = vsel %vm1142, %v4452, 0.0
    %v4506 = vadd.f32 %v4504, %v4505
    %v4507 = vrot.slane %v4506, 4
    %v4508 = vadd.f32 %v4506, %v4507
    %v4509 = vrot.slane %v4508, 2
    %v4510 = vadd.f32 %v4508, %v4509
    %v4511 = vrot.slane %v4510, 1
    %v4512 = vadd.f32 %v4510, %v4511
    %v4513 = vsel %vm1142, %v4453, 0.0
    %v4514 = vsel %vm1142, %v4454, 0.0
    %v4515 = vadd.f32 %v4513, %v4514
    %v4516 = vrot.slane %v4515, 4
    %v4517 = vadd.f32 %v4515, %v4516
    %v4518 = vrot.slane %v4517, 2
    %v4519 = vadd.f32 %v4517, %v4518
    %v4520 = vrot.slane %v4519, 1
    %v4521 = vadd.f32 %v4519, %v4520
    %v4522 = vsel %vm1142, %v4455, 0.0
    %v4523 = vsel %vm1142, %v4456, 0.0
    %v4524 = vadd.f32 %v4522, %v4523
    %v4525 = vrot.slane %v4524, 4
    %v4526 = vadd.f32 %v4524, %v4525
    %v4527 = vrot.slane %v4526, 2
    %v4528 = vadd.f32 %v4526, %v4527
    %v4529 = vrot.slane %v4528, 1
    %v4530 = vadd.f32 %v4528, %v4529
    %v4531 = vsel %vm1142, %v4457, 0.0
    %v4532 = vsel %vm1142, %v4458, 0.0
    %v4533 = vadd.f32 %v4531, %v4532
    %v4534 = vrot.slane %v4533, 4
    %v4535 = vadd.f32 %v4533, %v4534
    %v4536 = vrot.slane %v4535, 2
    %v4537 = vadd.f32 %v4535, %v4536
    %v4538 = vrot.slane %v4537, 1
    %v4539 = vadd.f32 %v4537, %v4538
    %v4540 = vsel %vm1142, %v4459, 0.0
    %v4541 = vsel %vm1142, %v4460, 0.0
    %v4542 = vadd.f32 %v4540, %v4541
    %v4543 = vrot.slane %v4542, 4
    %v4544 = vadd.f32 %v4542, %v4543
    %v4545 = vrot.slane %v4544, 2
    %v4546 = vadd.f32 %v4544, %v4545
    %v4547 = vrot.slane %v4546, 1
    %v4548 = vadd.f32 %v4546, %v4547
    %v4549 = vsel %vm1142, %v4461, 0.0
    %v4550 = vsel %vm1142, %v4462, 0.0
    %v4551 = vadd.f32 %v4549, %v4550
    %v4552 = vrot.slane %v4551, 4
    %v4553 = vadd.f32 %v4551, %v4552
    %v4554 = vrot.slane %v4553, 2
    %v4555 = vadd.f32 %v4553, %v4554
    %v4556 = vrot.slane %v4555, 1
    %v4557 = vadd.f32 %v4555, %v4556
    %v4558 = vsel %vm1142, %v4463, 0.0
    %v4559 = vsel %vm1142, %v4464, 0.0
    %v4560 = vadd.f32 %v4558, %v4559
    %v4561 = vrot.slane %v4560, 4
    %v4562 = vadd.f32 %v4560, %v4561
    %v4563 = vrot.slane %v4562, 2
    %v4564 = vadd.f32 %v4562, %v4563
    %v4565 = vrot.slane %v4564, 1
    %v4566 = vadd.f32 %v4564, %v4565
    %v4567 = vsel %vm1142, %v4465, 0.0
    %v4568 = vsel %vm1142, %v4466, 0.0
    %v4569 = vadd.f32 %v4567, %v4568
    %v4570 = vrot.slane %v4569, 4
    %v4571 = vadd.f32 %v4569, %v4570
    %v4572 = vrot.slane %v4571, 2
    %v4573 = vadd.f32 %v4571, %v4572
    %v4574 = vrot.slane %v4573, 1
    %v4575 = vadd.f32 %v4573, %v4574
    %v4576 = vsel %vm1142, %v4467, 0.0
    %v4577 = vsel %vm1142, %v4468, 0.0
    %v4578 = vadd.f32 %v4576, %v4577
    %v4579 = vrot.slane %v4578, 4
    %v4580 = vadd.f32 %v4578, %v4579
    %v4581 = vrot.slane %v4580, 2
    %v4582 = vadd.f32 %v4580, %v4581
    %v4583 = vrot.slane %v4582, 1
    %v4584 = vadd.f32 %v4582, %v4583
    %v4585 = vsel %vm1142, %v4469, 0.0
    %v4586 = vsel %vm1142, %v4470, 0.0
    %v4587 = vadd.f32 %v4585, %v4586
    %v4588 = vrot.slane %v4587, 4
    %v4589 = vadd.f32 %v4587, %v4588
    %v4590 = vrot.slane %v4589, 2
    %v4591 = vadd.f32 %v4589, %v4590
    %v4592 = vrot.slane %v4591, 1
    %v4593 = vadd.f32 %v4591, %v4592
    %v4594 = vsel %vm1142, %v4471, 0.0
    %v4595 = vsel %vm1142, %v4472, 0.0
    %v4596 = vadd.f32 %v4594, %v4595
    %v4597 = vrot.slane %v4596, 4
    %v4598 = vadd.f32 %v4596, %v4597
    %v4599 = vrot.slane %v4598, 2
    %v4600 = vadd.f32 %v4598, %v4599
    %v4601 = vrot.slane %v4600, 1
    %v4602 = vadd.f32 %v4600, %v4601
    %v4603 = vsel %vm1142, %v4473, 0.0
    %v4604 = vsel %vm1142, %v4474, 0.0
    %v4605 = vadd.f32 %v4603, %v4604
    %v4606 = vrot.slane %v4605, 4
    %v4607 = vadd.f32 %v4605, %v4606
    %v4608 = vrot.slane %v4607, 2
    %v4609 = vadd.f32 %v4607, %v4608
    %v4610 = vrot.slane %v4609, 1
    %v4611 = vadd.f32 %v4609, %v4610
    %v4612 = vsel %vm1142, %v4475, 0.0
    %v4613 = vsel %vm1142, %v4476, 0.0
    %v4614 = vadd.f32 %v4612, %v4613
    %v4615 = vrot.slane %v4614, 4
    %v4616 = vadd.f32 %v4614, %v4615
    %v4617 = vrot.slane %v4616, 2
    %v4618 = vadd.f32 %v4616, %v4617
    %v4619 = vrot.slane %v4618, 1
    %v4620 = vadd.f32 %v4618, %v4619
    %v4637 = vsel %vm1831, %v4494, %v4485
    %v4638 = vsel %vm1833, %v4503, %v4637
    %v4639 = vsel %vm1835, %v4512, %v4638
    %v4640 = vsel %vm1837, %v4521, %v4639
    %v4641 = vsel %vm1839, %v4530, %v4640
    %v4642 = vsel %vm1841, %v4539, %v4641
    %v4643 = vsel %vm1843, %v4548, %v4642
    %v4644 = vsel %vm1831, %v4566, %v4557
    %v4645 = vsel %vm1833, %v4575, %v4644
    %v4646 = vsel %vm1835, %v4584, %v4645
    %v4647 = vsel %vm1837, %v4593, %v4646
    %v4648 = vsel %vm1839, %v4602, %v4647
    %v4649 = vsel %vm1841, %v4611, %v4648
    %v4650 = vsel %vm1843, %v4620, %v4649
    %s4653 = scalar_lea.vmem [#allocation16], 80
    %4654 = vst.msk [vmem:[%s4653] sm:$0xff] %vm1142, %v4643
    %4655 = vst.msk [vmem:[%s4653 + $0x8] sm:$0xff] %vm1142, %v4650
    %v4656 = vld [vmem:[%s2132] sm:$0xff]
    %v4657 = vld [vmem:[%s2132 + $0x8] sm:$0xff]
    %v4658 = vld [vmem:[%s2132 + $0x10] sm:$0xff]
    %v4659 = vld [vmem:[%s2132 + $0x18] sm:$0xff]
    %v4660 = vld [vmem:[%s2132 + $0x20] sm:$0xff]
    %v4661 = vld [vmem:[%s2132 + $0x28] sm:$0xff]
    %v4662 = vld [vmem:[%s2132 + $0x30] sm:$0xff]
    %v4663 = vld [vmem:[%s2132 + $0x38] sm:$0xff]
    %v4664 = vld [vmem:[%s2132 + $0x40] sm:$0xff]
    %v4665 = vld [vmem:[%s2132 + $0x48] sm:$0xff]
    %v4666 = vld [vmem:[%s2132 + $0x50] sm:$0xff]
    %v4667 = vld [vmem:[%s2132 + $0x58] sm:$0xff]
    %v4668 = vld [vmem:[%s2132 + $0x60] sm:$0xff]
    %v4669 = vld [vmem:[%s2132 + $0x68] sm:$0xff]
    %v4670 = vld [vmem:[%s2132 + $0x70] sm:$0xff]
    %v4671 = vld [vmem:[%s2132 + $0x78] sm:$0xff]
    %v4672 = vld [vmem:[%s2132 + $0x80] sm:$0xff]
    %v4673 = vld [vmem:[%s2132 + $0x88] sm:$0xff]
    %v4674 = vld [vmem:[%s2132 + $0x90] sm:$0xff]
    %v4675 = vld [vmem:[%s2132 + $0x98] sm:$0xff]
    %v4676 = vld [vmem:[%s2132 + $0xa0] sm:$0xff]
    %v4677 = vld [vmem:[%s2132 + $0xa8] sm:$0xff]
    %v4678 = vld [vmem:[%s2132 + $0xb0] sm:$0xff]
    %v4679 = vld [vmem:[%s2132 + $0xb8] sm:$0xff]
    %v4680 = vld [vmem:[%s2132 + $0xc0] sm:$0xff]
    %v4681 = vld [vmem:[%s2132 + $0xc8] sm:$0xff]
    %v4682 = vld [vmem:[%s2132 + $0xd0] sm:$0xff]
    %v4683 = vld [vmem:[%s2132 + $0xd8] sm:$0xff]
    %v4684 = vld [vmem:[%s2132 + $0xe0] sm:$0xff]
    %v4685 = vld [vmem:[%s2132 + $0xe8] sm:$0xff]
    %v4686 = vld [vmem:[%s2132 + $0xf0] sm:$0xff]
    %v4687 = vld [vmem:[%s2132 + $0xf8] sm:$0xff]
    %v4688 = vadd.f32 %v3032, %v4656
    %v4689 = vadd.f32 %v3033, %v4657
    %v4690 = vadd.f32 %v3032, %v4658
    %v4691 = vadd.f32 %v3033, %v4659
    %v4692 = vadd.f32 %v3032, %v4660
    %v4693 = vadd.f32 %v3033, %v4661
    %v4694 = vadd.f32 %v3032, %v4662
    %v4695 = vadd.f32 %v3033, %v4663
    %v4696 = vadd.f32 %v3032, %v4664
    %v4697 = vadd.f32 %v3033, %v4665
    %v4698 = vadd.f32 %v3032, %v4666
    %v4699 = vadd.f32 %v3033, %v4667
    %v4700 = vadd.f32 %v3032, %v4668
    %v4701 = vadd.f32 %v3033, %v4669
    %v4702 = vadd.f32 %v3032, %v4670
    %v4703 = vadd.f32 %v3033, %v4671
    %v4704 = vadd.f32 %v3032, %v4672
    %v4705 = vadd.f32 %v3033, %v4673
    %v4706 = vadd.f32 %v3032, %v4674
    %v4707 = vadd.f32 %v3033, %v4675
    %v4708 = vadd.f32 %v3032, %v4676
    %v4709 = vadd.f32 %v3033, %v4677
    %v4710 = vadd.f32 %v3032, %v4678
    %v4711 = vadd.f32 %v3033, %v4679
    %v4712 = vadd.f32 %v3032, %v4680
    %v4713 = vadd.f32 %v3033, %v4681
    %v4714 = vadd.f32 %v3032, %v4682
    %v4715 = vadd.f32 %v3033, %v4683
    %v4716 = vadd.f32 %v3032, %v4684
    %v4717 = vadd.f32 %v3033, %v4685
    %v4718 = vadd.f32 %v3032, %v4686
    %v4719 = vadd.f32 %v3033, %v4687
    %v4720 = vmul.f32 %v4074, %v4688
    %v4721 = vmul.f32 %v4075, %v4689
    %v4722 = vmul.f32 %v4076, %v4690
    %v4723 = vmul.f32 %v4077, %v4691
    %v4724 = vmul.f32 %v4078, %v4692
    %v4725 = vmul.f32 %v4079, %v4693
    %v4726 = vmul.f32 %v4080, %v4694
    %v4727 = vmul.f32 %v4081, %v4695
    %v4728 = vmul.f32 %v4082, %v4696
    %v4729 = vmul.f32 %v4083, %v4697
    %v4730 = vmul.f32 %v4084, %v4698
    %v4731 = vmul.f32 %v4085, %v4699
    %v4732 = vmul.f32 %v4086, %v4700
    %v4733 = vmul.f32 %v4087, %v4701
    %v4734 = vmul.f32 %v4088, %v4702
    %v4735 = vmul.f32 %v4089, %v4703
    %v4736 = vmul.f32 %v4090, %v4704
    %v4737 = vmul.f32 %v4091, %v4705
    %v4738 = vmul.f32 %v4092, %v4706
    %v4739 = vmul.f32 %v4093, %v4707
    %v4740 = vmul.f32 %v4094, %v4708
    %v4741 = vmul.f32 %v4095, %v4709
    %v4742 = vmul.f32 %v4096, %v4710
    %v4743 = vmul.f32 %v4097, %v4711
    %v4744 = vmul.f32 %v4098, %v4712
    %v4745 = vmul.f32 %v4099, %v4713
    %v4746 = vmul.f32 %v4100, %v4714
    %v4747 = vmul.f32 %v4101, %v4715
    %v4748 = vmul.f32 %v4102, %v4716
    %v4749 = vmul.f32 %v4103, %v4717
    %v4750 = vmul.f32 %v4104, %v4718
    %v4751 = vmul.f32 %v4105, %v4719
    %v4752 = vsel %vm1142, %v4720, 0.0
    %v4753 = vsel %vm1142, %v4721, 0.0
    %v4754 = vadd.f32 %v4752, %v4753
    %v4755 = vrot.slane %v4754, 4
    %v4756 = vadd.f32 %v4754, %v4755
    %v4757 = vrot.slane %v4756, 2
    %v4758 = vadd.f32 %v4756, %v4757
    %v4759 = vrot.slane %v4758, 1
    %v4760 = vadd.f32 %v4758, %v4759
    %v4761 = vsel %vm1142, %v4722, 0.0
    %v4762 = vsel %vm1142, %v4723, 0.0
    %v4763 = vadd.f32 %v4761, %v4762
    %v4764 = vrot.slane %v4763, 4
    %v4765 = vadd.f32 %v4763, %v4764
    %v4766 = vrot.slane %v4765, 2
    %v4767 = vadd.f32 %v4765, %v4766
    %v4768 = vrot.slane %v4767, 1
    %v4769 = vadd.f32 %v4767, %v4768
    %v4770 = vsel %vm1142, %v4724, 0.0
    %v4771 = vsel %vm1142, %v4725, 0.0
    %v4772 = vadd.f32 %v4770, %v4771
    %v4773 = vrot.slane %v4772, 4
    %v4774 = vadd.f32 %v4772, %v4773
    %v4775 = vrot.slane %v4774, 2
    %v4776 = vadd.f32 %v4774, %v4775
    %v4777 = vrot.slane %v4776, 1
    %v4778 = vadd.f32 %v4776, %v4777
    %v4779 = vsel %vm1142, %v4726, 0.0
    %v4780 = vsel %vm1142, %v4727, 0.0
    %v4781 = vadd.f32 %v4779, %v4780
    %v4782 = vrot.slane %v4781, 4
    %v4783 = vadd.f32 %v4781, %v4782
    %v4784 = vrot.slane %v4783, 2
    %v4785 = vadd.f32 %v4783, %v4784
    %v4786 = vrot.slane %v4785, 1
    %v4787 = vadd.f32 %v4785, %v4786
    %v4788 = vsel %vm1142, %v4728, 0.0
    %v4789 = vsel %vm1142, %v4729, 0.0
    %v4790 = vadd.f32 %v4788, %v4789
    %v4791 = vrot.slane %v4790, 4
    %v4792 = vadd.f32 %v4790, %v4791
    %v4793 = vrot.slane %v4792, 2
    %v4794 = vadd.f32 %v4792, %v4793
    %v4795 = vrot.slane %v4794, 1
    %v4796 = vadd.f32 %v4794, %v4795
    %v4797 = vsel %vm1142, %v4730, 0.0
    %v4798 = vsel %vm1142, %v4731, 0.0
    %v4799 = vadd.f32 %v4797, %v4798
    %v4800 = vrot.slane %v4799, 4
    %v4801 = vadd.f32 %v4799, %v4800
    %v4802 = vrot.slane %v4801, 2
    %v4803 = vadd.f32 %v4801, %v4802
    %v4804 = vrot.slane %v4803, 1
    %v4805 = vadd.f32 %v4803, %v4804
    %v4806 = vsel %vm1142, %v4732, 0.0
    %v4807 = vsel %vm1142, %v4733, 0.0
    %v4808 = vadd.f32 %v4806, %v4807
    %v4809 = vrot.slane %v4808, 4
    %v4810 = vadd.f32 %v4808, %v4809
    %v4811 = vrot.slane %v4810, 2
    %v4812 = vadd.f32 %v4810, %v4811
    %v4813 = vrot.slane %v4812, 1
    %v4814 = vadd.f32 %v4812, %v4813
    %v4815 = vsel %vm1142, %v4734, 0.0
    %v4816 = vsel %vm1142, %v4735, 0.0
    %v4817 = vadd.f32 %v4815, %v4816
    %v4818 = vrot.slane %v4817, 4
    %v4819 = vadd.f32 %v4817, %v4818
    %v4820 = vrot.slane %v4819, 2
    %v4821 = vadd.f32 %v4819, %v4820
    %v4822 = vrot.slane %v4821, 1
    %v4823 = vadd.f32 %v4821, %v4822
    %v4824 = vsel %vm1142, %v4736, 0.0
    %v4825 = vsel %vm1142, %v4737, 0.0
    %v4826 = vadd.f32 %v4824, %v4825
    %v4827 = vrot.slane %v4826, 4
    %v4828 = vadd.f32 %v4826, %v4827
    %v4829 = vrot.slane %v4828, 2
    %v4830 = vadd.f32 %v4828, %v4829
    %v4831 = vrot.slane %v4830, 1
    %v4832 = vadd.f32 %v4830, %v4831
    %v4833 = vsel %vm1142, %v4738, 0.0
    %v4834 = vsel %vm1142, %v4739, 0.0
    %v4835 = vadd.f32 %v4833, %v4834
    %v4836 = vrot.slane %v4835, 4
    %v4837 = vadd.f32 %v4835, %v4836
    %v4838 = vrot.slane %v4837, 2
    %v4839 = vadd.f32 %v4837, %v4838
    %v4840 = vrot.slane %v4839, 1
    %v4841 = vadd.f32 %v4839, %v4840
    %v4842 = vsel %vm1142, %v4740, 0.0
    %v4843 = vsel %vm1142, %v4741, 0.0
    %v4844 = vadd.f32 %v4842, %v4843
    %v4845 = vrot.slane %v4844, 4
    %v4846 = vadd.f32 %v4844, %v4845
    %v4847 = vrot.slane %v4846, 2
    %v4848 = vadd.f32 %v4846, %v4847
    %v4849 = vrot.slane %v4848, 1
    %v4850 = vadd.f32 %v4848, %v4849
    %v4851 = vsel %vm1142, %v4742, 0.0
    %v4852 = vsel %vm1142, %v4743, 0.0
    %v4853 = vadd.f32 %v4851, %v4852
    %v4854 = vrot.slane %v4853, 4
    %v4855 = vadd.f32 %v4853, %v4854
    %v4856 = vrot.slane %v4855, 2
    %v4857 = vadd.f32 %v4855, %v4856
    %v4858 = vrot.slane %v4857, 1
    %v4859 = vadd.f32 %v4857, %v4858
    %v4860 = vsel %vm1142, %v4744, 0.0
    %v4861 = vsel %vm1142, %v4745, 0.0
    %v4862 = vadd.f32 %v4860, %v4861
    %v4863 = vrot.slane %v4862, 4
    %v4864 = vadd.f32 %v4862, %v4863
    %v4865 = vrot.slane %v4864, 2
    %v4866 = vadd.f32 %v4864, %v4865
    %v4867 = vrot.slane %v4866, 1
    %v4868 = vadd.f32 %v4866, %v4867
    %v4869 = vsel %vm1142, %v4746, 0.0
    %v4870 = vsel %vm1142, %v4747, 0.0
    %v4871 = vadd.f32 %v4869, %v4870
    %v4872 = vrot.slane %v4871, 4
    %v4873 = vadd.f32 %v4871, %v4872
    %v4874 = vrot.slane %v4873, 2
    %v4875 = vadd.f32 %v4873, %v4874
    %v4876 = vrot.slane %v4875, 1
    %v4877 = vadd.f32 %v4875, %v4876
    %v4878 = vsel %vm1142, %v4748, 0.0
    %v4879 = vsel %vm1142, %v4749, 0.0
    %v4880 = vadd.f32 %v4878, %v4879
    %v4881 = vrot.slane %v4880, 4
    %v4882 = vadd.f32 %v4880, %v4881
    %v4883 = vrot.slane %v4882, 2
    %v4884 = vadd.f32 %v4882, %v4883
    %v4885 = vrot.slane %v4884, 1
    %v4886 = vadd.f32 %v4884, %v4885
    %v4887 = vsel %vm1142, %v4750, 0.0
    %v4888 = vsel %vm1142, %v4751, 0.0
    %v4889 = vadd.f32 %v4887, %v4888
    %v4890 = vrot.slane %v4889, 4
    %v4891 = vadd.f32 %v4889, %v4890
    %v4892 = vrot.slane %v4891, 2
    %v4893 = vadd.f32 %v4891, %v4892
    %v4894 = vrot.slane %v4893, 1
    %v4895 = vadd.f32 %v4893, %v4894
    %v4912 = vsel %vm1831, %v4769, %v4760
    %v4913 = vsel %vm1833, %v4778, %v4912
    %v4914 = vsel %vm1835, %v4787, %v4913
    %v4915 = vsel %vm1837, %v4796, %v4914
    %v4916 = vsel %vm1839, %v4805, %v4915
    %v4917 = vsel %vm1841, %v4814, %v4916
    %v4918 = vsel %vm1843, %v4823, %v4917
    %v4919 = vsel %vm1831, %v4841, %v4832
    %v4920 = vsel %vm1833, %v4850, %v4919
    %v4921 = vsel %vm1835, %v4859, %v4920
    %v4922 = vsel %vm1837, %v4868, %v4921
    %v4923 = vsel %vm1839, %v4877, %v4922
    %v4924 = vsel %vm1841, %v4886, %v4923
    %v4925 = vsel %vm1843, %v4895, %v4924
    %s4928 = scalar_lea.vmem [#allocation16], 96
    %4929 = vst.msk [vmem:[%s4928] sm:$0xff] %vm1142, %v4918
    %4930 = vst.msk [vmem:[%s4928 + $0x8] sm:$0xff] %vm1142, %v4925
    %v4931 = vld [vmem:[%s2408] sm:$0xff]
    %v4932 = vld [vmem:[%s2408 + $0x8] sm:$0xff]
    %v4933 = vld [vmem:[%s2408 + $0x10] sm:$0xff]
    %v4934 = vld [vmem:[%s2408 + $0x18] sm:$0xff]
    %v4935 = vld [vmem:[%s2408 + $0x20] sm:$0xff]
    %v4936 = vld [vmem:[%s2408 + $0x28] sm:$0xff]
    %v4937 = vld [vmem:[%s2408 + $0x30] sm:$0xff]
    %v4938 = vld [vmem:[%s2408 + $0x38] sm:$0xff]
    %v4939 = vld [vmem:[%s2408 + $0x40] sm:$0xff]
    %v4940 = vld [vmem:[%s2408 + $0x48] sm:$0xff]
    %v4941 = vld [vmem:[%s2408 + $0x50] sm:$0xff]
    %v4942 = vld [vmem:[%s2408 + $0x58] sm:$0xff]
    %v4943 = vld [vmem:[%s2408 + $0x60] sm:$0xff]
    %v4944 = vld [vmem:[%s2408 + $0x68] sm:$0xff]
    %v4945 = vld [vmem:[%s2408 + $0x70] sm:$0xff]
    %v4946 = vld [vmem:[%s2408 + $0x78] sm:$0xff]
    %v4947 = vld [vmem:[%s2408 + $0x80] sm:$0xff]
    %v4948 = vld [vmem:[%s2408 + $0x88] sm:$0xff]
    %v4949 = vld [vmem:[%s2408 + $0x90] sm:$0xff]
    %v4950 = vld [vmem:[%s2408 + $0x98] sm:$0xff]
    %v4951 = vld [vmem:[%s2408 + $0xa0] sm:$0xff]
    %v4952 = vld [vmem:[%s2408 + $0xa8] sm:$0xff]
    %v4953 = vld [vmem:[%s2408 + $0xb0] sm:$0xff]
    %v4954 = vld [vmem:[%s2408 + $0xb8] sm:$0xff]
    %v4955 = vld [vmem:[%s2408 + $0xc0] sm:$0xff]
    %v4956 = vld [vmem:[%s2408 + $0xc8] sm:$0xff]
    %v4957 = vld [vmem:[%s2408 + $0xd0] sm:$0xff]
    %v4958 = vld [vmem:[%s2408 + $0xd8] sm:$0xff]
    %v4959 = vld [vmem:[%s2408 + $0xe0] sm:$0xff]
    %v4960 = vld [vmem:[%s2408 + $0xe8] sm:$0xff]
    %v4961 = vld [vmem:[%s2408 + $0xf0] sm:$0xff]
    %v4962 = vld [vmem:[%s2408 + $0xf8] sm:$0xff]
    %v4963 = vadd.f32 %v3082, %v4931
    %v4964 = vadd.f32 %v3083, %v4932
    %v4965 = vadd.f32 %v3082, %v4933
    %v4966 = vadd.f32 %v3083, %v4934
    %v4967 = vadd.f32 %v3082, %v4935
    %v4968 = vadd.f32 %v3083, %v4936
    %v4969 = vadd.f32 %v3082, %v4937
    %v4970 = vadd.f32 %v3083, %v4938
    %v4971 = vadd.f32 %v3082, %v4939
    %v4972 = vadd.f32 %v3083, %v4940
    %v4973 = vadd.f32 %v3082, %v4941
    %v4974 = vadd.f32 %v3083, %v4942
    %v4975 = vadd.f32 %v3082, %v4943
    %v4976 = vadd.f32 %v3083, %v4944
    %v4977 = vadd.f32 %v3082, %v4945
    %v4978 = vadd.f32 %v3083, %v4946
    %v4979 = vadd.f32 %v3082, %v4947
    %v4980 = vadd.f32 %v3083, %v4948
    %v4981 = vadd.f32 %v3082, %v4949
    %v4982 = vadd.f32 %v3083, %v4950
    %v4983 = vadd.f32 %v3082, %v4951
    %v4984 = vadd.f32 %v3083, %v4952
    %v4985 = vadd.f32 %v3082, %v4953
    %v4986 = vadd.f32 %v3083, %v4954
    %v4987 = vadd.f32 %v3082, %v4955
    %v4988 = vadd.f32 %v3083, %v4956
    %v4989 = vadd.f32 %v3082, %v4957
    %v4990 = vadd.f32 %v3083, %v4958
    %v4991 = vadd.f32 %v3082, %v4959
    %v4992 = vadd.f32 %v3083, %v4960
    %v4993 = vadd.f32 %v3082, %v4961
    %v4994 = vadd.f32 %v3083, %v4962
    %v4995 = vmul.f32 %v4074, %v4963
    %v4996 = vmul.f32 %v4075, %v4964
    %v4997 = vmul.f32 %v4076, %v4965
    %v4998 = vmul.f32 %v4077, %v4966
    %v4999 = vmul.f32 %v4078, %v4967
    %v5000 = vmul.f32 %v4079, %v4968
    %v5001 = vmul.f32 %v4080, %v4969
    %v5002 = vmul.f32 %v4081, %v4970
    %v5003 = vmul.f32 %v4082, %v4971
    %v5004 = vmul.f32 %v4083, %v4972
    %v5005 = vmul.f32 %v4084, %v4973
    %v5006 = vmul.f32 %v4085, %v4974
    %v5007 = vmul.f32 %v4086, %v4975
    %v5008 = vmul.f32 %v4087, %v4976
    %v5009 = vmul.f32 %v4088, %v4977
    %v5010 = vmul.f32 %v4089, %v4978
    %v5011 = vmul.f32 %v4090, %v4979
    %v5012 = vmul.f32 %v4091, %v4980
    %v5013 = vmul.f32 %v4092, %v4981
    %v5014 = vmul.f32 %v4093, %v4982
    %v5015 = vmul.f32 %v4094, %v4983
    %v5016 = vmul.f32 %v4095, %v4984
    %v5017 = vmul.f32 %v4096, %v4985
    %v5018 = vmul.f32 %v4097, %v4986
    %v5019 = vmul.f32 %v4098, %v4987
    %v5020 = vmul.f32 %v4099, %v4988
    %v5021 = vmul.f32 %v4100, %v4989
    %v5022 = vmul.f32 %v4101, %v4990
    %v5023 = vmul.f32 %v4102, %v4991
    %v5024 = vmul.f32 %v4103, %v4992
    %v5025 = vmul.f32 %v4104, %v4993
    %v5026 = vmul.f32 %v4105, %v4994
    %v5027 = vsel %vm1142, %v4995, 0.0
    %v5028 = vsel %vm1142, %v4996, 0.0
    %v5029 = vadd.f32 %v5027, %v5028
    %v5030 = vrot.slane %v5029, 4
    %v5031 = vadd.f32 %v5029, %v5030
    %v5032 = vrot.slane %v5031, 2
    %v5033 = vadd.f32 %v5031, %v5032
    %v5034 = vrot.slane %v5033, 1
    %v5035 = vadd.f32 %v5033, %v5034
    %v5036 = vsel %vm1142, %v4997, 0.0
    %v5037 = vsel %vm1142, %v4998, 0.0
    %v5038 = vadd.f32 %v5036, %v5037
    %v5039 = vrot.slane %v5038, 4
    %v5040 = vadd.f32 %v5038, %v5039
    %v5041 = vrot.slane %v5040, 2
    %v5042 = vadd.f32 %v5040, %v5041
    %v5043 = vrot.slane %v5042, 1
    %v5044 = vadd.f32 %v5042, %v5043
    %v5045 = vsel %vm1142, %v4999, 0.0
    %v5046 = vsel %vm1142, %v5000, 0.0
    %v5047 = vadd.f32 %v5045, %v5046
    %v5048 = vrot.slane %v5047, 4
    %v5049 = vadd.f32 %v5047, %v5048
    %v5050 = vrot.slane %v5049, 2
    %v5051 = vadd.f32 %v5049, %v5050
    %v5052 = vrot.slane %v5051, 1
    %v5053 = vadd.f32 %v5051, %v5052
    %v5054 = vsel %vm1142, %v5001, 0.0
    %v5055 = vsel %vm1142, %v5002, 0.0
    %v5056 = vadd.f32 %v5054, %v5055
    %v5057 = vrot.slane %v5056, 4
    %v5058 = vadd.f32 %v5056, %v5057
    %v5059 = vrot.slane %v5058, 2
    %v5060 = vadd.f32 %v5058, %v5059
    %v5061 = vrot.slane %v5060, 1
    %v5062 = vadd.f32 %v5060, %v5061
    %v5063 = vsel %vm1142, %v5003, 0.0
    %v5064 = vsel %vm1142, %v5004, 0.0
    %v5065 = vadd.f32 %v5063, %v5064
    %v5066 = vrot.slane %v5065, 4
    %v5067 = vadd.f32 %v5065, %v5066
    %v5068 = vrot.slane %v5067, 2
    %v5069 = vadd.f32 %v5067, %v5068
    %v5070 = vrot.slane %v5069, 1
    %v5071 = vadd.f32 %v5069, %v5070
    %v5072 = vsel %vm1142, %v5005, 0.0
    %v5073 = vsel %vm1142, %v5006, 0.0
    %v5074 = vadd.f32 %v5072, %v5073
    %v5075 = vrot.slane %v5074, 4
    %v5076 = vadd.f32 %v5074, %v5075
    %v5077 = vrot.slane %v5076, 2
    %v5078 = vadd.f32 %v5076, %v5077
    %v5079 = vrot.slane %v5078, 1
    %v5080 = vadd.f32 %v5078, %v5079
    %v5081 = vsel %vm1142, %v5007, 0.0
    %v5082 = vsel %vm1142, %v5008, 0.0
    %v5083 = vadd.f32 %v5081, %v5082
    %v5084 = vrot.slane %v5083, 4
    %v5085 = vadd.f32 %v5083, %v5084
    %v5086 = vrot.slane %v5085, 2
    %v5087 = vadd.f32 %v5085, %v5086
    %v5088 = vrot.slane %v5087, 1
    %v5089 = vadd.f32 %v5087, %v5088
    %v5090 = vsel %vm1142, %v5009, 0.0
    %v5091 = vsel %vm1142, %v5010, 0.0
    %v5092 = vadd.f32 %v5090, %v5091
    %v5093 = vrot.slane %v5092, 4
    %v5094 = vadd.f32 %v5092, %v5093
    %v5095 = vrot.slane %v5094, 2
    %v5096 = vadd.f32 %v5094, %v5095
    %v5097 = vrot.slane %v5096, 1
    %v5098 = vadd.f32 %v5096, %v5097
    %v5099 = vsel %vm1142, %v5011, 0.0
    %v5100 = vsel %vm1142, %v5012, 0.0
    %v5101 = vadd.f32 %v5099, %v5100
    %v5102 = vrot.slane %v5101, 4
    %v5103 = vadd.f32 %v5101, %v5102
    %v5104 = vrot.slane %v5103, 2
    %v5105 = vadd.f32 %v5103, %v5104
    %v5106 = vrot.slane %v5105, 1
    %v5107 = vadd.f32 %v5105, %v5106
    %v5108 = vsel %vm1142, %v5013, 0.0
    %v5109 = vsel %vm1142, %v5014, 0.0
    %v5110 = vadd.f32 %v5108, %v5109
    %v5111 = vrot.slane %v5110, 4
    %v5112 = vadd.f32 %v5110, %v5111
    %v5113 = vrot.slane %v5112, 2
    %v5114 = vadd.f32 %v5112, %v5113
    %v5115 = vrot.slane %v5114, 1
    %v5116 = vadd.f32 %v5114, %v5115
    %v5117 = vsel %vm1142, %v5015, 0.0
    %v5118 = vsel %vm1142, %v5016, 0.0
    %v5119 = vadd.f32 %v5117, %v5118
    %v5120 = vrot.slane %v5119, 4
    %v5121 = vadd.f32 %v5119, %v5120
    %v5122 = vrot.slane %v5121, 2
    %v5123 = vadd.f32 %v5121, %v5122
    %v5124 = vrot.slane %v5123, 1
    %v5125 = vadd.f32 %v5123, %v5124
    %v5126 = vsel %vm1142, %v5017, 0.0
    %v5127 = vsel %vm1142, %v5018, 0.0
    %v5128 = vadd.f32 %v5126, %v5127
    %v5129 = vrot.slane %v5128, 4
    %v5130 = vadd.f32 %v5128, %v5129
    %v5131 = vrot.slane %v5130, 2
    %v5132 = vadd.f32 %v5130, %v5131
    %v5133 = vrot.slane %v5132, 1
    %v5134 = vadd.f32 %v5132, %v5133
    %v5135 = vsel %vm1142, %v5019, 0.0
    %v5136 = vsel %vm1142, %v5020, 0.0
    %v5137 = vadd.f32 %v5135, %v5136
    %v5138 = vrot.slane %v5137, 4
    %v5139 = vadd.f32 %v5137, %v5138
    %v5140 = vrot.slane %v5139, 2
    %v5141 = vadd.f32 %v5139, %v5140
    %v5142 = vrot.slane %v5141, 1
    %v5143 = vadd.f32 %v5141, %v5142
    %v5144 = vsel %vm1142, %v5021, 0.0
    %v5145 = vsel %vm1142, %v5022, 0.0
    %v5146 = vadd.f32 %v5144, %v5145
    %v5147 = vrot.slane %v5146, 4
    %v5148 = vadd.f32 %v5146, %v5147
    %v5149 = vrot.slane %v5148, 2
    %v5150 = vadd.f32 %v5148, %v5149
    %v5151 = vrot.slane %v5150, 1
    %v5152 = vadd.f32 %v5150, %v5151
    %v5153 = vsel %vm1142, %v5023, 0.0
    %v5154 = vsel %vm1142, %v5024, 0.0
    %v5155 = vadd.f32 %v5153, %v5154
    %v5156 = vrot.slane %v5155, 4
    %v5157 = vadd.f32 %v5155, %v5156
    %v5158 = vrot.slane %v5157, 2
    %v5159 = vadd.f32 %v5157, %v5158
    %v5160 = vrot.slane %v5159, 1
    %v5161 = vadd.f32 %v5159, %v5160
    %v5162 = vsel %vm1142, %v5025, 0.0
    %v5163 = vsel %vm1142, %v5026, 0.0
    %v5164 = vadd.f32 %v5162, %v5163
    %v5165 = vrot.slane %v5164, 4
    %v5166 = vadd.f32 %v5164, %v5165
    %v5167 = vrot.slane %v5166, 2
    %v5168 = vadd.f32 %v5166, %v5167
    %v5169 = vrot.slane %v5168, 1
    %v5170 = vadd.f32 %v5168, %v5169
    %v5187 = vsel %vm1831, %v5044, %v5035
    %v5188 = vsel %vm1833, %v5053, %v5187
    %v5189 = vsel %vm1835, %v5062, %v5188
    %v5190 = vsel %vm1837, %v5071, %v5189
    %v5191 = vsel %vm1839, %v5080, %v5190
    %v5192 = vsel %vm1841, %v5089, %v5191
    %v5193 = vsel %vm1843, %v5098, %v5192
    %v5194 = vsel %vm1831, %v5116, %v5107
    %v5195 = vsel %vm1833, %v5125, %v5194
    %v5196 = vsel %vm1835, %v5134, %v5195
    %v5197 = vsel %vm1837, %v5143, %v5196
    %v5198 = vsel %vm1839, %v5152, %v5197
    %v5199 = vsel %vm1841, %v5161, %v5198
    %v5200 = vsel %vm1843, %v5170, %v5199
    %s5203 = scalar_lea.vmem [#allocation16], 112
    %5204 = vst.msk [vmem:[%s5203] sm:$0xff] %vm1142, %v5193
    %5205 = vst.msk [vmem:[%s5203 + $0x8] sm:$0xff] %vm1142, %v5200
    // Predicated region
    $region58: #{tpu_custom_call.1} parent=1 // pred_check
      _
    $region59: #{tpu_custom_call.1} parent=1 // pred_check_branch
      %5207 = sbr.rel (0) target = $region61
    $region60: #{tpu_custom_call.1} parent=1 // pred_region
      %5209 = vsyncadd [#allocation4], 0
      %s5210 = sshll.u32 [#allocation16], 4
      %s5211 = int_to_ptr.vmem [resolvable:$true] %s5210
      %s5212 = sshll.u32 %s7, 4
      %s5213 = int_to_ptr.hbm [resolvable:$true] %s5212
      %5218 = dma.vmem_to_hbm [thread:$0]  %s5211, 2048, %s5213, [#allocation4], 128, 128, 8
    $region61: #{tpu_custom_call.1} parent=1 // pred_fallthru
      _
    // Predicated region
    $region62: #{tpu_custom_call.1} parent=1 // pred_check
      _
    $region63: #{tpu_custom_call.1} parent=1 // pred_check_branch
      %5220 = sbr.rel (0) target = $region65
    $region64: #{tpu_custom_call.1} parent=1 // pred_region
      %5222 = dma.done [#allocation4], 2048
    $region65: #{tpu_custom_call.1} parent=1 // pred_fallthru
      _
    %5223 = vsyncpa [#allocation3], 1
    %5224 = vsyncpa [#allocation12], 1
    %5225 = vsyncpa [#allocation15], 1
    %5226 = vsyncpa [#allocation4], 1
    %5227 = vsyncpa [#allocation5], 1
    %5228 = vsyncpa [#allocation6], 1
    %5229 = vsyncpa [#allocation10], 1

</llo_original>
